<compile_context>
chip_gen: v7x
topology: tpu7x:2x2x1
jax: 0.10.0
libtpu: 0.0.40
codegen_flags: <defaults>
</compile_context>

<pallas_src>
import functools
import math

import jax
import jax.numpy as jnp
from jax.experimental import pallas as pl
from jax.experimental.pallas import tpu as pltpu

_VMEM_SPEC = pl.BlockSpec(memory_space=pltpu.MemorySpace.VMEM)
_N_PAD = 128  # lane-dense padding for the (B, output_size=2) projection output


# ------------------------------ fused kernel ------------------------------- #
def _fused_layer_kernel(cls_ref, wqkv_ref, bqkv_ref, perm_ref, wo_ref, bo_ref,
                        out_ref, att_ref,
                        x_scr, qkv_scr, qh_scr, kh_scr, vh_scr, m_scr,
                        *, num_layers, hidden, batch, heads, head_size, scale):
    feat = heads * head_size  # == input_size == num_layers * hidden

    # 1. CLS aggregation (torch.cat of per-layer CLS vectors) done in-kernel:
    #    x[b, l*H:(l+1)*H] = cls[l, b, :]
    for l in range(num_layers):
        x_scr[:, pl.ds(l * hidden, hidden)] = cls_ref[l]

    # 2. Stacked Q/K/V projection: ONE MXU matmul against the pre-transposed,
    #    pre-permuted (K, 3K) weight slab.  bf16 inputs, f32 accumulation.
    x = x_scr[...].astype(jnp.bfloat16)
    qkv_scr[...] = (
        jnp.dot(x, wqkv_ref[...], preferred_element_type=jnp.float32)
        + bqkv_ref[...])

    # 3. split_heads: because the head permutation is already folded into the
    #    weight columns, each (B*heads, head_size) row is a contiguous slice.
    for b in range(batch):
        for r in range(heads):
            row = b * heads + r
            qh_scr[pl.ds(row, 1), :] = qkv_scr[
                pl.ds(b, 1), pl.ds(r * head_size, head_size)]
            kh_scr[pl.ds(row, 1), :] = qkv_scr[
                pl.ds(b, 1), pl.ds(feat + r * head_size, head_size)]
            vh_scr[pl.ds(row, 1), :] = qkv_scr[
                pl.ds(b, 1), pl.ds(2 * feat + r * head_size, head_size)]

    qh = qh_scr[...].astype(jnp.bfloat16)
    kh = kh_scr[...].astype(jnp.bfloat16)
    vh = vh_scr[...].astype(jnp.bfloat16)

    # 4. Attention.  Scores contract on the shared last axis (no in-kernel
    #    transpose); softmax stays in f32; the divide goes to the EUP.
    s = jax.lax.dot_general(qh, kh, (((1,), (1,)), ((), ())),
                            preferred_element_type=jnp.float32) * scale
    s = s - jnp.max(s, axis=-1, keepdims=True)
    p = jnp.exp(s)
    w = p * pl.reciprocal(jnp.sum(p, axis=-1, keepdims=True), approx=True)
    a = jnp.dot(w.astype(jnp.bfloat16), vh, preferred_element_type=jnp.float32)

    # 5. concat_heads, step 1: head-major flatten via contiguous copies,
    #    m[b, r*hs:(r+1)*hs] = a[b*heads + r, :]   (reuse qh_scr as staging)
    qh_scr[...] = a
    for b in range(batch):
        for r in range(heads):
            m_scr[pl.ds(b, 1), pl.ds(r * head_size, head_size)] = qh_scr[
                pl.ds(b * heads + r, 1), :]

    m = m_scr[...]

    # 6. `attentions` output: exact column permutation via a 0/1 matmul (f32 ->
    #    bit-exact reordering of m), stored lane-dense (last dim = 3*128).
    att_ref[...] = jnp.dot(m, perm_ref[...], preferred_element_type=jnp.float32)

    # 7. W_o projection: concat permutation pre-folded into wo_ref, output
    #    padded to 128 lanes so the store is unmasked / lane-dense.
    out_ref[...] = (
        jnp.dot(m.astype(jnp.bfloat16), wo_ref[...],
                preferred_element_type=jnp.float32)
        + bo_ref[...])


# --------------------------- weight pre-packing ----------------------------- #
def pack_params(params, *, heads, input_size, output_size, n_pad=_N_PAD):
    """One-time packing: transpose + head-permute + stack QKV, fold the
    concat_heads permutation into W_o, pad W_o/b_o to a lane-dense width."""
    head_size = input_size // heads
    c = jnp.arange(input_size)
    # column c (= r*head_size + j) of the split output reads feature fwd_perm[c]
    fwd_perm = (c % heads) * head_size + c // heads
    inv_perm = (c % head_size) * heads + c // head_size   # its inverse

    def proj_t(w):  # torch (out, in) weight -> (in, out) with permuted columns
        return w[fwd_perm, :].T

    w_qkv = jnp.concatenate(
        [proj_t(params["w_q"]), proj_t(params["w_k"]), proj_t(params["w_v"])],
        axis=1).astype(jnp.bfloat16)
    b_qkv = jnp.concatenate(
        [params["b_q"][fwd_perm], params["b_k"][fwd_perm], params["b_v"][fwd_perm]]
    ).reshape(1, 3 * input_size).astype(jnp.float32)

    # att[:, f] = m[:, fwd_perm[f]]  <=>  att = m @ perm,  perm[g, f] = [g == fwd_perm[f]]
    perm = (c[:, None] == fwd_perm[None, :]).astype(jnp.float32)

    # outputs = att @ W_o^T = m @ (perm @ W_o^T): fold permutation into W_o.
    wo_eff = params["w_o"][:, inv_perm].T                       # (K, output_size)
    wo_pad = jnp.zeros((input_size, n_pad), jnp.float32)
    wo_pad = wo_pad.at[:, :output_size].set(wo_eff).astype(jnp.bfloat16)
    bo_pad = jnp.zeros((1, n_pad), jnp.float32).at[:, :output_size].set(params["b_o"])

    return {"w_qkv": w_qkv, "b_qkv": b_qkv, "perm": perm,
            "w_o": wo_pad, "b_o": bo_pad}


# ------------------------------ pallas wrapper ------------------------------ #
def self_attention_pallas(packed, cls, *, heads, input_size, output_size,
                          num_layers, hidden):
    _, batch, _ = cls.shape
    head_size = input_size // heads
    bh = batch * heads
    kernel = functools.partial(
        _fused_layer_kernel, num_layers=num_layers, hidden=hidden, batch=batch,
        heads=heads, head_size=head_size,
        scale=1.0 / math.sqrt(float(input_size)))

    flops = 2 * (batch * input_size * 3 * input_size      # stacked QKV
                 + bh * bh * head_size                    # Q K^T
                 + bh * bh * head_size                    # P V
                 + batch * input_size * input_size        # attentions permutation
                 + batch * input_size * _N_PAD)           # W_o (padded)
    bytes_accessed = (cls.size * 4 + packed["w_qkv"].size * 2
                      + packed["b_qkv"].size * 4 + packed["perm"].size * 4
                      + packed["w_o"].size * 2 + packed["b_o"].size * 4
                      + batch * _N_PAD * 4 + batch * input_size * 4)

    out_pad, att = pl.pallas_call(
        kernel,
        out_shape=(jax.ShapeDtypeStruct((batch, _N_PAD), jnp.float32),
                   jax.ShapeDtypeStruct((batch, input_size), jnp.float32)),
        in_specs=[_VMEM_SPEC] * 6,
        out_specs=(_VMEM_SPEC, _VMEM_SPEC),
        scratch_shapes=[
            pltpu.VMEM((batch, input_size), jnp.float32),      # aggregated x
            pltpu.VMEM((batch, 3 * input_size), jnp.float32),  # stacked q|k|v
            pltpu.VMEM((bh, head_size), jnp.float32),          # q heads / staging
            pltpu.VMEM((bh, head_size), jnp.float32),          # k heads
            pltpu.VMEM((bh, head_size), jnp.float32),          # v heads
            pltpu.VMEM((batch, input_size), jnp.float32),      # head-major attended
        ],
        cost_estimate=pl.CostEstimate(flops=flops,
                                      transcendentals=bh * bh + bh,
                                      bytes_accessed=bytes_accessed),
    )(cls, packed["w_qkv"], packed["b_qkv"], packed["perm"],
      packed["w_o"], packed["b_o"])

    return out_pad[:, :output_size], att


def bert_layer_aggregation_forward(packed, hidden_states, *, heads, input_size,
                                   output_size, num_layers, hidden):
    # TODO(synk): the frozen pretrained BERT forward has no clean Pallas
    # equivalent; `hidden_states` stands in for bert(**x, output_hidden_states=True)[2].
    # Only the tiny CLS slice stays in XLA; the layer->feature interleave
    # (transpose+reshape of the PyTorch torch.cat) happens inside the kernel.
    cls = hidden_states[1:, :, 0, :]                       # (L, B, H)
    return self_attention_pallas(packed, cls, heads=heads, input_size=input_size,
                                 output_size=output_size, num_layers=num_layers,
                                 hidden=hidden)


# --------------------------- deterministic params --------------------------- #
def init_params(key, input_size, output_size):
    ks = jax.random.split(key, 8)
    lim = 1.0 / math.sqrt(input_size)
    u = lambda k, shape: jax.random.uniform(k, shape, jnp.float32, -lim, lim)
    return {
        "w_q": u(ks[0], (input_size, input_size)), "b_q": u(ks[1], (input_size,)),
        "w_k": u(ks[2], (input_size, input_size)), "b_k": u(ks[3], (input_size,)),
        "w_v": u(ks[4], (input_size, input_size)), "b_v": u(ks[5], (input_size,)),
        "w_o": u(ks[6], (output_size, input_size)), "b_o": u(ks[7], (output_size,)),
    }


# ------------------------------ pure-JAX reference -------------------------- #
def split_heads(x, heads):
    B, F = x.shape
    hs = F // heads
    x = x.reshape(B, heads, hs)
    x = jnp.transpose(x, (0, 2, 1))
    return x.reshape(B * heads, hs)


def concat_heads(x, heads):
    BH, hs = x.shape
    B = BH // heads
    x = x.reshape(B, heads, hs)
    x = jnp.transpose(x, (0, 2, 1))
    return x.reshape(B, heads * hs)


def _reference(params, hidden_states, *, heads, input_size):
    cls = hidden_states[1:, :, 0, :]
    L, B, H = cls.shape
    x = jnp.transpose(cls, (1, 0, 2)).reshape(B, L * H)
    lin = lambda t, w, b: t @ w.T + b
    q = split_heads(lin(x, params["w_q"], params["b_q"]), heads)
    k = split_heads(lin(x, params["w_k"], params["b_k"]), heads)
    v = split_heads(lin(x, params["w_v"], params["b_v"]), heads)
    s = (q @ k.T) / math.sqrt(float(input_size))
    w = jax.nn.softmax(s, axis=-1)
    att = concat_heads(w @ v, heads)
    return lin(att, params["w_o"], params["b_o"]), att


if __name__ == "__main__":
    # 12 BERT layers + embedding, batch=2, seq=8, hidden=32 =>
    # aggregated feature size = 12*32 = 384 (analogue of 12*768), 8 heads, 2 outputs.
    num_layers, batch, seq, hidden = 12, 2, 8, 32
    heads = 8
    input_size = num_layers * hidden
    output_size = 2

    key = jax.random.PRNGKey(0)
    k_hs, k_par = jax.random.split(key)
    hidden_states = jax.random.normal(
        k_hs, (num_layers + 1, batch, seq, hidden), jnp.float32)
    params = init_params(k_par, input_size, output_size)
    packed = pack_params(params, heads=heads, input_size=input_size,
                         output_size=output_size)

    fwd = jax.jit(functools.partial(
        bert_layer_aggregation_forward, heads=heads, input_size=input_size,
        output_size=output_size, num_layers=num_layers, hidden=hidden))

    outputs, attentions = fwd(packed, hidden_states)
    outputs = jax.block_until_ready(outputs)
    attentions = jax.block_until_ready(attentions)

    ref_out, ref_att = _reference(params, hidden_states,
                                  heads=heads, input_size=input_size)
    assert outputs.shape == (batch, output_size)
    assert attentions.shape == (batch, input_size)
    # bf16 MXU inputs (f32 accumulation / f32 softmax) vs. a pure-f32 reference.
    assert jnp.allclose(outputs, ref_out, atol=2e-2, rtol=2e-2)
    assert jnp.allclose(attentions, ref_att, atol=2e-2, rtol=2e-2)

    print("KERNEL_OK")
</pallas_src>

<mosaic_0001>
module attributes {stable_mosaic.version = 11 : i64} {
  func.func @_fused_layer_kernel(%arg0: memref<12x2x32xf32, #tpu.memory_space<vmem>>, %arg1: memref<384x1152xbf16, #tpu.memory_space<vmem>>, %arg2: memref<1x1152xf32, #tpu.memory_space<vmem>>, %arg3: memref<384x384xf32, #tpu.memory_space<vmem>>, %arg4: memref<384x128xbf16, #tpu.memory_space<vmem>>, %arg5: memref<1x128xf32, #tpu.memory_space<vmem>>, %arg6: memref<2x128xf32, #tpu.memory_space<vmem>>, %arg7: memref<2x384xf32, #tpu.memory_space<vmem>>, %arg8: memref<2x384xf32, #tpu.memory_space<vmem>>, %arg9: memref<2x1152xf32, #tpu.memory_space<vmem>>, %arg10: memref<16x48xf32, #tpu.memory_space<vmem>>, %arg11: memref<16x48xf32, #tpu.memory_space<vmem>>, %arg12: memref<16x48xf32, #tpu.memory_space<vmem>>, %arg13: memref<2x384xf32, #tpu.memory_space<vmem>>) attributes {dimension_semantics = [], scalar_prefetch = 0 : i64, scratch_operands = 6 : i64, tpu.core_type = #tpu.core_type<tc>} {
    %c0 = arith.constant 0 : index
    %c0_0 = arith.constant 0 : index
    %c0_1 = arith.constant 0 : index
    %0 = vector.load %arg0[%c0, %c0_0, %c0_1] : memref<12x2x32xf32, #tpu.memory_space<vmem>>, vector<1x2x32xf32>
    %1 = vector.shape_cast %0 : vector<1x2x32xf32> to vector<2x32xf32>
    %c0_2 = arith.constant 0 : index
    %c0_3 = arith.constant 0 : index
    %2 = vector.load %arg8[%c0_2, %c0_3] : memref<2x384xf32, #tpu.memory_space<vmem>>, vector<2x32xf32>
    tpu.vector_store %arg8[%c0_2, %c0_3], %1 {strides = array<i32>} : memref<2x384xf32, #tpu.memory_space<vmem>>, vector<2x32xf32>,
    %c1 = arith.constant 1 : index
    %c0_4 = arith.constant 0 : index
    %c0_5 = arith.constant 0 : index
    %3 = vector.load %arg0[%c1, %c0_4, %c0_5] : memref<12x2x32xf32, #tpu.memory_space<vmem>>, vector<1x2x32xf32>
    %4 = vector.shape_cast %3 : vector<1x2x32xf32> to vector<2x32xf32>
    %c0_6 = arith.constant 0 : index
    %c32 = arith.constant 32 : index
    %5 = vector.load %arg8[%c0_6, %c32] : memref<2x384xf32, #tpu.memory_space<vmem>>, vector<2x32xf32>
    tpu.vector_store %arg8[%c0_6, %c32], %4 {strides = array<i32>} : memref<2x384xf32, #tpu.memory_space<vmem>>, vector<2x32xf32>,
    %c2 = arith.constant 2 : index
    %c0_7 = arith.constant 0 : index
    %c0_8 = arith.constant 0 : index
    %6 = vector.load %arg0[%c2, %c0_7, %c0_8] : memref<12x2x32xf32, #tpu.memory_space<vmem>>, vector<1x2x32xf32>
    %7 = vector.shape_cast %6 : vector<1x2x32xf32> to vector<2x32xf32>
    %c0_9 = arith.constant 0 : index
    %c64 = arith.constant 64 : index
    %8 = vector.load %arg8[%c0_9, %c64] : memref<2x384xf32, #tpu.memory_space<vmem>>, vector<2x32xf32>
    tpu.vector_store %arg8[%c0_9, %c64], %7 {strides = array<i32>} : memref<2x384xf32, #tpu.memory_space<vmem>>, vector<2x32xf32>,
    %c3 = arith.constant 3 : index
    %c0_10 = arith.constant 0 : index
    %c0_11 = arith.constant 0 : index
    %9 = vector.load %arg0[%c3, %c0_10, %c0_11] : memref<12x2x32xf32, #tpu.memory_space<vmem>>, vector<1x2x32xf32>
    %10 = vector.shape_cast %9 : vector<1x2x32xf32> to vector<2x32xf32>
    %c0_12 = arith.constant 0 : index
    %c96 = arith.constant 96 : index
    %11 = vector.load %arg8[%c0_12, %c96] : memref<2x384xf32, #tpu.memory_space<vmem>>, vector<2x32xf32>
    tpu.vector_store %arg8[%c0_12, %c96], %10 {strides = array<i32>} : memref<2x384xf32, #tpu.memory_space<vmem>>, vector<2x32xf32>,
    %c4 = arith.constant 4 : index
    %c0_13 = arith.constant 0 : index
    %c0_14 = arith.constant 0 : index
    %12 = vector.load %arg0[%c4, %c0_13, %c0_14] : memref<12x2x32xf32, #tpu.memory_space<vmem>>, vector<1x2x32xf32>
    %13 = vector.shape_cast %12 : vector<1x2x32xf32> to vector<2x32xf32>
    %c0_15 = arith.constant 0 : index
    %c128 = arith.constant 128 : index
    %14 = vector.load %arg8[%c0_15, %c128] : memref<2x384xf32, #tpu.memory_space<vmem>>, vector<2x32xf32>
    tpu.vector_store %arg8[%c0_15, %c128], %13 {strides = array<i32>} : memref<2x384xf32, #tpu.memory_space<vmem>>, vector<2x32xf32>,
    %c5 = arith.constant 5 : index
    %c0_16 = arith.constant 0 : index
    %c0_17 = arith.constant 0 : index
    %15 = vector.load %arg0[%c5, %c0_16, %c0_17] : memref<12x2x32xf32, #tpu.memory_space<vmem>>, vector<1x2x32xf32>
    %16 = vector.shape_cast %15 : vector<1x2x32xf32> to vector<2x32xf32>
    %c0_18 = arith.constant 0 : index
    %c160 = arith.constant 160 : index
    %17 = vector.load %arg8[%c0_18, %c160] : memref<2x384xf32, #tpu.memory_space<vmem>>, vector<2x32xf32>
    tpu.vector_store %arg8[%c0_18, %c160], %16 {strides = array<i32>} : memref<2x384xf32, #tpu.memory_space<vmem>>, vector<2x32xf32>,
    %c6 = arith.constant 6 : index
    %c0_19 = arith.constant 0 : index
    %c0_20 = arith.constant 0 : index
    %18 = vector.load %arg0[%c6, %c0_19, %c0_20] : memref<12x2x32xf32, #tpu.memory_space<vmem>>, vector<1x2x32xf32>
    %19 = vector.shape_cast %18 : vector<1x2x32xf32> to vector<2x32xf32>
    %c0_21 = arith.constant 0 : index
    %c192 = arith.constant 192 : index
    %20 = vector.load %arg8[%c0_21, %c192] : memref<2x384xf32, #tpu.memory_space<vmem>>, vector<2x32xf32>
    tpu.vector_store %arg8[%c0_21, %c192], %19 {strides = array<i32>} : memref<2x384xf32, #tpu.memory_space<vmem>>, vector<2x32xf32>,
    %c7 = arith.constant 7 : index
    %c0_22 = arith.constant 0 : index
    %c0_23 = arith.constant 0 : index
    %21 = vector.load %arg0[%c7, %c0_22, %c0_23] : memref<12x2x32xf32, #tpu.memory_space<vmem>>, vector<1x2x32xf32>
    %22 = vector.shape_cast %21 : vector<1x2x32xf32> to vector<2x32xf32>
    %c0_24 = arith.constant 0 : index
    %c224 = arith.constant 224 : index
    %23 = vector.load %arg8[%c0_24, %c224] : memref<2x384xf32, #tpu.memory_space<vmem>>, vector<2x32xf32>
    tpu.vector_store %arg8[%c0_24, %c224], %22 {strides = array<i32>} : memref<2x384xf32, #tpu.memory_space<vmem>>, vector<2x32xf32>,
    %c8 = arith.constant 8 : index
    %c0_25 = arith.constant 0 : index
    %c0_26 = arith.constant 0 : index
    %24 = vector.load %arg0[%c8, %c0_25, %c0_26] : memref<12x2x32xf32, #tpu.memory_space<vmem>>, vector<1x2x32xf32>
    %25 = vector.shape_cast %24 : vector<1x2x32xf32> to vector<2x32xf32>
    %c0_27 = arith.constant 0 : index
    %c256 = arith.constant 256 : index
    %26 = vector.load %arg8[%c0_27, %c256] : memref<2x384xf32, #tpu.memory_space<vmem>>, vector<2x32xf32>
    tpu.vector_store %arg8[%c0_27, %c256], %25 {strides = array<i32>} : memref<2x384xf32, #tpu.memory_space<vmem>>, vector<2x32xf32>,
    %c9 = arith.constant 9 : index
    %c0_28 = arith.constant 0 : index
    %c0_29 = arith.constant 0 : index
    %27 = vector.load %arg0[%c9, %c0_28, %c0_29] : memref<12x2x32xf32, #tpu.memory_space<vmem>>, vector<1x2x32xf32>
    %28 = vector.shape_cast %27 : vector<1x2x32xf32> to vector<2x32xf32>
    %c0_30 = arith.constant 0 : index
    %c288 = arith.constant 288 : index
    %29 = vector.load %arg8[%c0_30, %c288] : memref<2x384xf32, #tpu.memory_space<vmem>>, vector<2x32xf32>
    tpu.vector_store %arg8[%c0_30, %c288], %28 {strides = array<i32>} : memref<2x384xf32, #tpu.memory_space<vmem>>, vector<2x32xf32>,
    %c10 = arith.constant 10 : index
    %c0_31 = arith.constant 0 : index
    %c0_32 = arith.constant 0 : index
    %30 = vector.load %arg0[%c10, %c0_31, %c0_32] : memref<12x2x32xf32, #tpu.memory_space<vmem>>, vector<1x2x32xf32>
    %31 = vector.shape_cast %30 : vector<1x2x32xf32> to vector<2x32xf32>
    %c0_33 = arith.constant 0 : index
    %c320 = arith.constant 320 : index
    %32 = vector.load %arg8[%c0_33, %c320] : memref<2x384xf32, #tpu.memory_space<vmem>>, vector<2x32xf32>
    tpu.vector_store %arg8[%c0_33, %c320], %31 {strides = array<i32>} : memref<2x384xf32, #tpu.memory_space<vmem>>, vector<2x32xf32>,
    %c11 = arith.constant 11 : index
    %c0_34 = arith.constant 0 : index
    %c0_35 = arith.constant 0 : index
    %33 = vector.load %arg0[%c11, %c0_34, %c0_35] : memref<12x2x32xf32, #tpu.memory_space<vmem>>, vector<1x2x32xf32>
    %34 = vector.shape_cast %33 : vector<1x2x32xf32> to vector<2x32xf32>
    %c0_36 = arith.constant 0 : index
    %c352 = arith.constant 352 : index
    %35 = vector.load %arg8[%c0_36, %c352] : memref<2x384xf32, #tpu.memory_space<vmem>>, vector<2x32xf32>
    tpu.vector_store %arg8[%c0_36, %c352], %34 {strides = array<i32>} : memref<2x384xf32, #tpu.memory_space<vmem>>, vector<2x32xf32>,
    %c0_37 = arith.constant 0 : index
    %c0_38 = arith.constant 0 : index
    %36 = vector.load %arg8[%c0_37, %c0_38] : memref<2x384xf32, #tpu.memory_space<vmem>>, vector<2x384xf32>
    %37 = arith.truncf %36 : vector<2x384xf32> to vector<2x384xbf16>
    %c0_39 = arith.constant 0 : index
    %c0_40 = arith.constant 0 : index
    %38 = vector.load %arg1[%c0_39, %c0_40] : memref<384x1152xbf16, #tpu.memory_space<vmem>>, vector<384x1152xbf16>
    %cst = arith.constant dense<0.000000e+00> : vector<2x1152xf32>
    %39 = tpu.matmul %37, %38, %cst {dimension_numbers = #tpu.dot_dimension_numbers<[1], [0], [0], [1], [0, 0, 1, 1], [], []>} : vector<2x384xbf16>, vector<384x1152xbf16>, vector<2x1152xf32> -> vector<2x1152xf32>
    %c0_41 = arith.constant 0 : index
    %c0_42 = arith.constant 0 : index
    %40 = vector.load %arg2[%c0_41, %c0_42] : memref<1x1152xf32, #tpu.memory_space<vmem>>, vector<1x1152xf32>
    %41 = vector.broadcast %40 : vector<1x1152xf32> to vector<2x1152xf32>
    %42 = arith.addf %39, %41 : vector<2x1152xf32>
    %c0_43 = arith.constant 0 : index
    %c0_44 = arith.constant 0 : index
    %43 = vector.load %arg9[%c0_43, %c0_44] : memref<2x1152xf32, #tpu.memory_space<vmem>>, vector<2x1152xf32>
    tpu.vector_store %arg9[%c0_43, %c0_44], %42 {strides = array<i32>} : memref<2x1152xf32, #tpu.memory_space<vmem>>, vector<2x1152xf32>,
    %c0_45 = arith.constant 0 : index
    %c0_46 = arith.constant 0 : index
    %44 = vector.load %arg9[%c0_45, %c0_46] : memref<2x1152xf32, #tpu.memory_space<vmem>>, vector<1x48xf32>
    %c0_47 = arith.constant 0 : index
    %c0_48 = arith.constant 0 : index
    %45 = vector.load %arg10[%c0_47, %c0_48] : memref<16x48xf32, #tpu.memory_space<vmem>>, vector<1x48xf32>
    tpu.vector_store %arg10[%c0_47, %c0_48], %44 {strides = array<i32>} : memref<16x48xf32, #tpu.memory_space<vmem>>, vector<1x48xf32>,
    %c0_49 = arith.constant 0 : index
    %c384 = arith.constant 384 : index
    %46 = vector.load %arg9[%c0_49, %c384] : memref<2x1152xf32, #tpu.memory_space<vmem>>, vector<1x48xf32>
    %c0_50 = arith.constant 0 : index
    %c0_51 = arith.constant 0 : index
    %47 = vector.load %arg11[%c0_50, %c0_51] : memref<16x48xf32, #tpu.memory_space<vmem>>, vector<1x48xf32>
    tpu.vector_store %arg11[%c0_50, %c0_51], %46 {strides = array<i32>} : memref<16x48xf32, #tpu.memory_space<vmem>>, vector<1x48xf32>,
    %c0_52 = arith.constant 0 : index
    %c768 = arith.constant 768 : index
    %48 = vector.load %arg9[%c0_52, %c768] : memref<2x1152xf32, #tpu.memory_space<vmem>>, vector<1x48xf32>
    %c0_53 = arith.constant 0 : index
    %c0_54 = arith.constant 0 : index
    %49 = vector.load %arg12[%c0_53, %c0_54] : memref<16x48xf32, #tpu.memory_space<vmem>>, vector<1x48xf32>
    tpu.vector_store %arg12[%c0_53, %c0_54], %48 {strides = array<i32>} : memref<16x48xf32, #tpu.memory_space<vmem>>, vector<1x48xf32>,
    %c0_55 = arith.constant 0 : index
    %c48 = arith.constant 48 : index
    %50 = vector.load %arg9[%c0_55, %c48] : memref<2x1152xf32, #tpu.memory_space<vmem>>, vector<1x48xf32>
    %c1_56 = arith.constant 1 : index
    %c0_57 = arith.constant 0 : index
    %51 = vector.load %arg10[%c1_56, %c0_57] : memref<16x48xf32, #tpu.memory_space<vmem>>, vector<1x48xf32>
    tpu.vector_store %arg10[%c1_56, %c0_57], %50 {strides = array<i32>} : memref<16x48xf32, #tpu.memory_space<vmem>>, vector<1x48xf32>,
    %c0_58 = arith.constant 0 : index
    %c432 = arith.constant 432 : index
    %52 = vector.load %arg9[%c0_58, %c432] : memref<2x1152xf32, #tpu.memory_space<vmem>>, vector<1x48xf32>
    %c1_59 = arith.constant 1 : index
    %c0_60 = arith.constant 0 : index
    %53 = vector.load %arg11[%c1_59, %c0_60] : memref<16x48xf32, #tpu.memory_space<vmem>>, vector<1x48xf32>
    tpu.vector_store %arg11[%c1_59, %c0_60], %52 {strides = array<i32>} : memref<16x48xf32, #tpu.memory_space<vmem>>, vector<1x48xf32>,
    %c0_61 = arith.constant 0 : index
    %c816 = arith.constant 816 : index
    %54 = vector.load %arg9[%c0_61, %c816] : memref<2x1152xf32, #tpu.memory_space<vmem>>, vector<1x48xf32>
    %c1_62 = arith.constant 1 : index
    %c0_63 = arith.constant 0 : index
    %55 = vector.load %arg12[%c1_62, %c0_63] : memref<16x48xf32, #tpu.memory_space<vmem>>, vector<1x48xf32>
    tpu.vector_store %arg12[%c1_62, %c0_63], %54 {strides = array<i32>} : memref<16x48xf32, #tpu.memory_space<vmem>>, vector<1x48xf32>,
    %c0_64 = arith.constant 0 : index
    %c96_65 = arith.constant 96 : index
    %56 = vector.load %arg9[%c0_64, %c96_65] : memref<2x1152xf32, #tpu.memory_space<vmem>>, vector<1x48xf32>
    %c2_66 = arith.constant 2 : index
    %c0_67 = arith.constant 0 : index
    %57 = vector.load %arg10[%c2_66, %c0_67] : memref<16x48xf32, #tpu.memory_space<vmem>>, vector<1x48xf32>
    tpu.vector_store %arg10[%c2_66, %c0_67], %56 {strides = array<i32>} : memref<16x48xf32, #tpu.memory_space<vmem>>, vector<1x48xf32>,
    %c0_68 = arith.constant 0 : index
    %c480 = arith.constant 480 : index
    %58 = vector.load %arg9[%c0_68, %c480] : memref<2x1152xf32, #tpu.memory_space<vmem>>, vector<1x48xf32>
    %c2_69 = arith.constant 2 : index
    %c0_70 = arith.constant 0 : index
    %59 = vector.load %arg11[%c2_69, %c0_70] : memref<16x48xf32, #tpu.memory_space<vmem>>, vector<1x48xf32>
    tpu.vector_store %arg11[%c2_69, %c0_70], %58 {strides = array<i32>} : memref<16x48xf32, #tpu.memory_space<vmem>>, vector<1x48xf32>,
    %c0_71 = arith.constant 0 : index
    %c864 = arith.constant 864 : index
    %60 = vector.load %arg9[%c0_71, %c864] : memref<2x1152xf32, #tpu.memory_space<vmem>>, vector<1x48xf32>
    %c2_72 = arith.constant 2 : index
    %c0_73 = arith.constant 0 : index
    %61 = vector.load %arg12[%c2_72, %c0_73] : memref<16x48xf32, #tpu.memory_space<vmem>>, vector<1x48xf32>
    tpu.vector_store %arg12[%c2_72, %c0_73], %60 {strides = array<i32>} : memref<16x48xf32, #tpu.memory_space<vmem>>, vector<1x48xf32>,
    %c0_74 = arith.constant 0 : index
    %c144 = arith.constant 144 : index
    %62 = vector.load %arg9[%c0_74, %c144] : memref<2x1152xf32, #tpu.memory_space<vmem>>, vector<1x48xf32>
    %c3_75 = arith.constant 3 : index
    %c0_76 = arith.constant 0 : index
    %63 = vector.load %arg10[%c3_75, %c0_76] : memref<16x48xf32, #tpu.memory_space<vmem>>, vector<1x48xf32>
    tpu.vector_store %arg10[%c3_75, %c0_76], %62 {strides = array<i32>} : memref<16x48xf32, #tpu.memory_space<vmem>>, vector<1x48xf32>,
    %c0_77 = arith.constant 0 : index
    %c528 = arith.constant 528 : index
    %64 = vector.load %arg9[%c0_77, %c528] : memref<2x1152xf32, #tpu.memory_space<vmem>>, vector<1x48xf32>
    %c3_78 = arith.constant 3 : index
    %c0_79 = arith.constant 0 : index
    %65 = vector.load %arg11[%c3_78, %c0_79] : memref<16x48xf32, #tpu.memory_space<vmem>>, vector<1x48xf32>
    tpu.vector_store %arg11[%c3_78, %c0_79], %64 {strides = array<i32>} : memref<16x48xf32, #tpu.memory_space<vmem>>, vector<1x48xf32>,
    %c0_80 = arith.constant 0 : index
    %c912 = arith.constant 912 : index
    %66 = vector.load %arg9[%c0_80, %c912] : memref<2x1152xf32, #tpu.memory_space<vmem>>, vector<1x48xf32>
    %c3_81 = arith.constant 3 : index
    %c0_82 = arith.constant 0 : index
    %67 = vector.load %arg12[%c3_81, %c0_82] : memref<16x48xf32, #tpu.memory_space<vmem>>, vector<1x48xf32>
    tpu.vector_store %arg12[%c3_81, %c0_82], %66 {strides = array<i32>} : memref<16x48xf32, #tpu.memory_space<vmem>>, vector<1x48xf32>,
    %c0_83 = arith.constant 0 : index
    %c192_84 = arith.constant 192 : index
    %68 = vector.load %arg9[%c0_83, %c192_84] : memref<2x1152xf32, #tpu.memory_space<vmem>>, vector<1x48xf32>
    %c4_85 = arith.constant 4 : index
    %c0_86 = arith.constant 0 : index
    %69 = vector.load %arg10[%c4_85, %c0_86] : memref<16x48xf32, #tpu.memory_space<vmem>>, vector<1x48xf32>
    tpu.vector_store %arg10[%c4_85, %c0_86], %68 {strides = array<i32>} : memref<16x48xf32, #tpu.memory_space<vmem>>, vector<1x48xf32>,
    %c0_87 = arith.constant 0 : index
    %c576 = arith.constant 576 : index
    %70 = vector.load %arg9[%c0_87, %c576] : memref<2x1152xf32, #tpu.memory_space<vmem>>, vector<1x48xf32>
    %c4_88 = arith.constant 4 : index
    %c0_89 = arith.constant 0 : index
    %71 = vector.load %arg11[%c4_88, %c0_89] : memref<16x48xf32, #tpu.memory_space<vmem>>, vector<1x48xf32>
    tpu.vector_store %arg11[%c4_88, %c0_89], %70 {strides = array<i32>} : memref<16x48xf32, #tpu.memory_space<vmem>>, vector<1x48xf32>,
    %c0_90 = arith.constant 0 : index
    %c960 = arith.constant 960 : index
    %72 = vector.load %arg9[%c0_90, %c960] : memref<2x1152xf32, #tpu.memory_space<vmem>>, vector<1x48xf32>
    %c4_91 = arith.constant 4 : index
    %c0_92 = arith.constant 0 : index
    %73 = vector.load %arg12[%c4_91, %c0_92] : memref<16x48xf32, #tpu.memory_space<vmem>>, vector<1x48xf32>
    tpu.vector_store %arg12[%c4_91, %c0_92], %72 {strides = array<i32>} : memref<16x48xf32, #tpu.memory_space<vmem>>, vector<1x48xf32>,
    %c0_93 = arith.constant 0 : index
    %c240 = arith.constant 240 : index
    %74 = vector.load %arg9[%c0_93, %c240] : memref<2x1152xf32, #tpu.memory_space<vmem>>, vector<1x48xf32>
    %c5_94 = arith.constant 5 : index
    %c0_95 = arith.constant 0 : index
    %75 = vector.load %arg10[%c5_94, %c0_95] : memref<16x48xf32, #tpu.memory_space<vmem>>, vector<1x48xf32>
    tpu.vector_store %arg10[%c5_94, %c0_95], %74 {strides = array<i32>} : memref<16x48xf32, #tpu.memory_space<vmem>>, vector<1x48xf32>,
    %c0_96 = arith.constant 0 : index
    %c624 = arith.constant 624 : index
    %76 = vector.load %arg9[%c0_96, %c624] : memref<2x1152xf32, #tpu.memory_space<vmem>>, vector<1x48xf32>
    %c5_97 = arith.constant 5 : index
    %c0_98 = arith.constant 0 : index
    %77 = vector.load %arg11[%c5_97, %c0_98] : memref<16x48xf32, #tpu.memory_space<vmem>>, vector<1x48xf32>
    tpu.vector_store %arg11[%c5_97, %c0_98], %76 {strides = array<i32>} : memref<16x48xf32, #tpu.memory_space<vmem>>, vector<1x48xf32>,
    %c0_99 = arith.constant 0 : index
    %c1008 = arith.constant 1008 : index
    %78 = vector.load %arg9[%c0_99, %c1008] : memref<2x1152xf32, #tpu.memory_space<vmem>>, vector<1x48xf32>
    %c5_100 = arith.constant 5 : index
    %c0_101 = arith.constant 0 : index
    %79 = vector.load %arg12[%c5_100, %c0_101] : memref<16x48xf32, #tpu.memory_space<vmem>>, vector<1x48xf32>
    tpu.vector_store %arg12[%c5_100, %c0_101], %78 {strides = array<i32>} : memref<16x48xf32, #tpu.memory_space<vmem>>, vector<1x48xf32>,
    %c0_102 = arith.constant 0 : index
    %c288_103 = arith.constant 288 : index
    %80 = vector.load %arg9[%c0_102, %c288_103] : memref<2x1152xf32, #tpu.memory_space<vmem>>, vector<1x48xf32>
    %c6_104 = arith.constant 6 : index
    %c0_105 = arith.constant 0 : index
    %81 = vector.load %arg10[%c6_104, %c0_105] : memref<16x48xf32, #tpu.memory_space<vmem>>, vector<1x48xf32>
    tpu.vector_store %arg10[%c6_104, %c0_105], %80 {strides = array<i32>} : memref<16x48xf32, #tpu.memory_space<vmem>>, vector<1x48xf32>,
    %c0_106 = arith.constant 0 : index
    %c672 = arith.constant 672 : index
    %82 = vector.load %arg9[%c0_106, %c672] : memref<2x1152xf32, #tpu.memory_space<vmem>>, vector<1x48xf32>
    %c6_107 = arith.constant 6 : index
    %c0_108 = arith.constant 0 : index
    %83 = vector.load %arg11[%c6_107, %c0_108] : memref<16x48xf32, #tpu.memory_space<vmem>>, vector<1x48xf32>
    tpu.vector_store %arg11[%c6_107, %c0_108], %82 {strides = array<i32>} : memref<16x48xf32, #tpu.memory_space<vmem>>, vector<1x48xf32>,
    %c0_109 = arith.constant 0 : index
    %c1056 = arith.constant 1056 : index
    %84 = vector.load %arg9[%c0_109, %c1056] : memref<2x1152xf32, #tpu.memory_space<vmem>>, vector<1x48xf32>
    %c6_110 = arith.constant 6 : index
    %c0_111 = arith.constant 0 : index
    %85 = vector.load %arg12[%c6_110, %c0_111] : memref<16x48xf32, #tpu.memory_space<vmem>>, vector<1x48xf32>
    tpu.vector_store %arg12[%c6_110, %c0_111], %84 {strides = array<i32>} : memref<16x48xf32, #tpu.memory_space<vmem>>, vector<1x48xf32>,
    %c0_112 = arith.constant 0 : index
    %c336 = arith.constant 336 : index
    %86 = vector.load %arg9[%c0_112, %c336] : memref<2x1152xf32, #tpu.memory_space<vmem>>, vector<1x48xf32>
    %c7_113 = arith.constant 7 : index
    %c0_114 = arith.constant 0 : index
    %87 = vector.load %arg10[%c7_113, %c0_114] : memref<16x48xf32, #tpu.memory_space<vmem>>, vector<1x48xf32>
    tpu.vector_store %arg10[%c7_113, %c0_114], %86 {strides = array<i32>} : memref<16x48xf32, #tpu.memory_space<vmem>>, vector<1x48xf32>,
    %c0_115 = arith.constant 0 : index
    %c720 = arith.constant 720 : index
    %88 = vector.load %arg9[%c0_115, %c720] : memref<2x1152xf32, #tpu.memory_space<vmem>>, vector<1x48xf32>
    %c7_116 = arith.constant 7 : index
    %c0_117 = arith.constant 0 : index
    %89 = vector.load %arg11[%c7_116, %c0_117] : memref<16x48xf32, #tpu.memory_space<vmem>>, vector<1x48xf32>
    tpu.vector_store %arg11[%c7_116, %c0_117], %88 {strides = array<i32>} : memref<16x48xf32, #tpu.memory_space<vmem>>, vector<1x48xf32>,
    %c0_118 = arith.constant 0 : index
    %c1104 = arith.constant 1104 : index
    %90 = vector.load %arg9[%c0_118, %c1104] : memref<2x1152xf32, #tpu.memory_space<vmem>>, vector<1x48xf32>
    %c7_119 = arith.constant 7 : index
    %c0_120 = arith.constant 0 : index
    %91 = vector.load %arg12[%c7_119, %c0_120] : memref<16x48xf32, #tpu.memory_space<vmem>>, vector<1x48xf32>
    tpu.vector_store %arg12[%c7_119, %c0_120], %90 {strides = array<i32>} : memref<16x48xf32, #tpu.memory_space<vmem>>, vector<1x48xf32>,
    %c1_121 = arith.constant 1 : index
    %c0_122 = arith.constant 0 : index
    %92 = vector.load %arg9[%c1_121, %c0_122] : memref<2x1152xf32, #tpu.memory_space<vmem>>, vector<1x48xf32>
    %c8_123 = arith.constant 8 : index
    %c0_124 = arith.constant 0 : index
    %93 = vector.load %arg10[%c8_123, %c0_124] : memref<16x48xf32, #tpu.memory_space<vmem>>, vector<1x48xf32>
    tpu.vector_store %arg10[%c8_123, %c0_124], %92 {strides = array<i32>} : memref<16x48xf32, #tpu.memory_space<vmem>>, vector<1x48xf32>,
    %c1_125 = arith.constant 1 : index
    %c384_126 = arith.constant 384 : index
    %94 = vector.load %arg9[%c1_125, %c384_126] : memref<2x1152xf32, #tpu.memory_space<vmem>>, vector<1x48xf32>
    %c8_127 = arith.constant 8 : index
    %c0_128 = arith.constant 0 : index
    %95 = vector.load %arg11[%c8_127, %c0_128] : memref<16x48xf32, #tpu.memory_space<vmem>>, vector<1x48xf32>
    tpu.vector_store %arg11[%c8_127, %c0_128], %94 {strides = array<i32>} : memref<16x48xf32, #tpu.memory_space<vmem>>, vector<1x48xf32>,
    %c1_129 = arith.constant 1 : index
    %c768_130 = arith.constant 768 : index
    %96 = vector.load %arg9[%c1_129, %c768_130] : memref<2x1152xf32, #tpu.memory_space<vmem>>, vector<1x48xf32>
    %c8_131 = arith.constant 8 : index
    %c0_132 = arith.constant 0 : index
    %97 = vector.load %arg12[%c8_131, %c0_132] : memref<16x48xf32, #tpu.memory_space<vmem>>, vector<1x48xf32>
    tpu.vector_store %arg12[%c8_131, %c0_132], %96 {strides = array<i32>} : memref<16x48xf32, #tpu.memory_space<vmem>>, vector<1x48xf32>,
    %c1_133 = arith.constant 1 : index
    %c48_134 = arith.constant 48 : index
    %98 = vector.load %arg9[%c1_133, %c48_134] : memref<2x1152xf32, #tpu.memory_space<vmem>>, vector<1x48xf32>
    %c9_135 = arith.constant 9 : index
    %c0_136 = arith.constant 0 : index
    %99 = vector.load %arg10[%c9_135, %c0_136] : memref<16x48xf32, #tpu.memory_space<vmem>>, vector<1x48xf32>
    tpu.vector_store %arg10[%c9_135, %c0_136], %98 {strides = array<i32>} : memref<16x48xf32, #tpu.memory_space<vmem>>, vector<1x48xf32>,
    %c1_137 = arith.constant 1 : index
    %c432_138 = arith.constant 432 : index
    %100 = vector.load %arg9[%c1_137, %c432_138] : memref<2x1152xf32, #tpu.memory_space<vmem>>, vector<1x48xf32>
    %c9_139 = arith.constant 9 : index
    %c0_140 = arith.constant 0 : index
    %101 = vector.load %arg11[%c9_139, %c0_140] : memref<16x48xf32, #tpu.memory_space<vmem>>, vector<1x48xf32>
    tpu.vector_store %arg11[%c9_139, %c0_140], %100 {strides = array<i32>} : memref<16x48xf32, #tpu.memory_space<vmem>>, vector<1x48xf32>,
    %c1_141 = arith.constant 1 : index
    %c816_142 = arith.constant 816 : index
    %102 = vector.load %arg9[%c1_141, %c816_142] : memref<2x1152xf32, #tpu.memory_space<vmem>>, vector<1x48xf32>
    %c9_143 = arith.constant 9 : index
    %c0_144 = arith.constant 0 : index
    %103 = vector.load %arg12[%c9_143, %c0_144] : memref<16x48xf32, #tpu.memory_space<vmem>>, vector<1x48xf32>
    tpu.vector_store %arg12[%c9_143, %c0_144], %102 {strides = array<i32>} : memref<16x48xf32, #tpu.memory_space<vmem>>, vector<1x48xf32>,
    %c1_145 = arith.constant 1 : index
    %c96_146 = arith.constant 96 : index
    %104 = vector.load %arg9[%c1_145, %c96_146] : memref<2x1152xf32, #tpu.memory_space<vmem>>, vector<1x48xf32>
    %c10_147 = arith.constant 10 : index
    %c0_148 = arith.constant 0 : index
    %105 = vector.load %arg10[%c10_147, %c0_148] : memref<16x48xf32, #tpu.memory_space<vmem>>, vector<1x48xf32>
    tpu.vector_store %arg10[%c10_147, %c0_148], %104 {strides = array<i32>} : memref<16x48xf32, #tpu.memory_space<vmem>>, vector<1x48xf32>,
    %c1_149 = arith.constant 1 : index
    %c480_150 = arith.constant 480 : index
    %106 = vector.load %arg9[%c1_149, %c480_150] : memref<2x1152xf32, #tpu.memory_space<vmem>>, vector<1x48xf32>
    %c10_151 = arith.constant 10 : index
    %c0_152 = arith.constant 0 : index
    %107 = vector.load %arg11[%c10_151, %c0_152] : memref<16x48xf32, #tpu.memory_space<vmem>>, vector<1x48xf32>
    tpu.vector_store %arg11[%c10_151, %c0_152], %106 {strides = array<i32>} : memref<16x48xf32, #tpu.memory_space<vmem>>, vector<1x48xf32>,
    %c1_153 = arith.constant 1 : index
    %c864_154 = arith.constant 864 : index
    %108 = vector.load %arg9[%c1_153, %c864_154] : memref<2x1152xf32, #tpu.memory_space<vmem>>, vector<1x48xf32>
    %c10_155 = arith.constant 10 : index
    %c0_156 = arith.constant 0 : index
    %109 = vector.load %arg12[%c10_155, %c0_156] : memref<16x48xf32, #tpu.memory_space<vmem>>, vector<1x48xf32>
    tpu.vector_store %arg12[%c10_155, %c0_156], %108 {strides = array<i32>} : memref<16x48xf32, #tpu.memory_space<vmem>>, vector<1x48xf32>,
    %c1_157 = arith.constant 1 : index
    %c144_158 = arith.constant 144 : index
    %110 = vector.load %arg9[%c1_157, %c144_158] : memref<2x1152xf32, #tpu.memory_space<vmem>>, vector<1x48xf32>
    %c11_159 = arith.constant 11 : index
    %c0_160 = arith.constant 0 : index
    %111 = vector.load %arg10[%c11_159, %c0_160] : memref<16x48xf32, #tpu.memory_space<vmem>>, vector<1x48xf32>
    tpu.vector_store %arg10[%c11_159, %c0_160], %110 {strides = array<i32>} : memref<16x48xf32, #tpu.memory_space<vmem>>, vector<1x48xf32>,
    %c1_161 = arith.constant 1 : index
    %c528_162 = arith.constant 528 : index
    %112 = vector.load %arg9[%c1_161, %c528_162] : memref<2x1152xf32, #tpu.memory_space<vmem>>, vector<1x48xf32>
    %c11_163 = arith.constant 11 : index
    %c0_164 = arith.constant 0 : index
    %113 = vector.load %arg11[%c11_163, %c0_164] : memref<16x48xf32, #tpu.memory_space<vmem>>, vector<1x48xf32>
    tpu.vector_store %arg11[%c11_163, %c0_164], %112 {strides = array<i32>} : memref<16x48xf32, #tpu.memory_space<vmem>>, vector<1x48xf32>,
    %c1_165 = arith.constant 1 : index
    %c912_166 = arith.constant 912 : index
    %114 = vector.load %arg9[%c1_165, %c912_166] : memref<2x1152xf32, #tpu.memory_space<vmem>>, vector<1x48xf32>
    %c11_167 = arith.constant 11 : index
    %c0_168 = arith.constant 0 : index
    %115 = vector.load %arg12[%c11_167, %c0_168] : memref<16x48xf32, #tpu.memory_space<vmem>>, vector<1x48xf32>
    tpu.vector_store %arg12[%c11_167, %c0_168], %114 {strides = array<i32>} : memref<16x48xf32, #tpu.memory_space<vmem>>, vector<1x48xf32>,
    %c1_169 = arith.constant 1 : index
    %c192_170 = arith.constant 192 : index
    %116 = vector.load %arg9[%c1_169, %c192_170] : memref<2x1152xf32, #tpu.memory_space<vmem>>, vector<1x48xf32>
    %c12 = arith.constant 12 : index
    %c0_171 = arith.constant 0 : index
    %117 = vector.load %arg10[%c12, %c0_171] : memref<16x48xf32, #tpu.memory_space<vmem>>, vector<1x48xf32>
    tpu.vector_store %arg10[%c12, %c0_171], %116 {strides = array<i32>} : memref<16x48xf32, #tpu.memory_space<vmem>>, vector<1x48xf32>,
    %c1_172 = arith.constant 1 : index
    %c576_173 = arith.constant 576 : index
    %118 = vector.load %arg9[%c1_172, %c576_173] : memref<2x1152xf32, #tpu.memory_space<vmem>>, vector<1x48xf32>
    %c12_174 = arith.constant 12 : index
    %c0_175 = arith.constant 0 : index
    %119 = vector.load %arg11[%c12_174, %c0_175] : memref<16x48xf32, #tpu.memory_space<vmem>>, vector<1x48xf32>
    tpu.vector_store %arg11[%c12_174, %c0_175], %118 {strides = array<i32>} : memref<16x48xf32, #tpu.memory_space<vmem>>, vector<1x48xf32>,
    %c1_176 = arith.constant 1 : index
    %c960_177 = arith.constant 960 : index
    %120 = vector.load %arg9[%c1_176, %c960_177] : memref<2x1152xf32, #tpu.memory_space<vmem>>, vector<1x48xf32>
    %c12_178 = arith.constant 12 : index
    %c0_179 = arith.constant 0 : index
    %121 = vector.load %arg12[%c12_178, %c0_179] : memref<16x48xf32, #tpu.memory_space<vmem>>, vector<1x48xf32>
    tpu.vector_store %arg12[%c12_178, %c0_179], %120 {strides = array<i32>} : memref<16x48xf32, #tpu.memory_space<vmem>>, vector<1x48xf32>,
    %c1_180 = arith.constant 1 : index
    %c240_181 = arith.constant 240 : index
    %122 = vector.load %arg9[%c1_180, %c240_181] : memref<2x1152xf32, #tpu.memory_space<vmem>>, vector<1x48xf32>
    %c13 = arith.constant 13 : index
    %c0_182 = arith.constant 0 : index
    %123 = vector.load %arg10[%c13, %c0_182] : memref<16x48xf32, #tpu.memory_space<vmem>>, vector<1x48xf32>
    tpu.vector_store %arg10[%c13, %c0_182], %122 {strides = array<i32>} : memref<16x48xf32, #tpu.memory_space<vmem>>, vector<1x48xf32>,
    %c1_183 = arith.constant 1 : index
    %c624_184 = arith.constant 624 : index
    %124 = vector.load %arg9[%c1_183, %c624_184] : memref<2x1152xf32, #tpu.memory_space<vmem>>, vector<1x48xf32>
    %c13_185 = arith.constant 13 : index
    %c0_186 = arith.constant 0 : index
    %125 = vector.load %arg11[%c13_185, %c0_186] : memref<16x48xf32, #tpu.memory_space<vmem>>, vector<1x48xf32>
    tpu.vector_store %arg11[%c13_185, %c0_186], %124 {strides = array<i32>} : memref<16x48xf32, #tpu.memory_space<vmem>>, vector<1x48xf32>,
    %c1_187 = arith.constant 1 : index
    %c1008_188 = arith.constant 1008 : index
    %126 = vector.load %arg9[%c1_187, %c1008_188] : memref<2x1152xf32, #tpu.memory_space<vmem>>, vector<1x48xf32>
    %c13_189 = arith.constant 13 : index
    %c0_190 = arith.constant 0 : index
    %127 = vector.load %arg12[%c13_189, %c0_190] : memref<16x48xf32, #tpu.memory_space<vmem>>, vector<1x48xf32>
    tpu.vector_store %arg12[%c13_189, %c0_190], %126 {strides = array<i32>} : memref<16x48xf32, #tpu.memory_space<vmem>>, vector<1x48xf32>,
    %c1_191 = arith.constant 1 : index
    %c288_192 = arith.constant 288 : index
    %128 = vector.load %arg9[%c1_191, %c288_192] : memref<2x1152xf32, #tpu.memory_space<vmem>>, vector<1x48xf32>
    %c14 = arith.constant 14 : index
    %c0_193 = arith.constant 0 : index
    %129 = vector.load %arg10[%c14, %c0_193] : memref<16x48xf32, #tpu.memory_space<vmem>>, vector<1x48xf32>
    tpu.vector_store %arg10[%c14, %c0_193], %128 {strides = array<i32>} : memref<16x48xf32, #tpu.memory_space<vmem>>, vector<1x48xf32>,
    %c1_194 = arith.constant 1 : index
    %c672_195 = arith.constant 672 : index
    %130 = vector.load %arg9[%c1_194, %c672_195] : memref<2x1152xf32, #tpu.memory_space<vmem>>, vector<1x48xf32>
    %c14_196 = arith.constant 14 : index
    %c0_197 = arith.constant 0 : index
    %131 = vector.load %arg11[%c14_196, %c0_197] : memref<16x48xf32, #tpu.memory_space<vmem>>, vector<1x48xf32>
    tpu.vector_store %arg11[%c14_196, %c0_197], %130 {strides = array<i32>} : memref<16x48xf32, #tpu.memory_space<vmem>>, vector<1x48xf32>,
    %c1_198 = arith.constant 1 : index
    %c1056_199 = arith.constant 1056 : index
    %132 = vector.load %arg9[%c1_198, %c1056_199] : memref<2x1152xf32, #tpu.memory_space<vmem>>, vector<1x48xf32>
    %c14_200 = arith.constant 14 : index
    %c0_201 = arith.constant 0 : index
    %133 = vector.load %arg12[%c14_200, %c0_201] : memref<16x48xf32, #tpu.memory_space<vmem>>, vector<1x48xf32>
    tpu.vector_store %arg12[%c14_200, %c0_201], %132 {strides = array<i32>} : memref<16x48xf32, #tpu.memory_space<vmem>>, vector<1x48xf32>,
    %c1_202 = arith.constant 1 : index
    %c336_203 = arith.constant 336 : index
    %134 = vector.load %arg9[%c1_202, %c336_203] : memref<2x1152xf32, #tpu.memory_space<vmem>>, vector<1x48xf32>
    %c15 = arith.constant 15 : index
    %c0_204 = arith.constant 0 : index
    %135 = vector.load %arg10[%c15, %c0_204] : memref<16x48xf32, #tpu.memory_space<vmem>>, vector<1x48xf32>
    tpu.vector_store %arg10[%c15, %c0_204], %134 {strides = array<i32>} : memref<16x48xf32, #tpu.memory_space<vmem>>, vector<1x48xf32>,
    %c1_205 = arith.constant 1 : index
    %c720_206 = arith.constant 720 : index
    %136 = vector.load %arg9[%c1_205, %c720_206] : memref<2x1152xf32, #tpu.memory_space<vmem>>, vector<1x48xf32>
    %c15_207 = arith.constant 15 : index
    %c0_208 = arith.constant 0 : index
    %137 = vector.load %arg11[%c15_207, %c0_208] : memref<16x48xf32, #tpu.memory_space<vmem>>, vector<1x48xf32>
    tpu.vector_store %arg11[%c15_207, %c0_208], %136 {strides = array<i32>} : memref<16x48xf32, #tpu.memory_space<vmem>>, vector<1x48xf32>,
    %c1_209 = arith.constant 1 : index
    %c1104_210 = arith.constant 1104 : index
    %138 = vector.load %arg9[%c1_209, %c1104_210] : memref<2x1152xf32, #tpu.memory_space<vmem>>, vector<1x48xf32>
    %c15_211 = arith.constant 15 : index
    %c0_212 = arith.constant 0 : index
    %139 = vector.load %arg12[%c15_211, %c0_212] : memref<16x48xf32, #tpu.memory_space<vmem>>, vector<1x48xf32>
    tpu.vector_store %arg12[%c15_211, %c0_212], %138 {strides = array<i32>} : memref<16x48xf32, #tpu.memory_space<vmem>>, vector<1x48xf32>,
    %c0_213 = arith.constant 0 : index
    %c0_214 = arith.constant 0 : index
    %140 = vector.load %arg10[%c0_213, %c0_214] : memref<16x48xf32, #tpu.memory_space<vmem>>, vector<16x48xf32>
    %141 = arith.truncf %140 : vector<16x48xf32> to vector<16x48xbf16>
    %c0_215 = arith.constant 0 : index
    %c0_216 = arith.constant 0 : index
    %142 = vector.load %arg11[%c0_215, %c0_216] : memref<16x48xf32, #tpu.memory_space<vmem>>, vector<16x48xf32>
    %143 = arith.truncf %142 : vector<16x48xf32> to vector<16x48xbf16>
    %c0_217 = arith.constant 0 : index
    %c0_218 = arith.constant 0 : index
    %144 = vector.load %arg12[%c0_217, %c0_218] : memref<16x48xf32, #tpu.memory_space<vmem>>, vector<16x48xf32>
    %145 = arith.truncf %144 : vector<16x48xf32> to vector<16x48xbf16>
    %cst_219 = arith.constant dense<0.000000e+00> : vector<16x16xf32>
    %146 = tpu.matmul %141, %143, %cst_219 {dimension_numbers = #tpu.dot_dimension_numbers<[1], [1], [0], [0], [0, 0, 1, 0], [], []>} : vector<16x48xbf16>, vector<16x48xbf16>, vector<16x16xf32> -> vector<16x16xf32>
    %cst_220 = arith.constant 0.0510310382 : f32
    %147 = vector.broadcast %cst_220 : f32 to vector<16x16xf32>
    %148 = arith.mulf %146, %147 : vector<16x16xf32>
    %cst_221 = arith.constant dense<0xFF800000> : vector<16xf32>
    %149 = vector.multi_reduction <maximumf>, %148, %cst_221 [1] : vector<16x16xf32> to vector<16xf32>
    %150 = vector.shape_cast %149 : vector<16xf32> to vector<16x1xf32>
    %151 = vector.broadcast %150 : vector<16x1xf32> to vector<16x16xf32>
    %152 = arith.subf %148, %151 : vector<16x16xf32>
    %153 = math.exp %152 : vector<16x16xf32>
    %cst_222 = arith.constant dense<0.000000e+00> : vector<16xf32>
    %154 = vector.multi_reduction <add>, %153, %cst_222 [1] : vector<16x16xf32> to vector<16xf32>
    %155 = vector.shape_cast %154 : vector<16xf32> to vector<16x1xf32>
    %156 = tpu.reciprocal %155 {approx = true} : vector<16x1xf32> -> vector<16x1xf32>
    %157 = vector.broadcast %156 : vector<16x1xf32> to vector<16x16xf32>
    %158 = arith.mulf %153, %157 : vector<16x16xf32>
    %159 = arith.truncf %158 : vector<16x16xf32> to vector<16x16xbf16>
    %cst_223 = arith.constant dense<0.000000e+00> : vector<16x48xf32>
    %160 = tpu.matmul %159, %145, %cst_223 {dimension_numbers = #tpu.dot_dimension_numbers<[1], [0], [0], [1], [0, 0, 1, 1], [], []>} : vector<16x16xbf16>, vector<16x48xbf16>, vector<16x48xf32> -> vector<16x48xf32>
    %c0_224 = arith.constant 0 : index
    %c0_225 = arith.constant 0 : index
    %161 = vector.load %arg10[%c0_224, %c0_225] : memref<16x48xf32, #tpu.memory_space<vmem>>, vector<16x48xf32>
    tpu.vector_store %arg10[%c0_224, %c0_225], %160 {strides = array<i32>} : memref<16x48xf32, #tpu.memory_space<vmem>>, vector<16x48xf32>,
    %c0_226 = arith.constant 0 : index
    %c0_227 = arith.constant 0 : index
    %162 = vector.load %arg10[%c0_226, %c0_227] : memref<16x48xf32, #tpu.memory_space<vmem>>, vector<1x48xf32>
    %c0_228 = arith.constant 0 : index
    %c0_229 = arith.constant 0 : index
    %163 = vector.load %arg13[%c0_228, %c0_229] : memref<2x384xf32, #tpu.memory_space<vmem>>, vector<1x48xf32>
    tpu.vector_store %arg13[%c0_228, %c0_229], %162 {strides = array<i32>} : memref<2x384xf32, #tpu.memory_space<vmem>>, vector<1x48xf32>,
    %c1_230 = arith.constant 1 : index
    %c0_231 = arith.constant 0 : index
    %164 = vector.load %arg10[%c1_230, %c0_231] : memref<16x48xf32, #tpu.memory_space<vmem>>, vector<1x48xf32>
    %c0_232 = arith.constant 0 : index
    %c48_233 = arith.constant 48 : index
    %165 = vector.load %arg13[%c0_232, %c48_233] : memref<2x384xf32, #tpu.memory_space<vmem>>, vector<1x48xf32>
    tpu.vector_store %arg13[%c0_232, %c48_233], %164 {strides = array<i32>} : memref<2x384xf32, #tpu.memory_space<vmem>>, vector<1x48xf32>,
    %c2_234 = arith.constant 2 : index
    %c0_235 = arith.constant 0 : index
    %166 = vector.load %arg10[%c2_234, %c0_235] : memref<16x48xf32, #tpu.memory_space<vmem>>, vector<1x48xf32>
    %c0_236 = arith.constant 0 : index
    %c96_237 = arith.constant 96 : index
    %167 = vector.load %arg13[%c0_236, %c96_237] : memref<2x384xf32, #tpu.memory_space<vmem>>, vector<1x48xf32>
    tpu.vector_store %arg13[%c0_236, %c96_237], %166 {strides = array<i32>} : memref<2x384xf32, #tpu.memory_space<vmem>>, vector<1x48xf32>,
    %c3_238 = arith.constant 3 : index
    %c0_239 = arith.constant 0 : index
    %168 = vector.load %arg10[%c3_238, %c0_239] : memref<16x48xf32, #tpu.memory_space<vmem>>, vector<1x48xf32>
    %c0_240 = arith.constant 0 : index
    %c144_241 = arith.constant 144 : index
    %169 = vector.load %arg13[%c0_240, %c144_241] : memref<2x384xf32, #tpu.memory_space<vmem>>, vector<1x48xf32>
    tpu.vector_store %arg13[%c0_240, %c144_241], %168 {strides = array<i32>} : memref<2x384xf32, #tpu.memory_space<vmem>>, vector<1x48xf32>,
    %c4_242 = arith.constant 4 : index
    %c0_243 = arith.constant 0 : index
    %170 = vector.load %arg10[%c4_242, %c0_243] : memref<16x48xf32, #tpu.memory_space<vmem>>, vector<1x48xf32>
    %c0_244 = arith.constant 0 : index
    %c192_245 = arith.constant 192 : index
    %171 = vector.load %arg13[%c0_244, %c192_245] : memref<2x384xf32, #tpu.memory_space<vmem>>, vector<1x48xf32>
    tpu.vector_store %arg13[%c0_244, %c192_245], %170 {strides = array<i32>} : memref<2x384xf32, #tpu.memory_space<vmem>>, vector<1x48xf32>,
    %c5_246 = arith.constant 5 : index
    %c0_247 = arith.constant 0 : index
    %172 = vector.load %arg10[%c5_246, %c0_247] : memref<16x48xf32, #tpu.memory_space<vmem>>, vector<1x48xf32>
    %c0_248 = arith.constant 0 : index
    %c240_249 = arith.constant 240 : index
    %173 = vector.load %arg13[%c0_248, %c240_249] : memref<2x384xf32, #tpu.memory_space<vmem>>, vector<1x48xf32>
    tpu.vector_store %arg13[%c0_248, %c240_249], %172 {strides = array<i32>} : memref<2x384xf32, #tpu.memory_space<vmem>>, vector<1x48xf32>,
    %c6_250 = arith.constant 6 : index
    %c0_251 = arith.constant 0 : index
    %174 = vector.load %arg10[%c6_250, %c0_251] : memref<16x48xf32, #tpu.memory_space<vmem>>, vector<1x48xf32>
    %c0_252 = arith.constant 0 : index
    %c288_253 = arith.constant 288 : index
    %175 = vector.load %arg13[%c0_252, %c288_253] : memref<2x384xf32, #tpu.memory_space<vmem>>, vector<1x48xf32>
    tpu.vector_store %arg13[%c0_252, %c288_253], %174 {strides = array<i32>} : memref<2x384xf32, #tpu.memory_space<vmem>>, vector<1x48xf32>,
    %c7_254 = arith.constant 7 : index
    %c0_255 = arith.constant 0 : index
    %176 = vector.load %arg10[%c7_254, %c0_255] : memref<16x48xf32, #tpu.memory_space<vmem>>, vector<1x48xf32>
    %c0_256 = arith.constant 0 : index
    %c336_257 = arith.constant 336 : index
    %177 = vector.load %arg13[%c0_256, %c336_257] : memref<2x384xf32, #tpu.memory_space<vmem>>, vector<1x48xf32>
    tpu.vector_store %arg13[%c0_256, %c336_257], %176 {strides = array<i32>} : memref<2x384xf32, #tpu.memory_space<vmem>>, vector<1x48xf32>,
    %c8_258 = arith.constant 8 : index
    %c0_259 = arith.constant 0 : index
    %178 = vector.load %arg10[%c8_258, %c0_259] : memref<16x48xf32, #tpu.memory_space<vmem>>, vector<1x48xf32>
    %c1_260 = arith.constant 1 : index
    %c0_261 = arith.constant 0 : index
    %179 = vector.load %arg13[%c1_260, %c0_261] : memref<2x384xf32, #tpu.memory_space<vmem>>, vector<1x48xf32>
    tpu.vector_store %arg13[%c1_260, %c0_261], %178 {strides = array<i32>} : memref<2x384xf32, #tpu.memory_space<vmem>>, vector<1x48xf32>,
    %c9_262 = arith.constant 9 : index
    %c0_263 = arith.constant 0 : index
    %180 = vector.load %arg10[%c9_262, %c0_263] : memref<16x48xf32, #tpu.memory_space<vmem>>, vector<1x48xf32>
    %c1_264 = arith.constant 1 : index
    %c48_265 = arith.constant 48 : index
    %181 = vector.load %arg13[%c1_264, %c48_265] : memref<2x384xf32, #tpu.memory_space<vmem>>, vector<1x48xf32>
    tpu.vector_store %arg13[%c1_264, %c48_265], %180 {strides = array<i32>} : memref<2x384xf32, #tpu.memory_space<vmem>>, vector<1x48xf32>,
    %c10_266 = arith.constant 10 : index
    %c0_267 = arith.constant 0 : index
    %182 = vector.load %arg10[%c10_266, %c0_267] : memref<16x48xf32, #tpu.memory_space<vmem>>, vector<1x48xf32>
    %c1_268 = arith.constant 1 : index
    %c96_269 = arith.constant 96 : index
    %183 = vector.load %arg13[%c1_268, %c96_269] : memref<2x384xf32, #tpu.memory_space<vmem>>, vector<1x48xf32>
    tpu.vector_store %arg13[%c1_268, %c96_269], %182 {strides = array<i32>} : memref<2x384xf32, #tpu.memory_space<vmem>>, vector<1x48xf32>,
    %c11_270 = arith.constant 11 : index
    %c0_271 = arith.constant 0 : index
    %184 = vector.load %arg10[%c11_270, %c0_271] : memref<16x48xf32, #tpu.memory_space<vmem>>, vector<1x48xf32>
    %c1_272 = arith.constant 1 : index
    %c144_273 = arith.constant 144 : index
    %185 = vector.load %arg13[%c1_272, %c144_273] : memref<2x384xf32, #tpu.memory_space<vmem>>, vector<1x48xf32>
    tpu.vector_store %arg13[%c1_272, %c144_273], %184 {strides = array<i32>} : memref<2x384xf32, #tpu.memory_space<vmem>>, vector<1x48xf32>,
    %c12_274 = arith.constant 12 : index
    %c0_275 = arith.constant 0 : index
    %186 = vector.load %arg10[%c12_274, %c0_275] : memref<16x48xf32, #tpu.memory_space<vmem>>, vector<1x48xf32>
    %c1_276 = arith.constant 1 : index
    %c192_277 = arith.constant 192 : index
    %187 = vector.load %arg13[%c1_276, %c192_277] : memref<2x384xf32, #tpu.memory_space<vmem>>, vector<1x48xf32>
    tpu.vector_store %arg13[%c1_276, %c192_277], %186 {strides = array<i32>} : memref<2x384xf32, #tpu.memory_space<vmem>>, vector<1x48xf32>,
    %c13_278 = arith.constant 13 : index
    %c0_279 = arith.constant 0 : index
    %188 = vector.load %arg10[%c13_278, %c0_279] : memref<16x48xf32, #tpu.memory_space<vmem>>, vector<1x48xf32>
    %c1_280 = arith.constant 1 : index
    %c240_281 = arith.constant 240 : index
    %189 = vector.load %arg13[%c1_280, %c240_281] : memref<2x384xf32, #tpu.memory_space<vmem>>, vector<1x48xf32>
    tpu.vector_store %arg13[%c1_280, %c240_281], %188 {strides = array<i32>} : memref<2x384xf32, #tpu.memory_space<vmem>>, vector<1x48xf32>,
    %c14_282 = arith.constant 14 : index
    %c0_283 = arith.constant 0 : index
    %190 = vector.load %arg10[%c14_282, %c0_283] : memref<16x48xf32, #tpu.memory_space<vmem>>, vector<1x48xf32>
    %c1_284 = arith.constant 1 : index
    %c288_285 = arith.constant 288 : index
    %191 = vector.load %arg13[%c1_284, %c288_285] : memref<2x384xf32, #tpu.memory_space<vmem>>, vector<1x48xf32>
    tpu.vector_store %arg13[%c1_284, %c288_285], %190 {strides = array<i32>} : memref<2x384xf32, #tpu.memory_space<vmem>>, vector<1x48xf32>,
    %c15_286 = arith.constant 15 : index
    %c0_287 = arith.constant 0 : index
    %192 = vector.load %arg10[%c15_286, %c0_287] : memref<16x48xf32, #tpu.memory_space<vmem>>, vector<1x48xf32>
    %c1_288 = arith.constant 1 : index
    %c336_289 = arith.constant 336 : index
    %193 = vector.load %arg13[%c1_288, %c336_289] : memref<2x384xf32, #tpu.memory_space<vmem>>, vector<1x48xf32>
    tpu.vector_store %arg13[%c1_288, %c336_289], %192 {strides = array<i32>} : memref<2x384xf32, #tpu.memory_space<vmem>>, vector<1x48xf32>,
    %c0_290 = arith.constant 0 : index
    %c0_291 = arith.constant 0 : index
    %194 = vector.load %arg13[%c0_290, %c0_291] : memref<2x384xf32, #tpu.memory_space<vmem>>, vector<2x384xf32>
    %c0_292 = arith.constant 0 : index
    %c0_293 = arith.constant 0 : index
    %195 = vector.load %arg3[%c0_292, %c0_293] : memref<384x384xf32, #tpu.memory_space<vmem>>, vector<384x384xf32>
    %cst_294 = arith.constant dense<0.000000e+00> : vector<2x384xf32>
    %196 = tpu.matmul %194, %195, %cst_294 {dimension_numbers = #tpu.dot_dimension_numbers<[1], [0], [0], [1], [0, 0, 1, 1], [], []>} : vector<2x384xf32>, vector<384x384xf32>, vector<2x384xf32> -> vector<2x384xf32>
    %c0_295 = arith.constant 0 : index
    %c0_296 = arith.constant 0 : index
    %197 = vector.load %arg7[%c0_295, %c0_296] : memref<2x384xf32, #tpu.memory_space<vmem>>, vector<2x384xf32>
    tpu.vector_store %arg7[%c0_295, %c0_296], %196 {strides = array<i32>} : memref<2x384xf32, #tpu.memory_space<vmem>>, vector<2x384xf32>,
    %198 = arith.truncf %194 : vector<2x384xf32> to vector<2x384xbf16>
    %c0_297 = arith.constant 0 : index
    %c0_298 = arith.constant 0 : index
    %199 = vector.load %arg4[%c0_297, %c0_298] : memref<384x128xbf16, #tpu.memory_space<vmem>>, vector<384x128xbf16>
    %cst_299 = arith.constant dense<0.000000e+00> : vector<2x128xf32>
    %200 = tpu.matmul %198, %199, %cst_299 {dimension_numbers = #tpu.dot_dimension_numbers<[1], [0], [0], [1], [0, 0, 1, 1], [], []>} : vector<2x384xbf16>, vector<384x128xbf16>, vector<2x128xf32> -> vector<2x128xf32>
    %c0_300 = arith.constant 0 : index
    %c0_301 = arith.constant 0 : index
    %201 = vector.load %arg5[%c0_300, %c0_301] : memref<1x128xf32, #tpu.memory_space<vmem>>, vector<1x128xf32>
    %202 = vector.broadcast %201 : vector<1x128xf32> to vector<2x128xf32>
    %203 = arith.addf %200, %202 : vector<2x128xf32>
    %c0_302 = arith.constant 0 : index
    %c0_303 = arith.constant 0 : index
    %204 = vector.load %arg6[%c0_302, %c0_303] : memref<2x128xf32, #tpu.memory_space<vmem>>, vector<2x128xf32>
    tpu.vector_store %arg6[%c0_302, %c0_303], %203 {strides = array<i32>} : memref<2x128xf32, #tpu.memory_space<vmem>>, vector<2x128xf32>,
    return
  }
}

</mosaic_0001>

<llo_original>
// kernel: bert_layer_aggregation_forward.1
$region0: #{bert_layer_aggregation_forward.1}
  #allocation0 [shape = 'u32[]', space=smem, size = 0x4, offset = 0x4, fixed_abs, tag = 'smem constant byte address 0x4 - core index']
  #allocation1 [shape = 'u32[144,128]{1,0:T(1,128)}', space=vmem, size = 0x12000, scoped, tag = 'internal scratch']
  #allocation2 [shape = 'f32[2,384]{1,0:T(2,128)}', space=vmem, size = 0xc00, scoped, tag = 'scratch operand']
  #allocation3 [shape = 'f32[2,1152]{1,0:T(2,128)}', space=vmem, size = 0x2400, scoped, tag = 'scratch operand']
  #allocation4 [shape = 'f32[16,48]{1,0:T(8,128)}', space=vmem, size = 0x2000, scoped, tag = 'scratch operand']
  #allocation5 [shape = 'f32[16,48]{1,0:T(8,128)}', space=vmem, size = 0x2000, scoped, tag = 'scratch operand']
  #allocation6 [shape = 'f32[16,48]{1,0:T(8,128)}', space=vmem, size = 0x2000, scoped, tag = 'scratch operand']
  #allocation7 [shape = 'f32[2,384]{1,0:T(2,128)}', space=vmem, size = 0xc00, scoped, tag = 'scratch operand']
  %s0 = inlined_call_operand.vmem [shape: f32[12,2,32], index: 0, kind: input, shape index: {}]
  %s1 = inlined_call_operand.hbm [shape: bf16[384,1152], index: 1, kind: input, shape index: {}]
  %s2 = inlined_call_operand.vmem [shape: f32[1,1152], index: 2, kind: input, shape index: {}]
  %s3 = inlined_call_operand.hbm [shape: f32[384,384], index: 3, kind: input, shape index: {}]
  %s4 = inlined_call_operand.hbm [shape: bf16[384,128], index: 4, kind: input, shape index: {}]
  %s5 = inlined_call_operand.vmem [shape: f32[1,128], index: 5, kind: input, shape index: {}]
  %s6 = inlined_call_operand.hbm [shape: f32[2,128], index: 6, kind: output, shape index: {0}]
  %s7 = inlined_call_operand.hbm [shape: f32[2,384], index: 7, kind: output, shape index: {1}]
  %8 = xla_tuple %s6, %s7
  %s9 = sld [smem:[#allocation0]]
  $region54: #{bert_layer_aggregation_forward.1} parent=0
    _
  %s11 = ssub.s32 1, %s9
  %s12 = scalar_select 0, %s11, %s9
  $region1: #{bert_layer_aggregation_forward.1} parent=0
    #allocation8 [shape = 'u8[884736]{0}', space=vmem, size = 0xd8000, scoped, tag = 'input window, operand 1, single buffered']
    #allocation9 [shape = 's32[1]{0}', space=sflag, size = 0x4, scoped, tag = 'scoped memory for bert_layer_aggregation_forward.1']
    #allocation10 [shape = 's32[1]{0}', space=sflag, size = 0x4, scoped, tag = 'scoped memory for bert_layer_aggregation_forward.1']
    #allocation11 [shape = 'u8[589824]{0}', space=vmem, size = 0x90000, scoped, tag = 'input window, operand 3, single buffered']
    #allocation12 [shape = 's32[1]{0}', space=sflag, size = 0x4, scoped, tag = 'scoped memory for bert_layer_aggregation_forward.1']
    #allocation13 [shape = 'u8[98304]{0}', space=vmem, size = 0x18000, scoped, tag = 'input window, operand 4, single buffered']
    #allocation14 [shape = 'u8[1024]{0}', space=vmem, size = 0x400, scoped, tag = 'output window, operand 0, single buffered']
    #allocation15 [shape = 'u8[3072]{0}', space=vmem, size = 0xc00, scoped, tag = 'output window, operand 1, single buffered']
    #allocation16 [shape = 's32[1]{0}', space=sflag, size = 0x4, scoped, tag = 'scoped memory for bert_layer_aggregation_forward.1']
    %13 = vsyncpa [#allocation9], 0
    %14 = vsyncpa [#allocation12], 0
    %15 = vsyncpa [#allocation10], 0
    %16 = vsyncpa [#allocation16], 0
    // Predicated region
    $region2: #{bert_layer_aggregation_forward.1} parent=1 // pred_check
      _
    $region3: #{bert_layer_aggregation_forward.1} parent=1 // pred_check_branch
      %18 = sbr.rel (0) target = $region5
    $region4: #{bert_layer_aggregation_forward.1} parent=1 // pred_region
      _
    $region5: #{bert_layer_aggregation_forward.1} parent=1 // pred_fallthru
      _
    // Predicated region
    $region6: #{bert_layer_aggregation_forward.1} parent=1 // pred_check
      _
    $region7: #{bert_layer_aggregation_forward.1} parent=1 // pred_check_branch
      %20 = sbr.rel (0) target = $region9
    $region8: #{bert_layer_aggregation_forward.1} parent=1 // pred_region
      %s22 = ssub.s32 27648, 27648
      %23 = vsyncadd [#allocation9], %s22
      %s24 = sshll.u32 [#allocation8], 4
      %s25 = int_to_ptr.vmem [resolvable:$true] %s24
      %30 = dma.hbm_to_vmem [thread:$0]  %s1, 27648, %s25, [#allocation9], 576, 576, 36
    $region9: #{bert_layer_aggregation_forward.1} parent=1 // pred_fallthru
      _
    // Predicated region
    $region10: #{bert_layer_aggregation_forward.1} parent=1 // pred_check
      _
    $region11: #{bert_layer_aggregation_forward.1} parent=1 // pred_check_branch
      %32 = sbr.rel (0) target = $region13
    $region12: #{bert_layer_aggregation_forward.1} parent=1 // pred_region
      _
    $region13: #{bert_layer_aggregation_forward.1} parent=1 // pred_fallthru
      _
    // Predicated region
    $region14: #{bert_layer_aggregation_forward.1} parent=1 // pred_check
      _
    $region15: #{bert_layer_aggregation_forward.1} parent=1 // pred_check_branch
      %34 = sbr.rel (0) target = $region17
    $region16: #{bert_layer_aggregation_forward.1} parent=1 // pred_region
      %s36 = ssub.s32 18432, 18432
      %37 = vsyncadd [#allocation12], %s36
      %s38 = sshll.u32 [#allocation11], 4
      %s39 = int_to_ptr.vmem [resolvable:$true] %s38
      %44 = dma.hbm_to_vmem [thread:$0]  %s3, 18432, %s39, [#allocation12], 384, 384, 24
    $region17: #{bert_layer_aggregation_forward.1} parent=1 // pred_fallthru
      _
    // Predicated region
    $region18: #{bert_layer_aggregation_forward.1} parent=1 // pred_check
      _
    $region19: #{bert_layer_aggregation_forward.1} parent=1 // pred_check_branch
      %46 = sbr.rel (0) target = $region21
    $region20: #{bert_layer_aggregation_forward.1} parent=1 // pred_region
      %s48 = ssub.s32 3072, 3072
      %49 = vsyncadd [#allocation12], %s48
      %s50 = sshll.u32 [#allocation13], 4
      %s51 = int_to_ptr.vmem [resolvable:$true] %s50
      %56 = dma.hbm_to_vmem [thread:$0]  %s4, 3072, %s51, [#allocation12], 64, 64, 4
    $region21: #{bert_layer_aggregation_forward.1} parent=1 // pred_fallthru
      _
    // Predicated region
    $region22: #{bert_layer_aggregation_forward.1} parent=1 // pred_check
      _
    $region23: #{bert_layer_aggregation_forward.1} parent=1 // pred_check_branch
      %58 = sbr.rel (0) target = $region25
    $region24: #{bert_layer_aggregation_forward.1} parent=1 // pred_region
      _
    $region25: #{bert_layer_aggregation_forward.1} parent=1 // pred_fallthru
      _
    // Predicated region
    $region26: #{bert_layer_aggregation_forward.1} parent=1 // pred_check
      _
    $region27: #{bert_layer_aggregation_forward.1} parent=1 // pred_check_branch
      %60 = sbr.rel (0) target = $region29
    $region28: #{bert_layer_aggregation_forward.1} parent=1 // pred_region
      %61 = dma.done [#allocation9], 27648
    $region29: #{bert_layer_aggregation_forward.1} parent=1 // pred_fallthru
      _
    // Predicated region
    $region30: #{bert_layer_aggregation_forward.1} parent=1 // pred_check
      _
    $region31: #{bert_layer_aggregation_forward.1} parent=1 // pred_check_branch
      %63 = sbr.rel (0) target = $region33
    $region32: #{bert_layer_aggregation_forward.1} parent=1 // pred_region
      %64 = dma.done [#allocation12], 18432
    $region33: #{bert_layer_aggregation_forward.1} parent=1 // pred_fallthru
      _
    // Predicated region
    $region34: #{bert_layer_aggregation_forward.1} parent=1 // pred_check
      _
    $region35: #{bert_layer_aggregation_forward.1} parent=1 // pred_check_branch
      %66 = sbr.rel (0) target = $region37
    $region36: #{bert_layer_aggregation_forward.1} parent=1 // pred_region
      %67 = dma.done [#allocation12], 3072
    $region37: #{bert_layer_aggregation_forward.1} parent=1 // pred_fallthru
      _
    %v69 = vld [vmem:[%s0] sm:$0x3]
    %vm70 = vcmask 254976
    %71 = vst.msk [vmem:[#allocation2] sm:$0x3] %vm70, %v69
    %s72 = scalar_lea.vmem %s0, 2
    %v73 = vld [vmem:[%s72] sm:$0x3]
    %v76 = vunpack.c.l.s4 1983009808
    %v77 = vunpack.c.0.s8 %v76
    %v78 = vlaneseq
    %v79 = vshrl.u32 %v78, 7
    %v80 = vsub.s32 %v77, %v79
    %v81 = vrot.slane %v73, %v80
    %82 = vrot.lane.b32.xlu0 %v81, 32
    %v83 = vpop.permute.xlu0 %82
    %vm85 = vcmask 517376
    %86 = vst.msk [vmem:[#allocation2] sm:$0x3] %vm85, %v83
    %s87 = scalar_lea.vmem %s0, 4
    %v88 = vld [vmem:[%s87] sm:$0x3]
    %v91 = vunpack.c.l.s4 1983009808
    %v92 = vunpack.c.0.s8 %v91
    %v93 = vlaneseq
    %v94 = vshrl.u32 %v93, 7
    %v95 = vsub.s32 %v92, %v94
    %v96 = vrot.slane %v88, %v95
    %97 = vrot.lane.b32.xlu0 %v96, 64
    %v98 = vpop.permute.xlu0 %97
    %vm100 = vcmask 779776
    %101 = vst.msk [vmem:[#allocation2] sm:$0x3] %vm100, %v98
    %s102 = scalar_lea.vmem %s0, 6
    %v103 = vld [vmem:[%s102] sm:$0x3]
    %v106 = vunpack.c.l.s4 1983009808
    %v107 = vunpack.c.0.s8 %v106
    %v108 = vlaneseq
    %v109 = vshrl.u32 %v108, 7
    %v110 = vsub.s32 %v107, %v109
    %v111 = vrot.slane %v103, %v110
    %112 = vrot.lane.b32.xlu0 %v111, 96
    %v113 = vpop.permute.xlu0 %112
    %vm115 = vcmask 1042176
    %116 = vst.msk [vmem:[#allocation2] sm:$0x3] %vm115, %v113
    %s117 = scalar_lea.vmem %s0, 8
    %v118 = vld [vmem:[%s117] sm:$0x3]
    %119 = vst.msk [vmem:[#allocation2 + $0x2] sm:$0x3] %vm70, %v118
    %s120 = scalar_lea.vmem %s0, 10
    %v121 = vld [vmem:[%s120] sm:$0x3]
    %v124 = vunpack.c.l.s4 1983009808
    %v125 = vunpack.c.0.s8 %v124
    %v126 = vlaneseq
    %v127 = vshrl.u32 %v126, 7
    %v128 = vsub.s32 %v125, %v127
    %v129 = vrot.slane %v121, %v128
    %130 = vrot.lane.b32.xlu0 %v129, 32
    %v131 = vpop.permute.xlu0 %130
    %133 = vst.msk [vmem:[#allocation2 + $0x2] sm:$0x3] %vm85, %v131
    %s134 = scalar_lea.vmem %s0, 12
    %v135 = vld [vmem:[%s134] sm:$0x3]
    %v138 = vunpack.c.l.s4 1983009808
    %v139 = vunpack.c.0.s8 %v138
    %v140 = vlaneseq
    %v141 = vshrl.u32 %v140, 7
    %v142 = vsub.s32 %v139, %v141
    %v143 = vrot.slane %v135, %v142
    %144 = vrot.lane.b32.xlu0 %v143, 64
    %v145 = vpop.permute.xlu0 %144
    %147 = vst.msk [vmem:[#allocation2 + $0x2] sm:$0x3] %vm100, %v145
    %s148 = scalar_lea.vmem %s0, 14
    %v149 = vld [vmem:[%s148] sm:$0x3]
    %v152 = vunpack.c.l.s4 1983009808
    %v153 = vunpack.c.0.s8 %v152
    %v154 = vlaneseq
    %v155 = vshrl.u32 %v154, 7
    %v156 = vsub.s32 %v153, %v155
    %v157 = vrot.slane %v149, %v156
    %158 = vrot.lane.b32.xlu0 %v157, 96
    %v159 = vpop.permute.xlu0 %158
    %161 = vst.msk [vmem:[#allocation2 + $0x2] sm:$0x3] %vm115, %v159
    %s162 = scalar_lea.vmem %s0, 16
    %v163 = vld [vmem:[%s162] sm:$0x3]
    %164 = vst.msk [vmem:[#allocation2 + $0x4] sm:$0x3] %vm70, %v163
    %s165 = scalar_lea.vmem %s0, 18
    %v166 = vld [vmem:[%s165] sm:$0x3]
    %v169 = vunpack.c.l.s4 1983009808
    %v170 = vunpack.c.0.s8 %v169
    %v171 = vlaneseq
    %v172 = vshrl.u32 %v171, 7
    %v173 = vsub.s32 %v170, %v172
    %v174 = vrot.slane %v166, %v173
    %175 = vrot.lane.b32.xlu0 %v174, 32
    %v176 = vpop.permute.xlu0 %175
    %178 = vst.msk [vmem:[#allocation2 + $0x4] sm:$0x3] %vm85, %v176
    %s179 = scalar_lea.vmem %s0, 20
    %v180 = vld [vmem:[%s179] sm:$0x3]
    %v183 = vunpack.c.l.s4 1983009808
    %v184 = vunpack.c.0.s8 %v183
    %v185 = vlaneseq
    %v186 = vshrl.u32 %v185, 7
    %v187 = vsub.s32 %v184, %v186
    %v188 = vrot.slane %v180, %v187
    %189 = vrot.lane.b32.xlu0 %v188, 64
    %v190 = vpop.permute.xlu0 %189
    %192 = vst.msk [vmem:[#allocation2 + $0x4] sm:$0x3] %vm100, %v190
    %s193 = scalar_lea.vmem %s0, 22
    %v194 = vld [vmem:[%s193] sm:$0x3]
    %v197 = vunpack.c.l.s4 1983009808
    %v198 = vunpack.c.0.s8 %v197
    %v199 = vlaneseq
    %v200 = vshrl.u32 %v199, 7
    %v201 = vsub.s32 %v198, %v200
    %v202 = vrot.slane %v194, %v201
    %203 = vrot.lane.b32.xlu0 %v202, 96
    %v204 = vpop.permute.xlu0 %203
    %206 = vst.msk [vmem:[#allocation2 + $0x4] sm:$0x3] %vm115, %v204
    %v207 = vld [vmem:[#allocation2] sm:$0x3f]
    %v209 = vcombine.high %v207, %v207
    %v211 = vunpack.c.l.s4 1983009808
    %v212 = vunpack.c.0.s8 %v211
    %v213 = vlaneseq
    %v214 = vshrl.u32 %v213, 7
    %v215 = vsub.s32 %v212, %v214
    %v216 = vrot.slane %v207, %v215
    %v218 = vunpack.c.l.s4 1983009808
    %v219 = vunpack.c.0.s8 %v218
    %v220 = vlaneseq
    %v221 = vshrl.u32 %v220, 7
    %v222 = vsub.s32 %v219, %v221
    %v223 = vrot.slane %v209, %v222
    %v224 = vcombine.high %v216, %v216
    %v228 = vpack.c.bf16 %v216, %v216
    %v229 = vpack.c.bf16 %v224, %v224
    %v230 = vpack.c.bf16 %v223, %v223
    %v231 = vld [vmem:[#allocation8] sm:$0xff]
    %v232 = vld [vmem:[#allocation8 + $0x8] sm:$0xff]
    %v233 = vld [vmem:[#allocation8 + $0x10] sm:$0xff]
    %v234 = vld [vmem:[#allocation8 + $0x18] sm:$0xff]
    %v235 = vld [vmem:[#allocation8 + $0x20] sm:$0xf]
    %v236 = vld [vmem:[#allocation8 + $0x24] sm:$0xff]
    %v237 = vld [vmem:[#allocation8 + $0x2c] sm:$0xff]
    %v238 = vld [vmem:[#allocation8 + $0x34] sm:$0xff]
    %v239 = vld [vmem:[#allocation8 + $0x3c] sm:$0xff]
    %v240 = vld [vmem:[#allocation8 + $0x44] sm:$0xf]
    %v241 = vld [vmem:[#allocation8 + $0x48] sm:$0xff]
    %v242 = vld [vmem:[#allocation8 + $0x50] sm:$0xff]
    %v243 = vld [vmem:[#allocation8 + $0x58] sm:$0xff]
    %v244 = vld [vmem:[#allocation8 + $0x60] sm:$0xff]
    %v245 = vld [vmem:[#allocation8 + $0x68] sm:$0xf]
    %v246 = vld [vmem:[#allocation8 + $0x6c] sm:$0xff]
    %v247 = vld [vmem:[#allocation8 + $0x74] sm:$0xff]
    %v248 = vld [vmem:[#allocation8 + $0x7c] sm:$0xff]
    %v249 = vld [vmem:[#allocation8 + $0x84] sm:$0xff]
    %v250 = vld [vmem:[#allocation8 + $0x8c] sm:$0xf]
    %v251 = vld [vmem:[#allocation8 + $0x90] sm:$0xff]
    %v252 = vld [vmem:[#allocation8 + $0x98] sm:$0xff]
    %v253 = vld [vmem:[#allocation8 + $0xa0] sm:$0xff]
    %v254 = vld [vmem:[#allocation8 + $0xa8] sm:$0xff]
    %v255 = vld [vmem:[#allocation8 + $0xb0] sm:$0xf]
    %v256 = vld [vmem:[#allocation8 + $0xb4] sm:$0xff]
    %v257 = vld [vmem:[#allocation8 + $0xbc] sm:$0xff]
    %v258 = vld [vmem:[#allocation8 + $0xc4] sm:$0xff]
    %v259 = vld [vmem:[#allocation8 + $0xcc] sm:$0xff]
    %v260 = vld [vmem:[#allocation8 + $0xd4] sm:$0xf]
    %v261 = vld [vmem:[#allocation8 + $0xd8] sm:$0xff]
    %v262 = vld [vmem:[#allocation8 + $0xe0] sm:$0xff]
    %v263 = vld [vmem:[#allocation8 + $0xe8] sm:$0xff]
    %v264 = vld [vmem:[#allocation8 + $0xf0] sm:$0xff]
    %v265 = vld [vmem:[#allocation8 + $0xf8] sm:$0xf]
    %v266 = vld [vmem:[#allocation8 + $0xfc] sm:$0xff]
    %v267 = vld [vmem:[#allocation8 + $0x104] sm:$0xff]
    %v268 = vld [vmem:[#allocation8 + $0x10c] sm:$0xff]
    %v269 = vld [vmem:[#allocation8 + $0x114] sm:$0xff]
    %v270 = vld [vmem:[#allocation8 + $0x11c] sm:$0xf]
    %v271 = vld [vmem:[#allocation8 + $0x120] sm:$0xff]
    %v272 = vld [vmem:[#allocation8 + $0x128] sm:$0xff]
    %v273 = vld [vmem:[#allocation8 + $0x130] sm:$0xff]
    %v274 = vld [vmem:[#allocation8 + $0x138] sm:$0xff]
    %v275 = vld [vmem:[#allocation8 + $0x140] sm:$0xf]
    %v276 = vld [vmem:[#allocation8 + $0x144] sm:$0xff]
    %v277 = vld [vmem:[#allocation8 + $0x14c] sm:$0xff]
    %v278 = vld [vmem:[#allocation8 + $0x154] sm:$0xff]
    %v279 = vld [vmem:[#allocation8 + $0x15c] sm:$0xff]
    %v280 = vld [vmem:[#allocation8 + $0x164] sm:$0xf]
    %v281 = vld [vmem:[#allocation8 + $0x168] sm:$0xff]
    %v282 = vld [vmem:[#allocation8 + $0x170] sm:$0xff]
    %v283 = vld [vmem:[#allocation8 + $0x178] sm:$0xff]
    %v284 = vld [vmem:[#allocation8 + $0x180] sm:$0xff]
    %v285 = vld [vmem:[#allocation8 + $0x188] sm:$0xf]
    %v286 = vld [vmem:[#allocation8 + $0x18c] sm:$0xff]
    %v287 = vld [vmem:[#allocation8 + $0x194] sm:$0xff]
    %v288 = vld [vmem:[#allocation8 + $0x19c] sm:$0xff]
    %v289 = vld [vmem:[#allocation8 + $0x1a4] sm:$0xff]
    %v290 = vld [vmem:[#allocation8 + $0x1ac] sm:$0xf]
    %v291 = vld [vmem:[#allocation8 + $0x1b0] sm:$0xff]
    %v292 = vld [vmem:[#allocation8 + $0x1b8] sm:$0xff]
    %v293 = vld [vmem:[#allocation8 + $0x1c0] sm:$0xff]
    %v294 = vld [vmem:[#allocation8 + $0x1c8] sm:$0xff]
    %v295 = vld [vmem:[#allocation8 + $0x1d0] sm:$0xf]
    %v296 = vld [vmem:[#allocation8 + $0x1d4] sm:$0xff]
    %v297 = vld [vmem:[#allocation8 + $0x1dc] sm:$0xff]
    %v298 = vld [vmem:[#allocation8 + $0x1e4] sm:$0xff]
    %v299 = vld [vmem:[#allocation8 + $0x1ec] sm:$0xff]
    %v300 = vld [vmem:[#allocation8 + $0x1f4] sm:$0xf]
    %v301 = vld [vmem:[#allocation8 + $0x1f8] sm:$0xff]
    %v302 = vld [vmem:[#allocation8 + $0x200] sm:$0xff]
    %v303 = vld [vmem:[#allocation8 + $0x208] sm:$0xff]
    %v304 = vld [vmem:[#allocation8 + $0x210] sm:$0xff]
    %v305 = vld [vmem:[#allocation8 + $0x218] sm:$0xf]
    %v306 = vld [vmem:[#allocation8 + $0x21c] sm:$0xff]
    %v307 = vld [vmem:[#allocation8 + $0x224] sm:$0xff]
    %v308 = vld [vmem:[#allocation8 + $0x22c] sm:$0xff]
    %v309 = vld [vmem:[#allocation8 + $0x234] sm:$0xff]
    %v310 = vld [vmem:[#allocation8 + $0x23c] sm:$0xf]
    %v311 = vld [vmem:[#allocation8 + $0x240] sm:$0xff]
    %v312 = vld [vmem:[#allocation8 + $0x248] sm:$0xff]
    %v313 = vld [vmem:[#allocation8 + $0x250] sm:$0xff]
    %v314 = vld [vmem:[#allocation8 + $0x258] sm:$0xff]
    %v315 = vld [vmem:[#allocation8 + $0x260] sm:$0xf]
    %v316 = vld [vmem:[#allocation8 + $0x264] sm:$0xff]
    %v317 = vld [vmem:[#allocation8 + $0x26c] sm:$0xff]
    %v318 = vld [vmem:[#allocation8 + $0x274] sm:$0xff]
    %v319 = vld [vmem:[#allocation8 + $0x27c] sm:$0xff]
    %v320 = vld [vmem:[#allocation8 + $0x284] sm:$0xf]
    %v321 = vld [vmem:[#allocation8 + $0x288] sm:$0xff]
    %v322 = vld [vmem:[#allocation8 + $0x290] sm:$0xff]
    %v323 = vld [vmem:[#allocation8 + $0x298] sm:$0xff]
    %v324 = vld [vmem:[#allocation8 + $0x2a0] sm:$0xff]
    %v325 = vld [vmem:[#allocation8 + $0x2a8] sm:$0xf]
    %v326 = vld [vmem:[#allocation8 + $0x2ac] sm:$0xff]
    %v327 = vld [vmem:[#allocation8 + $0x2b4] sm:$0xff]
    %v328 = vld [vmem:[#allocation8 + $0x2bc] sm:$0xff]
    %v329 = vld [vmem:[#allocation8 + $0x2c4] sm:$0xff]
    %v330 = vld [vmem:[#allocation8 + $0x2cc] sm:$0xf]
    %v331 = vld [vmem:[#allocation8 + $0x2d0] sm:$0xff]
    %v332 = vld [vmem:[#allocation8 + $0x2d8] sm:$0xff]
    %v333 = vld [vmem:[#allocation8 + $0x2e0] sm:$0xff]
    %v334 = vld [vmem:[#allocation8 + $0x2e8] sm:$0xff]
    %v335 = vld [vmem:[#allocation8 + $0x2f0] sm:$0xf]
    %v336 = vld [vmem:[#allocation8 + $0x2f4] sm:$0xff]
    %v337 = vld [vmem:[#allocation8 + $0x2fc] sm:$0xff]
    %v338 = vld [vmem:[#allocation8 + $0x304] sm:$0xff]
    %v339 = vld [vmem:[#allocation8 + $0x30c] sm:$0xff]
    %v340 = vld [vmem:[#allocation8 + $0x314] sm:$0xf]
    %v341 = vld [vmem:[#allocation8 + $0x318] sm:$0xff]
    %v342 = vld [vmem:[#allocation8 + $0x320] sm:$0xff]
    %v343 = vld [vmem:[#allocation8 + $0x328] sm:$0xff]
    %v344 = vld [vmem:[#allocation8 + $0x330] sm:$0xff]
    %v345 = vld [vmem:[#allocation8 + $0x338] sm:$0xf]
    %v346 = vld [vmem:[#allocation8 + $0x33c] sm:$0xff]
    %v347 = vld [vmem:[#allocation8 + $0x344] sm:$0xff]
    %v348 = vld [vmem:[#allocation8 + $0x34c] sm:$0xff]
    %v349 = vld [vmem:[#allocation8 + $0x354] sm:$0xff]
    %v350 = vld [vmem:[#allocation8 + $0x35c] sm:$0xf]
    %v351 = vld [vmem:[#allocation8 + $0x360] sm:$0xff]
    %v352 = vld [vmem:[#allocation8 + $0x368] sm:$0xff]
    %v353 = vld [vmem:[#allocation8 + $0x370] sm:$0xff]
    %v354 = vld [vmem:[#allocation8 + $0x378] sm:$0xff]
    %v355 = vld [vmem:[#allocation8 + $0x380] sm:$0xf]
    %v356 = vld [vmem:[#allocation8 + $0x384] sm:$0xff]
    %v357 = vld [vmem:[#allocation8 + $0x38c] sm:$0xff]
    %v358 = vld [vmem:[#allocation8 + $0x394] sm:$0xff]
    %v359 = vld [vmem:[#allocation8 + $0x39c] sm:$0xff]
    %v360 = vld [vmem:[#allocation8 + $0x3a4] sm:$0xf]
    %v361 = vld [vmem:[#allocation8 + $0x3a8] sm:$0xff]
    %v362 = vld [vmem:[#allocation8 + $0x3b0] sm:$0xff]
    %v363 = vld [vmem:[#allocation8 + $0x3b8] sm:$0xff]
    %v364 = vld [vmem:[#allocation8 + $0x3c0] sm:$0xff]
    %v365 = vld [vmem:[#allocation8 + $0x3c8] sm:$0xf]
    %v366 = vld [vmem:[#allocation8 + $0x3cc] sm:$0xff]
    %v367 = vld [vmem:[#allocation8 + $0x3d4] sm:$0xff]
    %v368 = vld [vmem:[#allocation8 + $0x3dc] sm:$0xff]
    %v369 = vld [vmem:[#allocation8 + $0x3e4] sm:$0xff]
    %v370 = vld [vmem:[#allocation8 + $0x3ec] sm:$0xf]
    %v371 = vld [vmem:[#allocation8 + $0x3f0] sm:$0xff]
    %v372 = vld [vmem:[#allocation8 + $0x3f8] sm:$0xff]
    %v373 = vld [vmem:[#allocation8 + $0x400] sm:$0xff]
    %v374 = vld [vmem:[#allocation8 + $0x408] sm:$0xff]
    %v375 = vld [vmem:[#allocation8 + $0x410] sm:$0xf]
    %v376 = vld [vmem:[#allocation8 + $0x414] sm:$0xff]
    %v377 = vld [vmem:[#allocation8 + $0x41c] sm:$0xff]
    %v378 = vld [vmem:[#allocation8 + $0x424] sm:$0xff]
    %v379 = vld [vmem:[#allocation8 + $0x42c] sm:$0xff]
    %v380 = vld [vmem:[#allocation8 + $0x434] sm:$0xf]
    %v381 = vld [vmem:[#allocation8 + $0x438] sm:$0xff]
    %v382 = vld [vmem:[#allocation8 + $0x440] sm:$0xff]
    %v383 = vld [vmem:[#allocation8 + $0x448] sm:$0xff]
    %v384 = vld [vmem:[#allocation8 + $0x450] sm:$0xff]
    %v385 = vld [vmem:[#allocation8 + $0x458] sm:$0xf]
    %v386 = vld [vmem:[#allocation8 + $0x45c] sm:$0xff]
    %v387 = vld [vmem:[#allocation8 + $0x464] sm:$0xff]
    %v388 = vld [vmem:[#allocation8 + $0x46c] sm:$0xff]
    %v389 = vld [vmem:[#allocation8 + $0x474] sm:$0xff]
    %v390 = vld [vmem:[#allocation8 + $0x47c] sm:$0xf]
    %v391 = vld [vmem:[#allocation8 + $0x480] sm:$0xff]
    %v392 = vld [vmem:[#allocation8 + $0x488] sm:$0xff]
    %v393 = vld [vmem:[#allocation8 + $0x490] sm:$0xff]
    %v394 = vld [vmem:[#allocation8 + $0x498] sm:$0xff]
    %v395 = vld [vmem:[#allocation8 + $0x4a0] sm:$0xf]
    %v396 = vld [vmem:[#allocation8 + $0x4a4] sm:$0xff]
    %v397 = vld [vmem:[#allocation8 + $0x4ac] sm:$0xff]
    %v398 = vld [vmem:[#allocation8 + $0x4b4] sm:$0xff]
    %v399 = vld [vmem:[#allocation8 + $0x4bc] sm:$0xff]
    %v400 = vld [vmem:[#allocation8 + $0x4c4] sm:$0xf]
    %v401 = vld [vmem:[#allocation8 + $0x4c8] sm:$0xff]
    %v402 = vld [vmem:[#allocation8 + $0x4d0] sm:$0xff]
    %v403 = vld [vmem:[#allocation8 + $0x4d8] sm:$0xff]
    %v404 = vld [vmem:[#allocation8 + $0x4e0] sm:$0xff]
    %v405 = vld [vmem:[#allocation8 + $0x4e8] sm:$0xf]
    %v406 = vld [vmem:[#allocation8 + $0x4ec] sm:$0xff]
    %v407 = vld [vmem:[#allocation8 + $0x4f4] sm:$0xff]
    %v408 = vld [vmem:[#allocation8 + $0x4fc] sm:$0xff]
    %v409 = vld [vmem:[#allocation8 + $0x504] sm:$0xff]
    %v410 = vld [vmem:[#allocation8 + $0x50c] sm:$0xf]
    %v411 = vld [vmem:[#allocation8 + $0x510] sm:$0xff]
    %v412 = vld [vmem:[#allocation8 + $0x518] sm:$0xff]
    %v413 = vld [vmem:[#allocation8 + $0x520] sm:$0xff]
    %v414 = vld [vmem:[#allocation8 + $0x528] sm:$0xff]
    %v415 = vld [vmem:[#allocation8 + $0x530] sm:$0xf]
    %v416 = vld [vmem:[#allocation8 + $0x534] sm:$0xff]
    %v417 = vld [vmem:[#allocation8 + $0x53c] sm:$0xff]
    %v418 = vld [vmem:[#allocation8 + $0x544] sm:$0xff]
    %v419 = vld [vmem:[#allocation8 + $0x54c] sm:$0xff]
    %v420 = vld [vmem:[#allocation8 + $0x554] sm:$0xf]
    %v421 = vld [vmem:[#allocation8 + $0x558] sm:$0xff]
    %v422 = vld [vmem:[#allocation8 + $0x560] sm:$0xff]
    %v423 = vld [vmem:[#allocation8 + $0x568] sm:$0xff]
    %v424 = vld [vmem:[#allocation8 + $0x570] sm:$0xff]
    %v425 = vld [vmem:[#allocation8 + $0x578] sm:$0xf]
    %v426 = vld [vmem:[#allocation8 + $0x57c] sm:$0xff]
    %v427 = vld [vmem:[#allocation8 + $0x584] sm:$0xff]
    %v428 = vld [vmem:[#allocation8 + $0x58c] sm:$0xff]
    %v429 = vld [vmem:[#allocation8 + $0x594] sm:$0xff]
    %v430 = vld [vmem:[#allocation8 + $0x59c] sm:$0xf]
    %v431 = vld [vmem:[#allocation8 + $0x5a0] sm:$0xff]
    %v432 = vld [vmem:[#allocation8 + $0x5a8] sm:$0xff]
    %v433 = vld [vmem:[#allocation8 + $0x5b0] sm:$0xff]
    %v434 = vld [vmem:[#allocation8 + $0x5b8] sm:$0xff]
    %v435 = vld [vmem:[#allocation8 + $0x5c0] sm:$0xf]
    %v436 = vld [vmem:[#allocation8 + $0x5c4] sm:$0xff]
    %v437 = vld [vmem:[#allocation8 + $0x5cc] sm:$0xff]
    %v438 = vld [vmem:[#allocation8 + $0x5d4] sm:$0xff]
    %v439 = vld [vmem:[#allocation8 + $0x5dc] sm:$0xff]
    %v440 = vld [vmem:[#allocation8 + $0x5e4] sm:$0xf]
    %v441 = vld [vmem:[#allocation8 + $0x5e8] sm:$0xff]
    %v442 = vld [vmem:[#allocation8 + $0x5f0] sm:$0xff]
    %v443 = vld [vmem:[#allocation8 + $0x5f8] sm:$0xff]
    %v444 = vld [vmem:[#allocation8 + $0x600] sm:$0xff]
    %v445 = vld [vmem:[#allocation8 + $0x608] sm:$0xf]
    %v446 = vld [vmem:[#allocation8 + $0x60c] sm:$0xff]
    %v447 = vld [vmem:[#allocation8 + $0x614] sm:$0xff]
    %v448 = vld [vmem:[#allocation8 + $0x61c] sm:$0xff]
    %v449 = vld [vmem:[#allocation8 + $0x624] sm:$0xff]
    %v450 = vld [vmem:[#allocation8 + $0x62c] sm:$0xf]
    %v451 = vld [vmem:[#allocation8 + $0x630] sm:$0xff]
    %v452 = vld [vmem:[#allocation8 + $0x638] sm:$0xff]
    %v453 = vld [vmem:[#allocation8 + $0x640] sm:$0xff]
    %v454 = vld [vmem:[#allocation8 + $0x648] sm:$0xff]
    %v455 = vld [vmem:[#allocation8 + $0x650] sm:$0xf]
    %v456 = vld [vmem:[#allocation8 + $0x654] sm:$0xff]
    %v457 = vld [vmem:[#allocation8 + $0x65c] sm:$0xff]
    %v458 = vld [vmem:[#allocation8 + $0x664] sm:$0xff]
    %v459 = vld [vmem:[#allocation8 + $0x66c] sm:$0xff]
    %v460 = vld [vmem:[#allocation8 + $0x674] sm:$0xf]
    %v461 = vld [vmem:[#allocation8 + $0x678] sm:$0xff]
    %v462 = vld [vmem:[#allocation8 + $0x680] sm:$0xff]
    %v463 = vld [vmem:[#allocation8 + $0x688] sm:$0xff]
    %v464 = vld [vmem:[#allocation8 + $0x690] sm:$0xff]
    %v465 = vld [vmem:[#allocation8 + $0x698] sm:$0xf]
    %v466 = vld [vmem:[#allocation8 + $0x69c] sm:$0xff]
    %v467 = vld [vmem:[#allocation8 + $0x6a4] sm:$0xff]
    %v468 = vld [vmem:[#allocation8 + $0x6ac] sm:$0xff]
    %v469 = vld [vmem:[#allocation8 + $0x6b4] sm:$0xff]
    %v470 = vld [vmem:[#allocation8 + $0x6bc] sm:$0xf]
    %v471 = vld [vmem:[%s2] sm:$0xff]
    %v472 = vld [vmem:[%s2 + $0x8] sm:$0x1]
    %v475 = vlaneseq
    %v476 = vshrl.u32 %v475, 7
    %v477 = vsub.s32 0, %v476
    %v478 = vrot.slane %v471, %v477
    %v479 = vlaneseq
    %v480 = vshrl.u32 %v479, 7
    %v481 = vsub.s32 1, %v480
    %v482 = vrot.slane %v471, %v481
    %v483 = vlaneseq
    %v484 = vshrl.u32 %v483, 7
    %v485 = vsub.s32 2, %v484
    %v486 = vrot.slane %v471, %v485
    %v487 = vlaneseq
    %v488 = vshrl.u32 %v487, 7
    %v489 = vsub.s32 3, %v488
    %v490 = vrot.slane %v471, %v489
    %v491 = vlaneseq
    %v492 = vshrl.u32 %v491, 7
    %v493 = vsub.s32 4, %v492
    %v494 = vrot.slane %v471, %v493
    %v495 = vlaneseq
    %v496 = vshrl.u32 %v495, 7
    %v497 = vsub.s32 5, %v496
    %v498 = vrot.slane %v471, %v497
    %v499 = vlaneseq
    %v500 = vshrl.u32 %v499, 7
    %v501 = vsub.s32 6, %v500
    %v502 = vrot.slane %v471, %v501
    %v503 = vlaneseq
    %v504 = vshrl.u32 %v503, 7
    %v505 = vsub.s32 7, %v504
    %v506 = vrot.slane %v471, %v505
    %v507 = vlaneseq
    %v508 = vshrl.u32 %v507, 7
    %v509 = vsub.s32 0, %v508
    %v510 = vrot.slane %v472, %v509
    %v760 = vunpack.c.l.b16 %v231
    %v761 = vunpack.c.h.b16 %v231
    %v762 = vunpack.c.l.b16 %v232
    %v763 = vunpack.c.h.b16 %v232
    %v764 = vunpack.c.l.b16 %v233
    %v765 = vunpack.c.h.b16 %v233
    %v766 = vunpack.c.l.b16 %v234
    %v767 = vunpack.c.h.b16 %v234
    %v768 = vunpack.c.l.b16 %v235
    %v769 = vunpack.c.l.b16 %v236
    %v770 = vunpack.c.h.b16 %v236
    %v771 = vunpack.c.l.b16 %v237
    %v772 = vunpack.c.h.b16 %v237
    %v773 = vunpack.c.l.b16 %v238
    %v774 = vunpack.c.h.b16 %v238
    %v775 = vunpack.c.l.b16 %v239
    %v776 = vunpack.c.h.b16 %v239
    %v777 = vunpack.c.l.b16 %v240
    %v778 = vunpack.c.l.b16 %v241
    %v779 = vunpack.c.h.b16 %v241
    %v780 = vunpack.c.l.b16 %v242
    %v781 = vunpack.c.h.b16 %v242
    %v782 = vunpack.c.l.b16 %v243
    %v783 = vunpack.c.h.b16 %v243
    %v784 = vunpack.c.l.b16 %v244
    %v785 = vunpack.c.h.b16 %v244
    %v786 = vunpack.c.l.b16 %v245
    %v787 = vunpack.c.l.b16 %v246
    %v788 = vunpack.c.h.b16 %v246
    %v789 = vunpack.c.l.b16 %v247
    %v790 = vunpack.c.h.b16 %v247
    %v791 = vunpack.c.l.b16 %v248
    %v792 = vunpack.c.h.b16 %v248
    %v793 = vunpack.c.l.b16 %v249
    %v794 = vunpack.c.h.b16 %v249
    %v795 = vunpack.c.l.b16 %v250
    %v796 = vunpack.c.l.b16 %v251
    %v797 = vunpack.c.h.b16 %v251
    %v798 = vunpack.c.l.b16 %v252
    %v799 = vunpack.c.h.b16 %v252
    %v800 = vunpack.c.l.b16 %v253
    %v801 = vunpack.c.h.b16 %v253
    %v802 = vunpack.c.l.b16 %v254
    %v803 = vunpack.c.h.b16 %v254
    %v804 = vunpack.c.l.b16 %v255
    %v805 = vunpack.c.l.b16 %v256
    %v806 = vunpack.c.h.b16 %v256
    %v807 = vunpack.c.l.b16 %v257
    %v808 = vunpack.c.h.b16 %v257
    %v809 = vunpack.c.l.b16 %v258
    %v810 = vunpack.c.h.b16 %v258
    %v811 = vunpack.c.l.b16 %v259
    %v812 = vunpack.c.h.b16 %v259
    %v813 = vunpack.c.l.b16 %v260
    %v814 = vunpack.c.l.b16 %v261
    %v815 = vunpack.c.h.b16 %v261
    %v816 = vunpack.c.l.b16 %v262
    %v817 = vunpack.c.h.b16 %v262
    %v818 = vunpack.c.l.b16 %v263
    %v819 = vunpack.c.h.b16 %v263
    %v820 = vunpack.c.l.b16 %v264
    %v821 = vunpack.c.h.b16 %v264
    %v822 = vunpack.c.l.b16 %v265
    %v823 = vunpack.c.l.b16 %v266
    %v824 = vunpack.c.h.b16 %v266
    %v825 = vunpack.c.l.b16 %v267
    %v826 = vunpack.c.h.b16 %v267
    %v827 = vunpack.c.l.b16 %v268
    %v828 = vunpack.c.h.b16 %v268
    %v829 = vunpack.c.l.b16 %v269
    %v830 = vunpack.c.h.b16 %v269
    %v831 = vunpack.c.l.b16 %v270
    %v832 = vunpack.c.l.b16 %v271
    %v833 = vunpack.c.h.b16 %v271
    %v834 = vunpack.c.l.b16 %v272
    %v835 = vunpack.c.h.b16 %v272
    %v836 = vunpack.c.l.b16 %v273
    %v837 = vunpack.c.h.b16 %v273
    %v838 = vunpack.c.l.b16 %v274
    %v839 = vunpack.c.h.b16 %v274
    %v840 = vunpack.c.l.b16 %v275
    %v841 = vunpack.c.l.b16 %v276
    %v842 = vunpack.c.h.b16 %v276
    %v843 = vunpack.c.l.b16 %v277
    %v844 = vunpack.c.h.b16 %v277
    %v845 = vunpack.c.l.b16 %v278
    %v846 = vunpack.c.h.b16 %v278
    %v847 = vunpack.c.l.b16 %v279
    %v848 = vunpack.c.h.b16 %v279
    %v849 = vunpack.c.l.b16 %v280
    %v850 = vunpack.c.l.b16 %v281
    %v851 = vunpack.c.h.b16 %v281
    %v852 = vunpack.c.l.b16 %v282
    %v853 = vunpack.c.h.b16 %v282
    %v854 = vunpack.c.l.b16 %v283
    %v855 = vunpack.c.h.b16 %v283
    %v856 = vunpack.c.l.b16 %v284
    %v857 = vunpack.c.h.b16 %v284
    %v858 = vunpack.c.l.b16 %v285
    %v859 = vunpack.c.l.b16 %v286
    %v860 = vunpack.c.h.b16 %v286
    %v861 = vunpack.c.l.b16 %v287
    %v862 = vunpack.c.h.b16 %v287
    %v863 = vunpack.c.l.b16 %v288
    %v864 = vunpack.c.h.b16 %v288
    %v865 = vunpack.c.l.b16 %v289
    %v866 = vunpack.c.h.b16 %v289
    %v867 = vunpack.c.l.b16 %v290
    %v868 = vunpack.c.l.b16 %v291
    %v869 = vunpack.c.h.b16 %v291
    %v870 = vunpack.c.l.b16 %v292
    %v871 = vunpack.c.h.b16 %v292
    %v872 = vunpack.c.l.b16 %v293
    %v873 = vunpack.c.h.b16 %v293
    %v874 = vunpack.c.l.b16 %v294
    %v875 = vunpack.c.h.b16 %v294
    %v876 = vunpack.c.l.b16 %v295
    %v877 = vunpack.c.l.b16 %v296
    %v878 = vunpack.c.h.b16 %v296
    %v879 = vunpack.c.l.b16 %v297
    %v880 = vunpack.c.h.b16 %v297
    %v881 = vunpack.c.l.b16 %v298
    %v882 = vunpack.c.h.b16 %v298
    %v883 = vunpack.c.l.b16 %v299
    %v884 = vunpack.c.h.b16 %v299
    %v885 = vunpack.c.l.b16 %v300
    %v886 = vunpack.c.l.b16 %v301
    %v887 = vunpack.c.h.b16 %v301
    %v888 = vunpack.c.l.b16 %v302
    %v889 = vunpack.c.h.b16 %v302
    %v890 = vunpack.c.l.b16 %v303
    %v891 = vunpack.c.h.b16 %v303
    %v892 = vunpack.c.l.b16 %v304
    %v893 = vunpack.c.h.b16 %v304
    %v894 = vunpack.c.l.b16 %v305
    %v895 = vunpack.c.l.b16 %v306
    %v896 = vunpack.c.h.b16 %v306
    %v897 = vunpack.c.l.b16 %v307
    %v898 = vunpack.c.h.b16 %v307
    %v899 = vunpack.c.l.b16 %v308
    %v900 = vunpack.c.h.b16 %v308
    %v901 = vunpack.c.l.b16 %v309
    %v902 = vunpack.c.h.b16 %v309
    %v903 = vunpack.c.l.b16 %v310
    %v904 = vunpack.c.l.b16 %v311
    %v905 = vunpack.c.h.b16 %v311
    %v906 = vunpack.c.l.b16 %v312
    %v907 = vunpack.c.h.b16 %v312
    %v908 = vunpack.c.l.b16 %v313
    %v909 = vunpack.c.h.b16 %v313
    %v910 = vunpack.c.l.b16 %v314
    %v911 = vunpack.c.h.b16 %v314
    %v912 = vunpack.c.l.b16 %v315
    %v913 = vunpack.c.l.b16 %v316
    %v914 = vunpack.c.h.b16 %v316
    %v915 = vunpack.c.l.b16 %v317
    %v916 = vunpack.c.h.b16 %v317
    %v917 = vunpack.c.l.b16 %v318
    %v918 = vunpack.c.h.b16 %v318
    %v919 = vunpack.c.l.b16 %v319
    %v920 = vunpack.c.h.b16 %v319
    %v921 = vunpack.c.l.b16 %v320
    %v922 = vunpack.c.l.b16 %v321
    %v923 = vunpack.c.h.b16 %v321
    %v924 = vunpack.c.l.b16 %v322
    %v925 = vunpack.c.h.b16 %v322
    %v926 = vunpack.c.l.b16 %v323
    %v927 = vunpack.c.h.b16 %v323
    %v928 = vunpack.c.l.b16 %v324
    %v929 = vunpack.c.h.b16 %v324
    %v930 = vunpack.c.l.b16 %v325
    %v931 = vunpack.c.l.b16 %v326
    %v932 = vunpack.c.h.b16 %v326
    %v933 = vunpack.c.l.b16 %v327
    %v934 = vunpack.c.h.b16 %v327
    %v935 = vunpack.c.l.b16 %v328
    %v936 = vunpack.c.h.b16 %v328
    %v937 = vunpack.c.l.b16 %v329
    %v938 = vunpack.c.h.b16 %v329
    %v939 = vunpack.c.l.b16 %v330
    %v940 = vunpack.c.l.b16 %v331
    %v941 = vunpack.c.h.b16 %v331
    %v942 = vunpack.c.l.b16 %v332
    %v943 = vunpack.c.h.b16 %v332
    %v944 = vunpack.c.l.b16 %v333
    %v945 = vunpack.c.h.b16 %v333
    %v946 = vunpack.c.l.b16 %v334
    %v947 = vunpack.c.h.b16 %v334
    %v948 = vunpack.c.l.b16 %v335
    %v949 = vunpack.c.l.b16 %v336
    %v950 = vunpack.c.h.b16 %v336
    %v951 = vunpack.c.l.b16 %v337
    %v952 = vunpack.c.h.b16 %v337
    %v953 = vunpack.c.l.b16 %v338
    %v954 = vunpack.c.h.b16 %v338
    %v955 = vunpack.c.l.b16 %v339
    %v956 = vunpack.c.h.b16 %v339
    %v957 = vunpack.c.l.b16 %v340
    %v958 = vunpack.c.l.b16 %v341
    %v959 = vunpack.c.h.b16 %v341
    %v960 = vunpack.c.l.b16 %v342
    %v961 = vunpack.c.h.b16 %v342
    %v962 = vunpack.c.l.b16 %v343
    %v963 = vunpack.c.h.b16 %v343
    %v964 = vunpack.c.l.b16 %v344
    %v965 = vunpack.c.h.b16 %v344
    %v966 = vunpack.c.l.b16 %v345
    %v967 = vunpack.c.l.b16 %v346
    %v968 = vunpack.c.h.b16 %v346
    %v969 = vunpack.c.l.b16 %v347
    %v970 = vunpack.c.h.b16 %v347
    %v971 = vunpack.c.l.b16 %v348
    %v972 = vunpack.c.h.b16 %v348
    %v973 = vunpack.c.l.b16 %v349
    %v974 = vunpack.c.h.b16 %v349
    %v975 = vunpack.c.l.b16 %v350
    %v976 = vunpack.c.l.b16 %v351
    %v977 = vunpack.c.h.b16 %v351
    %v978 = vunpack.c.l.b16 %v352
    %v979 = vunpack.c.h.b16 %v352
    %v980 = vunpack.c.l.b16 %v353
    %v981 = vunpack.c.h.b16 %v353
    %v982 = vunpack.c.l.b16 %v354
    %v983 = vunpack.c.h.b16 %v354
    %v984 = vunpack.c.l.b16 %v355
    %v985 = vunpack.c.l.b16 %v356
    %v986 = vunpack.c.h.b16 %v356
    %v987 = vunpack.c.l.b16 %v357
    %v988 = vunpack.c.h.b16 %v357
    %v989 = vunpack.c.l.b16 %v358
    %v990 = vunpack.c.h.b16 %v358
    %v991 = vunpack.c.l.b16 %v359
    %v992 = vunpack.c.h.b16 %v359
    %v993 = vunpack.c.l.b16 %v360
    %v994 = vunpack.c.l.b16 %v361
    %v995 = vunpack.c.h.b16 %v361
    %v996 = vunpack.c.l.b16 %v362
    %v997 = vunpack.c.h.b16 %v362
    %v998 = vunpack.c.l.b16 %v363
    %v999 = vunpack.c.h.b16 %v363
    %v1000 = vunpack.c.l.b16 %v364
    %v1001 = vunpack.c.h.b16 %v364
    %v1002 = vunpack.c.l.b16 %v365
    %v1003 = vunpack.c.l.b16 %v366
    %v1004 = vunpack.c.h.b16 %v366
    %v1005 = vunpack.c.l.b16 %v367
    %v1006 = vunpack.c.h.b16 %v367
    %v1007 = vunpack.c.l.b16 %v368
    %v1008 = vunpack.c.h.b16 %v368
    %v1009 = vunpack.c.l.b16 %v369
    %v1010 = vunpack.c.h.b16 %v369
    %v1011 = vunpack.c.l.b16 %v370
    %v1012 = vunpack.c.l.b16 %v371
    %v1013 = vunpack.c.h.b16 %v371
    %v1014 = vunpack.c.l.b16 %v372
    %v1015 = vunpack.c.h.b16 %v372
    %v1016 = vunpack.c.l.b16 %v373
    %v1017 = vunpack.c.h.b16 %v373
    %v1018 = vunpack.c.l.b16 %v374
    %v1019 = vunpack.c.h.b16 %v374
    %v1020 = vunpack.c.l.b16 %v375
    %v1021 = vunpack.c.l.b16 %v376
    %v1022 = vunpack.c.h.b16 %v376
    %v1023 = vunpack.c.l.b16 %v377
    %v1024 = vunpack.c.h.b16 %v377
    %v1025 = vunpack.c.l.b16 %v378
    %v1026 = vunpack.c.h.b16 %v378
    %v1027 = vunpack.c.l.b16 %v379
    %v1028 = vunpack.c.h.b16 %v379
    %v1029 = vunpack.c.l.b16 %v380
    %v1030 = vunpack.c.l.b16 %v381
    %v1031 = vunpack.c.h.b16 %v381
    %v1032 = vunpack.c.l.b16 %v382
    %v1033 = vunpack.c.h.b16 %v382
    %v1034 = vunpack.c.l.b16 %v383
    %v1035 = vunpack.c.h.b16 %v383
    %v1036 = vunpack.c.l.b16 %v384
    %v1037 = vunpack.c.h.b16 %v384
    %v1038 = vunpack.c.l.b16 %v385
    %v1039 = vunpack.c.l.b16 %v386
    %v1040 = vunpack.c.h.b16 %v386
    %v1041 = vunpack.c.l.b16 %v387
    %v1042 = vunpack.c.h.b16 %v387
    %v1043 = vunpack.c.l.b16 %v388
    %v1044 = vunpack.c.h.b16 %v388
    %v1045 = vunpack.c.l.b16 %v389
    %v1046 = vunpack.c.h.b16 %v389
    %v1047 = vunpack.c.l.b16 %v390
    %v1048 = vunpack.c.l.b16 %v391
    %v1049 = vunpack.c.h.b16 %v391
    %v1050 = vunpack.c.l.b16 %v392
    %v1051 = vunpack.c.h.b16 %v392
    %v1052 = vunpack.c.l.b16 %v393
    %v1053 = vunpack.c.h.b16 %v393
    %v1054 = vunpack.c.l.b16 %v394
    %v1055 = vunpack.c.h.b16 %v394
    %v1056 = vunpack.c.l.b16 %v395
    %v1057 = vunpack.c.l.b16 %v396
    %v1058 = vunpack.c.h.b16 %v396
    %v1059 = vunpack.c.l.b16 %v397
    %v1060 = vunpack.c.h.b16 %v397
    %v1061 = vunpack.c.l.b16 %v398
    %v1062 = vunpack.c.h.b16 %v398
    %v1063 = vunpack.c.l.b16 %v399
    %v1064 = vunpack.c.h.b16 %v399
    %v1065 = vunpack.c.l.b16 %v400
    %v1066 = vunpack.c.l.b16 %v401
    %v1067 = vunpack.c.h.b16 %v401
    %v1068 = vunpack.c.l.b16 %v402
    %v1069 = vunpack.c.h.b16 %v402
    %v1070 = vunpack.c.l.b16 %v403
    %v1071 = vunpack.c.h.b16 %v403
    %v1072 = vunpack.c.l.b16 %v404
    %v1073 = vunpack.c.h.b16 %v404
    %v1074 = vunpack.c.l.b16 %v405
    %v1075 = vunpack.c.l.b16 %v406
    %v1076 = vunpack.c.h.b16 %v406
    %v1077 = vunpack.c.l.b16 %v407
    %v1078 = vunpack.c.h.b16 %v407
    %v1079 = vunpack.c.l.b16 %v408
    %v1080 = vunpack.c.h.b16 %v408
    %v1081 = vunpack.c.l.b16 %v409
    %v1082 = vunpack.c.h.b16 %v409
    %v1083 = vunpack.c.l.b16 %v410
    %v1084 = vunpack.c.l.b16 %v411
    %v1085 = vunpack.c.h.b16 %v411
    %v1086 = vunpack.c.l.b16 %v412
    %v1087 = vunpack.c.h.b16 %v412
    %v1088 = vunpack.c.l.b16 %v413
    %v1089 = vunpack.c.h.b16 %v413
    %v1090 = vunpack.c.l.b16 %v414
    %v1091 = vunpack.c.h.b16 %v414
    %v1092 = vunpack.c.l.b16 %v415
    %v1093 = vunpack.c.l.b16 %v416
    %v1094 = vunpack.c.h.b16 %v416
    %v1095 = vunpack.c.l.b16 %v417
    %v1096 = vunpack.c.h.b16 %v417
    %v1097 = vunpack.c.l.b16 %v418
    %v1098 = vunpack.c.h.b16 %v418
    %v1099 = vunpack.c.l.b16 %v419
    %v1100 = vunpack.c.h.b16 %v419
    %v1101 = vunpack.c.l.b16 %v420
    %v1102 = vunpack.c.l.b16 %v421
    %v1103 = vunpack.c.h.b16 %v421
    %v1104 = vunpack.c.l.b16 %v422
    %v1105 = vunpack.c.h.b16 %v422
    %v1106 = vunpack.c.l.b16 %v423
    %v1107 = vunpack.c.h.b16 %v423
    %v1108 = vunpack.c.l.b16 %v424
    %v1109 = vunpack.c.h.b16 %v424
    %v1110 = vunpack.c.l.b16 %v425
    %v1111 = vunpack.c.l.b16 %v426
    %v1112 = vunpack.c.h.b16 %v426
    %v1113 = vunpack.c.l.b16 %v427
    %v1114 = vunpack.c.h.b16 %v427
    %v1115 = vunpack.c.l.b16 %v428
    %v1116 = vunpack.c.h.b16 %v428
    %v1117 = vunpack.c.l.b16 %v429
    %v1118 = vunpack.c.h.b16 %v429
    %v1119 = vunpack.c.l.b16 %v430
    %v1120 = vunpack.c.l.b16 %v431
    %v1121 = vunpack.c.h.b16 %v431
    %v1122 = vunpack.c.l.b16 %v432
    %v1123 = vunpack.c.h.b16 %v432
    %v1124 = vunpack.c.l.b16 %v433
    %v1125 = vunpack.c.h.b16 %v433
    %v1126 = vunpack.c.l.b16 %v434
    %v1127 = vunpack.c.h.b16 %v434
    %v1128 = vunpack.c.l.b16 %v435
    %v1129 = vunpack.c.l.b16 %v436
    %v1130 = vunpack.c.h.b16 %v436
    %v1131 = vunpack.c.l.b16 %v437
    %v1132 = vunpack.c.h.b16 %v437
    %v1133 = vunpack.c.l.b16 %v438
    %v1134 = vunpack.c.h.b16 %v438
    %v1135 = vunpack.c.l.b16 %v439
    %v1136 = vunpack.c.h.b16 %v439
    %v1137 = vunpack.c.l.b16 %v440
    %v1138 = vunpack.c.l.b16 %v441
    %v1139 = vunpack.c.h.b16 %v441
    %v1140 = vunpack.c.l.b16 %v442
    %v1141 = vunpack.c.h.b16 %v442
    %v1142 = vunpack.c.l.b16 %v443
    %v1143 = vunpack.c.h.b16 %v443
    %v1144 = vunpack.c.l.b16 %v444
    %v1145 = vunpack.c.h.b16 %v444
    %v1146 = vunpack.c.l.b16 %v445
    %v1147 = vunpack.c.l.b16 %v446
    %v1148 = vunpack.c.h.b16 %v446
    %v1149 = vunpack.c.l.b16 %v447
    %v1150 = vunpack.c.h.b16 %v447
    %v1151 = vunpack.c.l.b16 %v448
    %v1152 = vunpack.c.h.b16 %v448
    %v1153 = vunpack.c.l.b16 %v449
    %v1154 = vunpack.c.h.b16 %v449
    %v1155 = vunpack.c.l.b16 %v450
    %v1156 = vunpack.c.l.b16 %v451
    %v1157 = vunpack.c.h.b16 %v451
    %v1158 = vunpack.c.l.b16 %v452
    %v1159 = vunpack.c.h.b16 %v452
    %v1160 = vunpack.c.l.b16 %v453
    %v1161 = vunpack.c.h.b16 %v453
    %v1162 = vunpack.c.l.b16 %v454
    %v1163 = vunpack.c.h.b16 %v454
    %v1164 = vunpack.c.l.b16 %v455
    %v1165 = vunpack.c.l.b16 %v456
    %v1166 = vunpack.c.h.b16 %v456
    %v1167 = vunpack.c.l.b16 %v457
    %v1168 = vunpack.c.h.b16 %v457
    %v1169 = vunpack.c.l.b16 %v458
    %v1170 = vunpack.c.h.b16 %v458
    %v1171 = vunpack.c.l.b16 %v459
    %v1172 = vunpack.c.h.b16 %v459
    %v1173 = vunpack.c.l.b16 %v460
    %v1174 = vunpack.c.l.b16 %v461
    %v1175 = vunpack.c.h.b16 %v461
    %v1176 = vunpack.c.l.b16 %v462
    %v1177 = vunpack.c.h.b16 %v462
    %v1178 = vunpack.c.l.b16 %v463
    %v1179 = vunpack.c.h.b16 %v463
    %v1180 = vunpack.c.l.b16 %v464
    %v1181 = vunpack.c.h.b16 %v464
    %v1182 = vunpack.c.l.b16 %v465
    %v1183 = vunpack.c.l.b16 %v466
    %v1184 = vunpack.c.h.b16 %v466
    %v1185 = vunpack.c.l.b16 %v467
    %v1186 = vunpack.c.h.b16 %v467
    %v1187 = vunpack.c.l.b16 %v468
    %v1188 = vunpack.c.h.b16 %v468
    %v1189 = vunpack.c.l.b16 %v469
    %v1190 = vunpack.c.h.b16 %v469
    %v1191 = vunpack.c.l.b16 %v470
    %v1192 = vpack.c.b16 %v769, %v760
    %v1193 = vpack.c.b16 %v770, %v761
    %v1194 = vpack.c.b16 %v771, %v762
    %v1195 = vpack.c.b16 %v772, %v763
    %v1196 = vpack.c.b16 %v773, %v764
    %v1197 = vpack.c.b16 %v774, %v765
    %v1198 = vpack.c.b16 %v775, %v766
    %v1199 = vpack.c.b16 %v776, %v767
    %v1200 = vpack.c.b16 %v777, %v768
    %v1201 = vpack.c.b16 %v787, %v778
    %v1202 = vpack.c.b16 %v788, %v779
    %v1203 = vpack.c.b16 %v789, %v780
    %v1204 = vpack.c.b16 %v790, %v781
    %v1205 = vpack.c.b16 %v791, %v782
    %v1206 = vpack.c.b16 %v792, %v783
    %v1207 = vpack.c.b16 %v793, %v784
    %v1208 = vpack.c.b16 %v794, %v785
    %v1209 = vpack.c.b16 %v795, %v786
    %v1210 = vpack.c.b16 %v805, %v796
    %v1211 = vpack.c.b16 %v806, %v797
    %v1212 = vpack.c.b16 %v807, %v798
    %v1213 = vpack.c.b16 %v808, %v799
    %v1214 = vpack.c.b16 %v809, %v800
    %v1215 = vpack.c.b16 %v810, %v801
    %v1216 = vpack.c.b16 %v811, %v802
    %v1217 = vpack.c.b16 %v812, %v803
    %v1218 = vpack.c.b16 %v813, %v804
    %v1219 = vpack.c.b16 %v823, %v814
    %v1220 = vpack.c.b16 %v824, %v815
    %v1221 = vpack.c.b16 %v825, %v816
    %v1222 = vpack.c.b16 %v826, %v817
    %v1223 = vpack.c.b16 %v827, %v818
    %v1224 = vpack.c.b16 %v828, %v819
    %v1225 = vpack.c.b16 %v829, %v820
    %v1226 = vpack.c.b16 %v830, %v821
    %v1227 = vpack.c.b16 %v831, %v822
    %v1228 = vpack.c.b16 %v841, %v832
    %v1229 = vpack.c.b16 %v842, %v833
    %v1230 = vpack.c.b16 %v843, %v834
    %v1231 = vpack.c.b16 %v844, %v835
    %v1232 = vpack.c.b16 %v845, %v836
    %v1233 = vpack.c.b16 %v846, %v837
    %v1234 = vpack.c.b16 %v847, %v838
    %v1235 = vpack.c.b16 %v848, %v839
    %v1236 = vpack.c.b16 %v849, %v840
    %v1237 = vpack.c.b16 %v859, %v850
    %v1238 = vpack.c.b16 %v860, %v851
    %v1239 = vpack.c.b16 %v861, %v852
    %v1240 = vpack.c.b16 %v862, %v853
    %v1241 = vpack.c.b16 %v863, %v854
    %v1242 = vpack.c.b16 %v864, %v855
    %v1243 = vpack.c.b16 %v865, %v856
    %v1244 = vpack.c.b16 %v866, %v857
    %v1245 = vpack.c.b16 %v867, %v858
    %v1246 = vpack.c.b16 %v877, %v868
    %v1247 = vpack.c.b16 %v878, %v869
    %v1248 = vpack.c.b16 %v879, %v870
    %v1249 = vpack.c.b16 %v880, %v871
    %v1250 = vpack.c.b16 %v881, %v872
    %v1251 = vpack.c.b16 %v882, %v873
    %v1252 = vpack.c.b16 %v883, %v874
    %v1253 = vpack.c.b16 %v884, %v875
    %v1254 = vpack.c.b16 %v885, %v876
    %v1255 = vpack.c.b16 %v895, %v886
    %v1256 = vpack.c.b16 %v896, %v887
    %v1257 = vpack.c.b16 %v897, %v888
    %v1258 = vpack.c.b16 %v898, %v889
    %v1259 = vpack.c.b16 %v899, %v890
    %v1260 = vpack.c.b16 %v900, %v891
    %v1261 = vpack.c.b16 %v901, %v892
    %v1262 = vpack.c.b16 %v902, %v893
    %v1263 = vpack.c.b16 %v903, %v894
    %v1264 = vpack.c.b16 %v913, %v904
    %v1265 = vpack.c.b16 %v914, %v905
    %v1266 = vpack.c.b16 %v915, %v906
    %v1267 = vpack.c.b16 %v916, %v907
    %v1268 = vpack.c.b16 %v917, %v908
    %v1269 = vpack.c.b16 %v918, %v909
    %v1270 = vpack.c.b16 %v919, %v910
    %v1271 = vpack.c.b16 %v920, %v911
    %v1272 = vpack.c.b16 %v921, %v912
    %v1273 = vpack.c.b16 %v931, %v922
    %v1274 = vpack.c.b16 %v932, %v923
    %v1275 = vpack.c.b16 %v933, %v924
    %v1276 = vpack.c.b16 %v934, %v925
    %v1277 = vpack.c.b16 %v935, %v926
    %v1278 = vpack.c.b16 %v936, %v927
    %v1279 = vpack.c.b16 %v937, %v928
    %v1280 = vpack.c.b16 %v938, %v929
    %v1281 = vpack.c.b16 %v939, %v930
    %v1282 = vpack.c.b16 %v949, %v940
    %v1283 = vpack.c.b16 %v950, %v941
    %v1284 = vpack.c.b16 %v951, %v942
    %v1285 = vpack.c.b16 %v952, %v943
    %v1286 = vpack.c.b16 %v953, %v944
    %v1287 = vpack.c.b16 %v954, %v945
    %v1288 = vpack.c.b16 %v955, %v946
    %v1289 = vpack.c.b16 %v956, %v947
    %v1290 = vpack.c.b16 %v957, %v948
    %v1291 = vpack.c.b16 %v967, %v958
    %v1292 = vpack.c.b16 %v968, %v959
    %v1293 = vpack.c.b16 %v969, %v960
    %v1294 = vpack.c.b16 %v970, %v961
    %v1295 = vpack.c.b16 %v971, %v962
    %v1296 = vpack.c.b16 %v972, %v963
    %v1297 = vpack.c.b16 %v973, %v964
    %v1298 = vpack.c.b16 %v974, %v965
    %v1299 = vpack.c.b16 %v975, %v966
    %v1300 = vpack.c.b16 %v985, %v976
    %v1301 = vpack.c.b16 %v986, %v977
    %v1302 = vpack.c.b16 %v987, %v978
    %v1303 = vpack.c.b16 %v988, %v979
    %v1304 = vpack.c.b16 %v989, %v980
    %v1305 = vpack.c.b16 %v990, %v981
    %v1306 = vpack.c.b16 %v991, %v982
    %v1307 = vpack.c.b16 %v992, %v983
    %v1308 = vpack.c.b16 %v993, %v984
    %v1309 = vpack.c.b16 %v1003, %v994
    %v1310 = vpack.c.b16 %v1004, %v995
    %v1311 = vpack.c.b16 %v1005, %v996
    %v1312 = vpack.c.b16 %v1006, %v997
    %v1313 = vpack.c.b16 %v1007, %v998
    %v1314 = vpack.c.b16 %v1008, %v999
    %v1315 = vpack.c.b16 %v1009, %v1000
    %v1316 = vpack.c.b16 %v1010, %v1001
    %v1317 = vpack.c.b16 %v1011, %v1002
    %v1318 = vpack.c.b16 %v1021, %v1012
    %v1319 = vpack.c.b16 %v1022, %v1013
    %v1320 = vpack.c.b16 %v1023, %v1014
    %v1321 = vpack.c.b16 %v1024, %v1015
    %v1322 = vpack.c.b16 %v1025, %v1016
    %v1323 = vpack.c.b16 %v1026, %v1017
    %v1324 = vpack.c.b16 %v1027, %v1018
    %v1325 = vpack.c.b16 %v1028, %v1019
    %v1326 = vpack.c.b16 %v1029, %v1020
    %v1327 = vpack.c.b16 %v1039, %v1030
    %v1328 = vpack.c.b16 %v1040, %v1031
    %v1329 = vpack.c.b16 %v1041, %v1032
    %v1330 = vpack.c.b16 %v1042, %v1033
    %v1331 = vpack.c.b16 %v1043, %v1034
    %v1332 = vpack.c.b16 %v1044, %v1035
    %v1333 = vpack.c.b16 %v1045, %v1036
    %v1334 = vpack.c.b16 %v1046, %v1037
    %v1335 = vpack.c.b16 %v1047, %v1038
    %v1336 = vpack.c.b16 %v1057, %v1048
    %v1337 = vpack.c.b16 %v1058, %v1049
    %v1338 = vpack.c.b16 %v1059, %v1050
    %v1339 = vpack.c.b16 %v1060, %v1051
    %v1340 = vpack.c.b16 %v1061, %v1052
    %v1341 = vpack.c.b16 %v1062, %v1053
    %v1342 = vpack.c.b16 %v1063, %v1054
    %v1343 = vpack.c.b16 %v1064, %v1055
    %v1344 = vpack.c.b16 %v1065, %v1056
    %v1345 = vpack.c.b16 %v1075, %v1066
    %v1346 = vpack.c.b16 %v1076, %v1067
    %v1347 = vpack.c.b16 %v1077, %v1068
    %v1348 = vpack.c.b16 %v1078, %v1069
    %v1349 = vpack.c.b16 %v1079, %v1070
    %v1350 = vpack.c.b16 %v1080, %v1071
    %v1351 = vpack.c.b16 %v1081, %v1072
    %v1352 = vpack.c.b16 %v1082, %v1073
    %v1353 = vpack.c.b16 %v1083, %v1074
    %v1354 = vpack.c.b16 %v1093, %v1084
    %v1355 = vpack.c.b16 %v1094, %v1085
    %v1356 = vpack.c.b16 %v1095, %v1086
    %v1357 = vpack.c.b16 %v1096, %v1087
    %v1358 = vpack.c.b16 %v1097, %v1088
    %v1359 = vpack.c.b16 %v1098, %v1089
    %v1360 = vpack.c.b16 %v1099, %v1090
    %v1361 = vpack.c.b16 %v1100, %v1091
    %v1362 = vpack.c.b16 %v1101, %v1092
    %v1363 = vpack.c.b16 %v1111, %v1102
    %v1364 = vpack.c.b16 %v1112, %v1103
    %v1365 = vpack.c.b16 %v1113, %v1104
    %v1366 = vpack.c.b16 %v1114, %v1105
    %v1367 = vpack.c.b16 %v1115, %v1106
    %v1368 = vpack.c.b16 %v1116, %v1107
    %v1369 = vpack.c.b16 %v1117, %v1108
    %v1370 = vpack.c.b16 %v1118, %v1109
    %v1371 = vpack.c.b16 %v1119, %v1110
    %v1372 = vpack.c.b16 %v1129, %v1120
    %v1373 = vpack.c.b16 %v1130, %v1121
    %v1374 = vpack.c.b16 %v1131, %v1122
    %v1375 = vpack.c.b16 %v1132, %v1123
    %v1376 = vpack.c.b16 %v1133, %v1124
    %v1377 = vpack.c.b16 %v1134, %v1125
    %v1378 = vpack.c.b16 %v1135, %v1126
    %v1379 = vpack.c.b16 %v1136, %v1127
    %v1380 = vpack.c.b16 %v1137, %v1128
    %v1381 = vpack.c.b16 %v1147, %v1138
    %v1382 = vpack.c.b16 %v1148, %v1139
    %v1383 = vpack.c.b16 %v1149, %v1140
    %v1384 = vpack.c.b16 %v1150, %v1141
    %v1385 = vpack.c.b16 %v1151, %v1142
    %v1386 = vpack.c.b16 %v1152, %v1143
    %v1387 = vpack.c.b16 %v1153, %v1144
    %v1388 = vpack.c.b16 %v1154, %v1145
    %v1389 = vpack.c.b16 %v1155, %v1146
    %v1390 = vpack.c.b16 %v1165, %v1156
    %v1391 = vpack.c.b16 %v1166, %v1157
    %v1392 = vpack.c.b16 %v1167, %v1158
    %v1393 = vpack.c.b16 %v1168, %v1159
    %v1394 = vpack.c.b16 %v1169, %v1160
    %v1395 = vpack.c.b16 %v1170, %v1161
    %v1396 = vpack.c.b16 %v1171, %v1162
    %v1397 = vpack.c.b16 %v1172, %v1163
    %v1398 = vpack.c.b16 %v1173, %v1164
    %v1399 = vpack.c.b16 %v1183, %v1174
    %v1400 = vpack.c.b16 %v1184, %v1175
    %v1401 = vpack.c.b16 %v1185, %v1176
    %v1402 = vpack.c.b16 %v1186, %v1177
    %v1403 = vpack.c.b16 %v1187, %v1178
    %v1404 = vpack.c.b16 %v1188, %v1179
    %v1405 = vpack.c.b16 %v1189, %v1180
    %v1406 = vpack.c.b16 %v1190, %v1181
    %v1407 = vpack.c.b16 %v1191, %v1182
    %1624 = vmatprep.subr.bf16.mxu0 %v1193
    %1625 = vmatpush1.bf16.msra.mxu0 %v1192
    %1626 = vmatprep.subr.bf16.mxu0 %v1202
    %1627 = vmatpush1.bf16.msra.mxu0 %v1201
    %1628 = vmatprep.subr.bf16.mxu0 %v1211
    %1629 = vmatpush1.bf16.msra.mxu0 %v1210
    %1630 = vmatprep.subr.bf16.mxu0 %v1220
    %1631 = vmatpush1.bf16.msra.mxu0 %v1219
    %1632 = vmatprep.subr.bf16.mxu0 %v1229
    %1633 = vmatpush1.bf16.msra.mxu0 %v1228
    %1634 = vmatprep.subr.bf16.mxu0 %v1238
    %1635 = vmatpush1.bf16.msra.mxu0 %v1237
    %1636 = vmatprep.subr.bf16.mxu0 %v1247
    %1637 = vmatpush1.bf16.msra.mxu0 %v1246
    %1638 = vmatprep.subr.bf16.mxu0 %v1256
    %1639 = vmatpush1.bf16.msra.mxu0 %v1255
    %1640 = vmatprep.subr.bf16.mxu0 %v1265
    %1641 = vmatpush1.bf16.msra.mxu0 %v1264
    %1642 = vmatprep.subr.bf16.mxu0 %v1274
    %1643 = vmatpush1.bf16.msra.mxu0 %v1273
    %1644 = vmatprep.subr.bf16.mxu0 %v1283
    %1645 = vmatpush1.bf16.msra.mxu0 %v1282
    %1646 = vmatprep.subr.bf16.mxu0 %v1292
    %1647 = vmatpush1.bf16.msra.mxu0 %v1291
    %1648 = vmatprep.subr.bf16.mxu0 %v1301
    %1649 = vmatpush1.bf16.msra.mxu0 %v1300
    %1650 = vmatprep.subr.bf16.mxu0 %v1310
    %1651 = vmatpush1.bf16.msra.mxu0 %v1309
    %1652 = vmatprep.subr.bf16.mxu0 %v1319
    %1653 = vmatpush1.bf16.msra.mxu0 %v1318
    %1654 = vmatprep.subr.bf16.mxu0 %v1328
    %1655 = vmatpush1.bf16.msra.mxu0 %v1327
    %1656 = vmatprep.mubr.bf16.mxu0 %v229
    %1657 = vmatmul.mubr.bf16.gmra.mrb[0].mxu0 %v228
    %v1658 = vpop.f32.mrb[0].mxu0
    %v1659 = vadd.f32 %v478, %v1658
    %v1660 = vpop.f32.mrb[0].mxu0
    %v1661 = vadd.f32 %v482, %v1660
    %v1662 = vpop.f32.mrb[0].mxu0
    %v1663 = vpop.f32.mrb[0].mxu0
    %1664 = vdwg.mxu0
    %1665 = vmatprep.subr.bf16.mxu0 %v1337
    %1666 = vmatpush1.bf16.msra.mxu0 %v1336
    %1667 = vmatprep.subr.bf16.mxu0 %v1346
    %1668 = vmatpush1.bf16.msra.mxu0 %v1345
    %1669 = vmatprep.subr.bf16.mxu0 %v1355
    %1670 = vmatpush1.bf16.msra.mxu0 %v1354
    %1671 = vmatprep.subr.bf16.mxu0 %v1364
    %1672 = vmatpush1.bf16.msra.mxu0 %v1363
    %1673 = vmatprep.subr.bf16.mxu0 %v1373
    %1674 = vmatpush1.bf16.msra.mxu0 %v1372
    %1675 = vmatprep.subr.bf16.mxu0 %v1382
    %1676 = vmatpush1.bf16.msra.mxu0 %v1381
    %1677 = vmatprep.subr.bf16.mxu0 %v1391
    %1678 = vmatpush1.bf16.msra.mxu0 %v1390
    %1679 = vmatprep.subr.bf16.mxu0 %v1400
    %1680 = vmatpush1.bf16.msra.mxu0 %v1399
    %1681 = vmatprep.subr.bf16.mxu0 0
    %1682 = vmatpush1.bf16.msra.mxu0 0
    %1683 = vmatprep.subr.bf16.mxu0 0
    %1684 = vmatpush1.bf16.msra.mxu0 0
    %1685 = vmatprep.subr.bf16.mxu0 0
    %1686 = vmatpush1.bf16.msra.mxu0 0
    %1687 = vmatprep.subr.bf16.mxu0 0
    %1688 = vmatpush1.bf16.msra.mxu0 0
    %1689 = vmatprep.subr.bf16.mxu0 0
    %1690 = vmatpush1.bf16.msra.mxu0 0
    %1691 = vmatprep.subr.bf16.mxu0 0
    %1692 = vmatpush1.bf16.msra.mxu0 0
    %1693 = vmatprep.subr.bf16.mxu0 0
    %1694 = vmatpush1.bf16.msra.mxu0 0
    %1695 = vmatprep.subr.bf16.mxu0 0
    %1696 = vmatpush1.bf16.msra.mxu0 0
    %1697 = vmatprep.mubr.bf16.mxu0 0
    %1698 = vmatmul.mubr.bf16.gmra.mrb[0].mxu0 %v230
    %v1699 = vpop.f32.mrb[0].mxu0
    %v1700 = vadd.f32 %v1659, %v1699
    %v1701 = vpop.f32.mrb[0].mxu0
    %v1702 = vadd.f32 %v1661, %v1701
    %v1703 = vpop.f32.mrb[0].mxu0
    %v1704 = vpop.f32.mrb[0].mxu0
    %1705 = vdwg.mxu0
    %1706 = vmatprep.subr.bf16.mxu0 %v1195
    %1707 = vmatpush1.bf16.msra.mxu0 %v1194
    %1708 = vmatprep.subr.bf16.mxu0 %v1204
    %1709 = vmatpush1.bf16.msra.mxu0 %v1203
    %1710 = vmatprep.subr.bf16.mxu0 %v1213
    %1711 = vmatpush1.bf16.msra.mxu0 %v1212
    %1712 = vmatprep.subr.bf16.mxu0 %v1222
    %1713 = vmatpush1.bf16.msra.mxu0 %v1221
    %1714 = vmatprep.subr.bf16.mxu0 %v1231
    %1715 = vmatpush1.bf16.msra.mxu0 %v1230
    %1716 = vmatprep.subr.bf16.mxu0 %v1240
    %1717 = vmatpush1.bf16.msra.mxu0 %v1239
    %1718 = vmatprep.subr.bf16.mxu0 %v1249
    %1719 = vmatpush1.bf16.msra.mxu0 %v1248
    %1720 = vmatprep.subr.bf16.mxu0 %v1258
    %1721 = vmatpush1.bf16.msra.mxu0 %v1257
    %1722 = vmatprep.subr.bf16.mxu0 %v1267
    %1723 = vmatpush1.bf16.msra.mxu0 %v1266
    %1724 = vmatprep.subr.bf16.mxu0 %v1276
    %1725 = vmatpush1.bf16.msra.mxu0 %v1275
    %1726 = vmatprep.subr.bf16.mxu0 %v1285
    %1727 = vmatpush1.bf16.msra.mxu0 %v1284
    %1728 = vmatprep.subr.bf16.mxu0 %v1294
    %1729 = vmatpush1.bf16.msra.mxu0 %v1293
    %1730 = vmatprep.subr.bf16.mxu0 %v1303
    %1731 = vmatpush1.bf16.msra.mxu0 %v1302
    %1732 = vmatprep.subr.bf16.mxu0 %v1312
    %1733 = vmatpush1.bf16.msra.mxu0 %v1311
    %1734 = vmatprep.subr.bf16.mxu0 %v1321
    %1735 = vmatpush1.bf16.msra.mxu0 %v1320
    %1736 = vmatprep.subr.bf16.mxu0 %v1330
    %1737 = vmatpush1.bf16.msra.mxu0 %v1329
    %1738 = vmatprep.mubr.bf16.mxu0 %v229
    %1739 = vmatmul.mubr.bf16.gmra.mrb[0].mxu0 %v228
    %v1740 = vpop.f32.mrb[0].mxu0
    %v1741 = vadd.f32 %v486, %v1740
    %v1742 = vpop.f32.mrb[0].mxu0
    %v1743 = vadd.f32 %v490, %v1742
    %v1744 = vpop.f32.mrb[0].mxu0
    %v1745 = vpop.f32.mrb[0].mxu0
    %1746 = vdwg.mxu0
    %1747 = vmatprep.subr.bf16.mxu0 %v1339
    %1748 = vmatpush1.bf16.msra.mxu0 %v1338
    %1749 = vmatprep.subr.bf16.mxu0 %v1348
    %1750 = vmatpush1.bf16.msra.mxu0 %v1347
    %1751 = vmatprep.subr.bf16.mxu0 %v1357
    %1752 = vmatpush1.bf16.msra.mxu0 %v1356
    %1753 = vmatprep.subr.bf16.mxu0 %v1366
    %1754 = vmatpush1.bf16.msra.mxu0 %v1365
    %1755 = vmatprep.subr.bf16.mxu0 %v1375
    %1756 = vmatpush1.bf16.msra.mxu0 %v1374
    %1757 = vmatprep.subr.bf16.mxu0 %v1384
    %1758 = vmatpush1.bf16.msra.mxu0 %v1383
    %1759 = vmatprep.subr.bf16.mxu0 %v1393
    %1760 = vmatpush1.bf16.msra.mxu0 %v1392
    %1761 = vmatprep.subr.bf16.mxu0 %v1402
    %1762 = vmatpush1.bf16.msra.mxu0 %v1401
    %1763 = vmatprep.subr.bf16.mxu0 0
    %1764 = vmatpush1.bf16.msra.mxu0 0
    %1765 = vmatprep.subr.bf16.mxu0 0
    %1766 = vmatpush1.bf16.msra.mxu0 0
    %1767 = vmatprep.subr.bf16.mxu0 0
    %1768 = vmatpush1.bf16.msra.mxu0 0
    %1769 = vmatprep.subr.bf16.mxu0 0
    %1770 = vmatpush1.bf16.msra.mxu0 0
    %1771 = vmatprep.subr.bf16.mxu0 0
    %1772 = vmatpush1.bf16.msra.mxu0 0
    %1773 = vmatprep.subr.bf16.mxu0 0
    %1774 = vmatpush1.bf16.msra.mxu0 0
    %1775 = vmatprep.subr.bf16.mxu0 0
    %1776 = vmatpush1.bf16.msra.mxu0 0
    %1777 = vmatprep.subr.bf16.mxu0 0
    %1778 = vmatpush1.bf16.msra.mxu0 0
    %1779 = vmatprep.mubr.bf16.mxu0 0
    %1780 = vmatmul.mubr.bf16.gmra.mrb[0].mxu0 %v230
    %v1781 = vpop.f32.mrb[0].mxu0
    %v1782 = vadd.f32 %v1741, %v1781
    %v1783 = vpop.f32.mrb[0].mxu0
    %v1784 = vadd.f32 %v1743, %v1783
    %v1785 = vpop.f32.mrb[0].mxu0
    %v1786 = vpop.f32.mrb[0].mxu0
    %1787 = vdwg.mxu0
    %1788 = vmatprep.subr.bf16.mxu0 %v1197
    %1789 = vmatpush1.bf16.msra.mxu0 %v1196
    %1790 = vmatprep.subr.bf16.mxu0 %v1206
    %1791 = vmatpush1.bf16.msra.mxu0 %v1205
    %1792 = vmatprep.subr.bf16.mxu0 %v1215
    %1793 = vmatpush1.bf16.msra.mxu0 %v1214
    %1794 = vmatprep.subr.bf16.mxu0 %v1224
    %1795 = vmatpush1.bf16.msra.mxu0 %v1223
    %1796 = vmatprep.subr.bf16.mxu0 %v1233
    %1797 = vmatpush1.bf16.msra.mxu0 %v1232
    %1798 = vmatprep.subr.bf16.mxu0 %v1242
    %1799 = vmatpush1.bf16.msra.mxu0 %v1241
    %1800 = vmatprep.subr.bf16.mxu0 %v1251
    %1801 = vmatpush1.bf16.msra.mxu0 %v1250
    %1802 = vmatprep.subr.bf16.mxu0 %v1260
    %1803 = vmatpush1.bf16.msra.mxu0 %v1259
    %1804 = vmatprep.subr.bf16.mxu0 %v1269
    %1805 = vmatpush1.bf16.msra.mxu0 %v1268
    %1806 = vmatprep.subr.bf16.mxu0 %v1278
    %1807 = vmatpush1.bf16.msra.mxu0 %v1277
    %1808 = vmatprep.subr.bf16.mxu0 %v1287
    %1809 = vmatpush1.bf16.msra.mxu0 %v1286
    %1810 = vmatprep.subr.bf16.mxu0 %v1296
    %1811 = vmatpush1.bf16.msra.mxu0 %v1295
    %1812 = vmatprep.subr.bf16.mxu0 %v1305
    %1813 = vmatpush1.bf16.msra.mxu0 %v1304
    %1814 = vmatprep.subr.bf16.mxu0 %v1314
    %1815 = vmatpush1.bf16.msra.mxu0 %v1313
    %1816 = vmatprep.subr.bf16.mxu0 %v1323
    %1817 = vmatpush1.bf16.msra.mxu0 %v1322
    %1818 = vmatprep.subr.bf16.mxu0 %v1332
    %1819 = vmatpush1.bf16.msra.mxu0 %v1331
    %1820 = vmatprep.mubr.bf16.mxu0 %v229
    %1821 = vmatmul.mubr.bf16.gmra.mrb[0].mxu0 %v228
    %v1822 = vpop.f32.mrb[0].mxu0
    %v1823 = vadd.f32 %v494, %v1822
    %v1824 = vpop.f32.mrb[0].mxu0
    %v1825 = vadd.f32 %v498, %v1824
    %v1826 = vpop.f32.mrb[0].mxu0
    %v1827 = vpop.f32.mrb[0].mxu0
    %1828 = vdwg.mxu0
    %1829 = vmatprep.subr.bf16.mxu0 %v1341
    %1830 = vmatpush1.bf16.msra.mxu0 %v1340
    %1831 = vmatprep.subr.bf16.mxu0 %v1350
    %1832 = vmatpush1.bf16.msra.mxu0 %v1349
    %1833 = vmatprep.subr.bf16.mxu0 %v1359
    %1834 = vmatpush1.bf16.msra.mxu0 %v1358
    %1835 = vmatprep.subr.bf16.mxu0 %v1368
    %1836 = vmatpush1.bf16.msra.mxu0 %v1367
    %1837 = vmatprep.subr.bf16.mxu0 %v1377
    %1838 = vmatpush1.bf16.msra.mxu0 %v1376
    %1839 = vmatprep.subr.bf16.mxu0 %v1386
    %1840 = vmatpush1.bf16.msra.mxu0 %v1385
    %1841 = vmatprep.subr.bf16.mxu0 %v1395
    %1842 = vmatpush1.bf16.msra.mxu0 %v1394
    %1843 = vmatprep.subr.bf16.mxu0 %v1404
    %1844 = vmatpush1.bf16.msra.mxu0 %v1403
    %1845 = vmatprep.subr.bf16.mxu0 0
    %1846 = vmatpush1.bf16.msra.mxu0 0
    %1847 = vmatprep.subr.bf16.mxu0 0
    %1848 = vmatpush1.bf16.msra.mxu0 0
    %1849 = vmatprep.subr.bf16.mxu0 0
    %1850 = vmatpush1.bf16.msra.mxu0 0
    %1851 = vmatprep.subr.bf16.mxu0 0
    %1852 = vmatpush1.bf16.msra.mxu0 0
    %1853 = vmatprep.subr.bf16.mxu0 0
    %1854 = vmatpush1.bf16.msra.mxu0 0
    %1855 = vmatprep.subr.bf16.mxu0 0
    %1856 = vmatpush1.bf16.msra.mxu0 0
    %1857 = vmatprep.subr.bf16.mxu0 0
    %1858 = vmatpush1.bf16.msra.mxu0 0
    %1859 = vmatprep.subr.bf16.mxu0 0
    %1860 = vmatpush1.bf16.msra.mxu0 0
    %1861 = vmatprep.mubr.bf16.mxu0 0
    %1862 = vmatmul.mubr.bf16.gmra.mrb[0].mxu0 %v230
    %v1863 = vpop.f32.mrb[0].mxu0
    %v1864 = vadd.f32 %v1823, %v1863
    %v1865 = vpop.f32.mrb[0].mxu0
    %v1866 = vadd.f32 %v1825, %v1865
    %v1867 = vpop.f32.mrb[0].mxu0
    %v1868 = vpop.f32.mrb[0].mxu0
    %1869 = vdwg.mxu0
    %1870 = vmatprep.subr.bf16.mxu0 %v1199
    %1871 = vmatpush1.bf16.msra.mxu0 %v1198
    %1872 = vmatprep.subr.bf16.mxu0 %v1208
    %1873 = vmatpush1.bf16.msra.mxu0 %v1207
    %1874 = vmatprep.subr.bf16.mxu0 %v1217
    %1875 = vmatpush1.bf16.msra.mxu0 %v1216
    %1876 = vmatprep.subr.bf16.mxu0 %v1226
    %1877 = vmatpush1.bf16.msra.mxu0 %v1225
    %1878 = vmatprep.subr.bf16.mxu0 %v1235
    %1879 = vmatpush1.bf16.msra.mxu0 %v1234
    %1880 = vmatprep.subr.bf16.mxu0 %v1244
    %1881 = vmatpush1.bf16.msra.mxu0 %v1243
    %1882 = vmatprep.subr.bf16.mxu0 %v1253
    %1883 = vmatpush1.bf16.msra.mxu0 %v1252
    %1884 = vmatprep.subr.bf16.mxu0 %v1262
    %1885 = vmatpush1.bf16.msra.mxu0 %v1261
    %1886 = vmatprep.subr.bf16.mxu0 %v1271
    %1887 = vmatpush1.bf16.msra.mxu0 %v1270
    %1888 = vmatprep.subr.bf16.mxu0 %v1280
    %1889 = vmatpush1.bf16.msra.mxu0 %v1279
    %1890 = vmatprep.subr.bf16.mxu0 %v1289
    %1891 = vmatpush1.bf16.msra.mxu0 %v1288
    %1892 = vmatprep.subr.bf16.mxu0 %v1298
    %1893 = vmatpush1.bf16.msra.mxu0 %v1297
    %1894 = vmatprep.subr.bf16.mxu0 %v1307
    %1895 = vmatpush1.bf16.msra.mxu0 %v1306
    %1896 = vmatprep.subr.bf16.mxu0 %v1316
    %1897 = vmatpush1.bf16.msra.mxu0 %v1315
    %1898 = vmatprep.subr.bf16.mxu0 %v1325
    %1899 = vmatpush1.bf16.msra.mxu0 %v1324
    %1900 = vmatprep.subr.bf16.mxu0 %v1334
    %1901 = vmatpush1.bf16.msra.mxu0 %v1333
    %1902 = vmatprep.mubr.bf16.mxu0 %v229
    %1903 = vmatmul.mubr.bf16.gmra.mrb[0].mxu0 %v228
    %v1904 = vpop.f32.mrb[0].mxu0
    %v1905 = vadd.f32 %v502, %v1904
    %v1906 = vpop.f32.mrb[0].mxu0
    %v1907 = vadd.f32 %v506, %v1906
    %v1908 = vpop.f32.mrb[0].mxu0
    %v1909 = vpop.f32.mrb[0].mxu0
    %1910 = vdwg.mxu0
    %1911 = vmatprep.subr.bf16.mxu0 %v1343
    %1912 = vmatpush1.bf16.msra.mxu0 %v1342
    %1913 = vmatprep.subr.bf16.mxu0 %v1352
    %1914 = vmatpush1.bf16.msra.mxu0 %v1351
    %1915 = vmatprep.subr.bf16.mxu0 %v1361
    %1916 = vmatpush1.bf16.msra.mxu0 %v1360
    %1917 = vmatprep.subr.bf16.mxu0 %v1370
    %1918 = vmatpush1.bf16.msra.mxu0 %v1369
    %1919 = vmatprep.subr.bf16.mxu0 %v1379
    %1920 = vmatpush1.bf16.msra.mxu0 %v1378
    %1921 = vmatprep.subr.bf16.mxu0 %v1388
    %1922 = vmatpush1.bf16.msra.mxu0 %v1387
    %1923 = vmatprep.subr.bf16.mxu0 %v1397
    %1924 = vmatpush1.bf16.msra.mxu0 %v1396
    %1925 = vmatprep.subr.bf16.mxu0 %v1406
    %1926 = vmatpush1.bf16.msra.mxu0 %v1405
    %1927 = vmatprep.subr.bf16.mxu0 0
    %1928 = vmatpush1.bf16.msra.mxu0 0
    %1929 = vmatprep.subr.bf16.mxu0 0
    %1930 = vmatpush1.bf16.msra.mxu0 0
    %1931 = vmatprep.subr.bf16.mxu0 0
    %1932 = vmatpush1.bf16.msra.mxu0 0
    %1933 = vmatprep.subr.bf16.mxu0 0
    %1934 = vmatpush1.bf16.msra.mxu0 0
    %1935 = vmatprep.subr.bf16.mxu0 0
    %1936 = vmatpush1.bf16.msra.mxu0 0
    %1937 = vmatprep.subr.bf16.mxu0 0
    %1938 = vmatpush1.bf16.msra.mxu0 0
    %1939 = vmatprep.subr.bf16.mxu0 0
    %1940 = vmatpush1.bf16.msra.mxu0 0
    %1941 = vmatprep.subr.bf16.mxu0 0
    %1942 = vmatpush1.bf16.msra.mxu0 0
    %1943 = vmatprep.mubr.bf16.mxu0 0
    %1944 = vmatmul.mubr.bf16.gmra.mrb[0].mxu0 %v230
    %v1945 = vpop.f32.mrb[0].mxu0
    %v1946 = vadd.f32 %v1905, %v1945
    %v1947 = vpop.f32.mrb[0].mxu0
    %v1948 = vadd.f32 %v1907, %v1947
    %v1949 = vpop.f32.mrb[0].mxu0
    %v1950 = vpop.f32.mrb[0].mxu0
    %1951 = vdwg.mxu0
    %1952 = vmatprep.subr.bf16.mxu0 0
    %1953 = vmatpush1.bf16.msra.mxu0 %v1200
    %1954 = vmatprep.subr.bf16.mxu0 0
    %1955 = vmatpush1.bf16.msra.mxu0 %v1209
    %1956 = vmatprep.subr.bf16.mxu0 0
    %1957 = vmatpush1.bf16.msra.mxu0 %v1218
    %1958 = vmatprep.subr.bf16.mxu0 0
    %1959 = vmatpush1.bf16.msra.mxu0 %v1227
    %1960 = vmatprep.subr.bf16.mxu0 0
    %1961 = vmatpush1.bf16.msra.mxu0 %v1236
    %1962 = vmatprep.subr.bf16.mxu0 0
    %1963 = vmatpush1.bf16.msra.mxu0 %v1245
    %1964 = vmatprep.subr.bf16.mxu0 0
    %1965 = vmatpush1.bf16.msra.mxu0 %v1254
    %1966 = vmatprep.subr.bf16.mxu0 0
    %1967 = vmatpush1.bf16.msra.mxu0 %v1263
    %1968 = vmatprep.subr.bf16.mxu0 0
    %1969 = vmatpush1.bf16.msra.mxu0 %v1272
    %1970 = vmatprep.subr.bf16.mxu0 0
    %1971 = vmatpush1.bf16.msra.mxu0 %v1281
    %1972 = vmatprep.subr.bf16.mxu0 0
    %1973 = vmatpush1.bf16.msra.mxu0 %v1290
    %1974 = vmatprep.subr.bf16.mxu0 0
    %1975 = vmatpush1.bf16.msra.mxu0 %v1299
    %1976 = vmatprep.subr.bf16.mxu0 0
    %1977 = vmatpush1.bf16.msra.mxu0 %v1308
    %1978 = vmatprep.subr.bf16.mxu0 0
    %1979 = vmatpush1.bf16.msra.mxu0 %v1317
    %1980 = vmatprep.subr.bf16.mxu0 0
    %1981 = vmatpush1.bf16.msra.mxu0 %v1326
    %1982 = vmatprep.subr.bf16.mxu0 0
    %1983 = vmatpush1.bf16.msra.mxu0 %v1335
    %1984 = vmatprep.mubr.bf16.mxu0 %v229
    %1985 = vmatmul.mubr.bf16.gmra.mrb[0].mxu0 %v228
    %v1986 = vpop.f32.mrb[0].mxu0
    %v1987 = vadd.f32 %v510, %v1986
    %v1988 = vpop.f32.mrb[0].mxu0
    %v1989 = vpop.f32.mrb[0].mxu0
    %v1990 = vpop.f32.mrb[0].mxu0
    %1991 = vdwg.mxu0
    %1992 = vmatprep.subr.bf16.mxu0 0
    %1993 = vmatpush1.bf16.msra.mxu0 %v1344
    %1994 = vmatprep.subr.bf16.mxu0 0
    %1995 = vmatpush1.bf16.msra.mxu0 %v1353
    %1996 = vmatprep.subr.bf16.mxu0 0
    %1997 = vmatpush1.bf16.msra.mxu0 %v1362
    %1998 = vmatprep.subr.bf16.mxu0 0
    %1999 = vmatpush1.bf16.msra.mxu0 %v1371
    %2000 = vmatprep.subr.bf16.mxu0 0
    %2001 = vmatpush1.bf16.msra.mxu0 %v1380
    %2002 = vmatprep.subr.bf16.mxu0 0
    %2003 = vmatpush1.bf16.msra.mxu0 %v1389
    %2004 = vmatprep.subr.bf16.mxu0 0
    %2005 = vmatpush1.bf16.msra.mxu0 %v1398
    %2006 = vmatprep.subr.bf16.mxu0 0
    %2007 = vmatpush1.bf16.msra.mxu0 %v1407
    %2008 = vmatprep.subr.bf16.mxu0 0
    %2009 = vmatpush1.bf16.msra.mxu0 0
    %2010 = vmatprep.subr.bf16.mxu0 0
    %2011 = vmatpush1.bf16.msra.mxu0 0
    %2012 = vmatprep.subr.bf16.mxu0 0
    %2013 = vmatpush1.bf16.msra.mxu0 0
    %2014 = vmatprep.subr.bf16.mxu0 0
    %2015 = vmatpush1.bf16.msra.mxu0 0
    %2016 = vmatprep.subr.bf16.mxu0 0
    %2017 = vmatpush1.bf16.msra.mxu0 0
    %2018 = vmatprep.subr.bf16.mxu0 0
    %2019 = vmatpush1.bf16.msra.mxu0 0
    %2020 = vmatprep.subr.bf16.mxu0 0
    %2021 = vmatpush1.bf16.msra.mxu0 0
    %2022 = vmatprep.subr.bf16.mxu0 0
    %2023 = vmatpush1.bf16.msra.mxu0 0
    %2024 = vmatprep.mubr.bf16.mxu0 0
    %2025 = vmatmul.mubr.bf16.gmra.mrb[0].mxu0 %v230
    %v2026 = vpop.f32.mrb[0].mxu0
    %v2027 = vadd.f32 %v1987, %v2026
    %v2028 = vpop.f32.mrb[0].mxu0
    %v2029 = vpop.f32.mrb[0].mxu0
    %v2030 = vpop.f32.mrb[0].mxu0
    %2031 = vdwg.mxu0
    %v2041 = vcombine.low %v1700, %v1702
    %v2042 = vcombine.low %v1782, %v1784
    %v2044 = vunpack.c.l.s4 1983009808
    %v2045 = vunpack.c.0.s8 %v2044
    %v2046 = vlaneseq
    %v2047 = vshrl.u32 %v2046, 7
    %v2048 = vsub.s32 %v2045, %v2047
    %v2049 = vrot.slane %v2041, %v2048
    %v2051 = vunpack.c.l.s4 1983009808
    %v2052 = vunpack.c.0.s8 %v2051
    %v2053 = vlaneseq
    %v2054 = vshrl.u32 %v2053, 7
    %v2055 = vsub.s32 %v2052, %v2054
    %v2056 = vrot.slane %v2042, %v2055
    %v2057 = vcombine.low %v2049, %v2056
    %v2058 = vcombine.low %v1864, %v1866
    %v2059 = vcombine.low %v1946, %v1948
    %v2061 = vunpack.c.l.s4 1983009808
    %v2062 = vunpack.c.0.s8 %v2061
    %v2063 = vlaneseq
    %v2064 = vshrl.u32 %v2063, 7
    %v2065 = vsub.s32 %v2062, %v2064
    %v2066 = vrot.slane %v2058, %v2065
    %v2068 = vunpack.c.l.s4 1983009808
    %v2069 = vunpack.c.0.s8 %v2068
    %v2070 = vlaneseq
    %v2071 = vshrl.u32 %v2070, 7
    %v2072 = vsub.s32 %v2069, %v2071
    %v2073 = vrot.slane %v2059, %v2072
    %v2074 = vcombine.low %v2066, %v2073
    %v2076 = vunpack.c.l.s4 1983009808
    %v2077 = vunpack.c.0.s8 %v2076
    %v2078 = vlaneseq
    %v2079 = vshrl.u32 %v2078, 7
    %v2080 = vsub.s32 %v2077, %v2079
    %v2081 = vrot.slane %v2027, %v2080
    %2085 = vst [vmem:[#allocation3] sm:$0xff] %v2057
    %2086 = vst [vmem:[#allocation3 + $0x8] sm:$0xff] %v2074
    %2087 = vst [vmem:[#allocation3 + $0x10] sm:$0x3] %v2081
    %v2088 = vld [vmem:[#allocation3] sm:$0x1]
    %vm2089 = vcmask 385024
    %2090 = vst.msk [vmem:[#allocation4] sm:$0x1] %vm2089, %v2088
    %v2091 = vld [vmem:[#allocation3 + $0x6] sm:$0x1]
    %2092 = vst.msk [vmem:[#allocation5] sm:$0x1] %vm2089, %v2091
    %v2093 = vld [vmem:[#allocation3 + $0xc] sm:$0x1]
    %2094 = vst.msk [vmem:[#allocation6] sm:$0x1] %vm2089, %v2093
    %v2095 = vld [vmem:[#allocation3] sm:$0x1]
    %v2097 = vlaneseq
    %v2098 = vshrl.u32 %v2097, 7
    %v2099 = vsub.s32 0, %v2098
    %v2100 = vrot.slane %v2095, %v2099
    %2101 = vrot.lane.b32.xlu0 %v2100, 80
    %v2102 = vpop.permute.xlu0 %2101
    %2104 = vst.msk [vmem:[#allocation4 + $0x1] sm:$0x1] %vm2089, %v2102
    %v2105 = vld [vmem:[#allocation3 + $0x6] sm:$0x1]
    %v2107 = vlaneseq
    %v2108 = vshrl.u32 %v2107, 7
    %v2109 = vsub.s32 0, %v2108
    %v2110 = vrot.slane %v2105, %v2109
    %2111 = vrot.lane.b32.xlu0 %v2110, 80
    %v2112 = vpop.permute.xlu0 %2111
    %2114 = vst.msk [vmem:[#allocation5 + $0x1] sm:$0x1] %vm2089, %v2112
    %v2115 = vld [vmem:[#allocation3 + $0xc] sm:$0x1]
    %v2117 = vlaneseq
    %v2118 = vshrl.u32 %v2117, 7
    %v2119 = vsub.s32 0, %v2118
    %v2120 = vrot.slane %v2115, %v2119
    %2121 = vrot.lane.b32.xlu0 %v2120, 80
    %v2122 = vpop.permute.xlu0 %2121
    %2124 = vst.msk [vmem:[#allocation6 + $0x1] sm:$0x1] %vm2089, %v2122
    %v2125 = vld [vmem:[#allocation3] sm:$0x5]
    %v2127 = vlaneseq
    %v2128 = vshrl.u32 %v2127, 7
    %v2129 = vsub.s32 0, %v2128
    %v2130 = vrot.slane %v2125, %v2129
    %v2131 = vlaneseq
    %v2132 = vshrl.u32 %v2131, 7
    %v2133 = vsub.s32 2, %v2132
    %v2134 = vrot.slane %v2125, %v2133
    %2135 = vrot.lane.b32.xlu0 %v2130, 32
    %v2136 = vpop.permute.xlu0 %2135
    %2137 = vrot.lane.b32.xlu0 %v2134, 32
    %v2138 = vpop.permute.xlu0 %2137
    %vm2139 = vcmask 261120
    %v2140 = vsel %vm2139, %v2136, %v2138
    %2142 = vst.msk [vmem:[#allocation4 + $0x2] sm:$0x1] %vm2089, %v2140
    %v2143 = vld [vmem:[#allocation3 + $0x6] sm:$0x5]
    %v2145 = vlaneseq
    %v2146 = vshrl.u32 %v2145, 7
    %v2147 = vsub.s32 0, %v2146
    %v2148 = vrot.slane %v2143, %v2147
    %v2149 = vlaneseq
    %v2150 = vshrl.u32 %v2149, 7
    %v2151 = vsub.s32 2, %v2150
    %v2152 = vrot.slane %v2143, %v2151
    %2153 = vrot.lane.b32.xlu0 %v2148, 32
    %v2154 = vpop.permute.xlu0 %2153
    %2155 = vrot.lane.b32.xlu0 %v2152, 32
    %v2156 = vpop.permute.xlu0 %2155
    %v2157 = vsel %vm2139, %v2154, %v2156
    %2159 = vst.msk [vmem:[#allocation5 + $0x2] sm:$0x1] %vm2089, %v2157
    %v2160 = vld [vmem:[#allocation3 + $0xc] sm:$0x5]
    %v2162 = vlaneseq
    %v2163 = vshrl.u32 %v2162, 7
    %v2164 = vsub.s32 0, %v2163
    %v2165 = vrot.slane %v2160, %v2164
    %v2166 = vlaneseq
    %v2167 = vshrl.u32 %v2166, 7
    %v2168 = vsub.s32 2, %v2167
    %v2169 = vrot.slane %v2160, %v2168
    %2170 = vrot.lane.b32.xlu0 %v2165, 32
    %v2171 = vpop.permute.xlu0 %2170
    %2172 = vrot.lane.b32.xlu0 %v2169, 32
    %v2173 = vpop.permute.xlu0 %2172
    %v2174 = vsel %vm2139, %v2171, %v2173
    %2176 = vst.msk [vmem:[#allocation6 + $0x2] sm:$0x1] %vm2089, %v2174
    %v2177 = vld [vmem:[#allocation3 + $0x2] sm:$0x1]
    %v2179 = vlaneseq
    %v2180 = vshrl.u32 %v2179, 7
    %v2181 = vsub.s32 0, %v2180
    %v2182 = vrot.slane %v2177, %v2181
    %2183 = vrot.lane.b32.xlu0 %v2182, 112
    %v2184 = vpop.permute.xlu0 %2183
    %2186 = vst.msk [vmem:[#allocation4 + $0x3] sm:$0x1] %vm2089, %v2184
    %v2187 = vld [vmem:[#allocation3 + $0x8] sm:$0x1]
    %v2189 = vlaneseq
    %v2190 = vshrl.u32 %v2189, 7
    %v2191 = vsub.s32 0, %v2190
    %v2192 = vrot.slane %v2187, %v2191
    %2193 = vrot.lane.b32.xlu0 %v2192, 112
    %v2194 = vpop.permute.xlu0 %2193
    %2196 = vst.msk [vmem:[#allocation5 + $0x3] sm:$0x1] %vm2089, %v2194
    %v2197 = vld [vmem:[#allocation3 + $0xe] sm:$0x1]
    %v2199 = vlaneseq
    %v2200 = vshrl.u32 %v2199, 7
    %v2201 = vsub.s32 0, %v2200
    %v2202 = vrot.slane %v2197, %v2201
    %2203 = vrot.lane.b32.xlu0 %v2202, 112
    %v2204 = vpop.permute.xlu0 %2203
    %2206 = vst.msk [vmem:[#allocation6 + $0x3] sm:$0x1] %vm2089, %v2204
    %v2207 = vld [vmem:[#allocation3 + $0x2] sm:$0x1]
    %v2209 = vlaneseq
    %v2210 = vshrl.u32 %v2209, 7
    %v2211 = vsub.s32 0, %v2210
    %v2212 = vrot.slane %v2207, %v2211
    %2213 = vrot.lane.b32.xlu0 %v2212, 64
    %v2214 = vpop.permute.xlu0 %2213
    %2216 = vst.msk [vmem:[#allocation4 + $0x4] sm:$0x1] %vm2089, %v2214
    %v2217 = vld [vmem:[#allocation3 + $0x8] sm:$0x1]
    %v2219 = vlaneseq
    %v2220 = vshrl.u32 %v2219, 7
    %v2221 = vsub.s32 0, %v2220
    %v2222 = vrot.slane %v2217, %v2221
    %2223 = vrot.lane.b32.xlu0 %v2222, 64
    %v2224 = vpop.permute.xlu0 %2223
    %2226 = vst.msk [vmem:[#allocation5 + $0x4] sm:$0x1] %vm2089, %v2224
    %v2227 = vld [vmem:[#allocation3 + $0xe] sm:$0x1]
    %v2229 = vlaneseq
    %v2230 = vshrl.u32 %v2229, 7
    %v2231 = vsub.s32 0, %v2230
    %v2232 = vrot.slane %v2227, %v2231
    %2233 = vrot.lane.b32.xlu0 %v2232, 64
    %v2234 = vpop.permute.xlu0 %2233
    %2236 = vst.msk [vmem:[#allocation6 + $0x4] sm:$0x1] %vm2089, %v2234
    %v2237 = vld [vmem:[#allocation3 + $0x2] sm:$0x5]
    %v2239 = vlaneseq
    %v2240 = vshrl.u32 %v2239, 7
    %v2241 = vsub.s32 0, %v2240
    %v2242 = vrot.slane %v2237, %v2241
    %v2243 = vlaneseq
    %v2244 = vshrl.u32 %v2243, 7
    %v2245 = vsub.s32 2, %v2244
    %v2246 = vrot.slane %v2237, %v2245
    %2247 = vrot.lane.b32.xlu0 %v2242, 16
    %v2248 = vpop.permute.xlu0 %2247
    %2249 = vrot.lane.b32.xlu0 %v2246, 16
    %v2250 = vpop.permute.xlu0 %2249
    %vm2251 = vcmask 130048
    %v2252 = vsel %vm2251, %v2248, %v2250
    %2254 = vst.msk [vmem:[#allocation4 + $0x5] sm:$0x1] %vm2089, %v2252
    %v2255 = vld [vmem:[#allocation3 + $0x8] sm:$0x5]
    %v2257 = vlaneseq
    %v2258 = vshrl.u32 %v2257, 7
    %v2259 = vsub.s32 0, %v2258
    %v2260 = vrot.slane %v2255, %v2259
    %v2261 = vlaneseq
    %v2262 = vshrl.u32 %v2261, 7
    %v2263 = vsub.s32 2, %v2262
    %v2264 = vrot.slane %v2255, %v2263
    %2265 = vrot.lane.b32.xlu0 %v2260, 16
    %v2266 = vpop.permute.xlu0 %2265
    %2267 = vrot.lane.b32.xlu0 %v2264, 16
    %v2268 = vpop.permute.xlu0 %2267
    %v2269 = vsel %vm2251, %v2266, %v2268
    %2271 = vst.msk [vmem:[#allocation5 + $0x5] sm:$0x1] %vm2089, %v2269
    %v2272 = vld [vmem:[#allocation3 + $0xe] sm:$0x5]
    %v2274 = vlaneseq
    %v2275 = vshrl.u32 %v2274, 7
    %v2276 = vsub.s32 0, %v2275
    %v2277 = vrot.slane %v2272, %v2276
    %v2278 = vlaneseq
    %v2279 = vshrl.u32 %v2278, 7
    %v2280 = vsub.s32 2, %v2279
    %v2281 = vrot.slane %v2272, %v2280
    %2282 = vrot.lane.b32.xlu0 %v2277, 16
    %v2283 = vpop.permute.xlu0 %2282
    %2284 = vrot.lane.b32.xlu0 %v2281, 16
    %v2285 = vpop.permute.xlu0 %2284
    %v2286 = vsel %vm2251, %v2283, %v2285
    %2288 = vst.msk [vmem:[#allocation6 + $0x5] sm:$0x1] %vm2089, %v2286
    %v2289 = vld [vmem:[#allocation3 + $0x4] sm:$0x1]
    %v2291 = vlaneseq
    %v2292 = vshrl.u32 %v2291, 7
    %v2293 = vsub.s32 0, %v2292
    %v2294 = vrot.slane %v2289, %v2293
    %2295 = vrot.lane.b32.xlu0 %v2294, 96
    %v2296 = vpop.permute.xlu0 %2295
    %2298 = vst.msk [vmem:[#allocation4 + $0x6] sm:$0x1] %vm2089, %v2296
    %v2299 = vld [vmem:[#allocation3 + $0xa] sm:$0x1]
    %v2301 = vlaneseq
    %v2302 = vshrl.u32 %v2301, 7
    %v2303 = vsub.s32 0, %v2302
    %v2304 = vrot.slane %v2299, %v2303
    %2305 = vrot.lane.b32.xlu0 %v2304, 96
    %v2306 = vpop.permute.xlu0 %2305
    %2308 = vst.msk [vmem:[#allocation5 + $0x6] sm:$0x1] %vm2089, %v2306
    %v2309 = vld [vmem:[#allocation3 + $0x10] sm:$0x1]
    %v2311 = vlaneseq
    %v2312 = vshrl.u32 %v2311, 7
    %v2313 = vsub.s32 0, %v2312
    %v2314 = vrot.slane %v2309, %v2313
    %2315 = vrot.lane.b32.xlu0 %v2314, 96
    %v2316 = vpop.permute.xlu0 %2315
    %2318 = vst.msk [vmem:[#allocation6 + $0x6] sm:$0x1] %vm2089, %v2316
    %v2319 = vld [vmem:[#allocation3 + $0x4] sm:$0x1]
    %v2321 = vlaneseq
    %v2322 = vshrl.u32 %v2321, 7
    %v2323 = vsub.s32 0, %v2322
    %v2324 = vrot.slane %v2319, %v2323
    %2325 = vrot.lane.b32.xlu0 %v2324, 48
    %v2326 = vpop.permute.xlu0 %2325
    %2328 = vst.msk [vmem:[#allocation4 + $0x7] sm:$0x1] %vm2089, %v2326
    %v2329 = vld [vmem:[#allocation3 + $0xa] sm:$0x1]
    %v2331 = vlaneseq
    %v2332 = vshrl.u32 %v2331, 7
    %v2333 = vsub.s32 0, %v2332
    %v2334 = vrot.slane %v2329, %v2333
    %2335 = vrot.lane.b32.xlu0 %v2334, 48
    %v2336 = vpop.permute.xlu0 %2335
    %2338 = vst.msk [vmem:[#allocation5 + $0x7] sm:$0x1] %vm2089, %v2336
    %v2339 = vld [vmem:[#allocation3 + $0x10] sm:$0x1]
    %v2341 = vlaneseq
    %v2342 = vshrl.u32 %v2341, 7
    %v2343 = vsub.s32 0, %v2342
    %v2344 = vrot.slane %v2339, %v2343
    %2345 = vrot.lane.b32.xlu0 %v2344, 48
    %v2346 = vpop.permute.xlu0 %2345
    %2348 = vst.msk [vmem:[#allocation6 + $0x7] sm:$0x1] %vm2089, %v2346
    %v2349 = vld [vmem:[#allocation3 + $0x1] sm:$0x1]
    %2350 = vst.msk [vmem:[#allocation4 + $0x8] sm:$0x1] %vm2089, %v2349
    %v2351 = vld [vmem:[#allocation3 + $0x7] sm:$0x1]
    %2352 = vst.msk [vmem:[#allocation5 + $0x8] sm:$0x1] %vm2089, %v2351
    %v2353 = vld [vmem:[#allocation3 + $0xd] sm:$0x1]
    %2354 = vst.msk [vmem:[#allocation6 + $0x8] sm:$0x1] %vm2089, %v2353
    %v2355 = vld [vmem:[#allocation3 + $0x1] sm:$0x1]
    %v2357 = vlaneseq
    %v2358 = vshrl.u32 %v2357, 7
    %v2359 = vsub.s32 0, %v2358
    %v2360 = vrot.slane %v2355, %v2359
    %2361 = vrot.lane.b32.xlu0 %v2360, 80
    %v2362 = vpop.permute.xlu0 %2361
    %2364 = vst.msk [vmem:[#allocation4 + $0x9] sm:$0x1] %vm2089, %v2362
    %v2365 = vld [vmem:[#allocation3 + $0x7] sm:$0x1]
    %v2367 = vlaneseq
    %v2368 = vshrl.u32 %v2367, 7
    %v2369 = vsub.s32 0, %v2368
    %v2370 = vrot.slane %v2365, %v2369
    %2371 = vrot.lane.b32.xlu0 %v2370, 80
    %v2372 = vpop.permute.xlu0 %2371
    %2374 = vst.msk [vmem:[#allocation5 + $0x9] sm:$0x1] %vm2089, %v2372
    %v2375 = vld [vmem:[#allocation3 + $0xd] sm:$0x1]
    %v2377 = vlaneseq
    %v2378 = vshrl.u32 %v2377, 7
    %v2379 = vsub.s32 0, %v2378
    %v2380 = vrot.slane %v2375, %v2379
    %2381 = vrot.lane.b32.xlu0 %v2380, 80
    %v2382 = vpop.permute.xlu0 %2381
    %2384 = vst.msk [vmem:[#allocation6 + $0x9] sm:$0x1] %vm2089, %v2382
    %v2385 = vld [vmem:[#allocation3 + $0x1] sm:$0x5]
    %v2387 = vlaneseq
    %v2388 = vshrl.u32 %v2387, 7
    %v2389 = vsub.s32 0, %v2388
    %v2390 = vrot.slane %v2385, %v2389
    %v2391 = vlaneseq
    %v2392 = vshrl.u32 %v2391, 7
    %v2393 = vsub.s32 2, %v2392
    %v2394 = vrot.slane %v2385, %v2393
    %2395 = vrot.lane.b32.xlu0 %v2390, 32
    %v2396 = vpop.permute.xlu0 %2395
    %2397 = vrot.lane.b32.xlu0 %v2394, 32
    %v2398 = vpop.permute.xlu0 %2397
    %v2399 = vsel %vm2139, %v2396, %v2398
    %2401 = vst.msk [vmem:[#allocation4 + $0xa] sm:$0x1] %vm2089, %v2399
    %v2402 = vld [vmem:[#allocation3 + $0x7] sm:$0x5]
    %v2404 = vlaneseq
    %v2405 = vshrl.u32 %v2404, 7
    %v2406 = vsub.s32 0, %v2405
    %v2407 = vrot.slane %v2402, %v2406
    %v2408 = vlaneseq
    %v2409 = vshrl.u32 %v2408, 7
    %v2410 = vsub.s32 2, %v2409
    %v2411 = vrot.slane %v2402, %v2410
    %2412 = vrot.lane.b32.xlu0 %v2407, 32
    %v2413 = vpop.permute.xlu0 %2412
    %2414 = vrot.lane.b32.xlu0 %v2411, 32
    %v2415 = vpop.permute.xlu0 %2414
    %v2416 = vsel %vm2139, %v2413, %v2415
    %2418 = vst.msk [vmem:[#allocation5 + $0xa] sm:$0x1] %vm2089, %v2416
    %v2419 = vld [vmem:[#allocation3 + $0xd] sm:$0x5]
    %v2421 = vlaneseq
    %v2422 = vshrl.u32 %v2421, 7
    %v2423 = vsub.s32 0, %v2422
    %v2424 = vrot.slane %v2419, %v2423
    %v2425 = vlaneseq
    %v2426 = vshrl.u32 %v2425, 7
    %v2427 = vsub.s32 2, %v2426
    %v2428 = vrot.slane %v2419, %v2427
    %2429 = vrot.lane.b32.xlu0 %v2424, 32
    %v2430 = vpop.permute.xlu0 %2429
    %2431 = vrot.lane.b32.xlu0 %v2428, 32
    %v2432 = vpop.permute.xlu0 %2431
    %v2433 = vsel %vm2139, %v2430, %v2432
    %2435 = vst.msk [vmem:[#allocation6 + $0xa] sm:$0x1] %vm2089, %v2433
    %v2436 = vld [vmem:[#allocation3 + $0x3] sm:$0x1]
    %v2438 = vlaneseq
    %v2439 = vshrl.u32 %v2438, 7
    %v2440 = vsub.s32 0, %v2439
    %v2441 = vrot.slane %v2436, %v2440
    %2442 = vrot.lane.b32.xlu0 %v2441, 112
    %v2443 = vpop.permute.xlu0 %2442
    %2445 = vst.msk [vmem:[#allocation4 + $0xb] sm:$0x1] %vm2089, %v2443
    %v2446 = vld [vmem:[#allocation3 + $0x9] sm:$0x1]
    %v2448 = vlaneseq
    %v2449 = vshrl.u32 %v2448, 7
    %v2450 = vsub.s32 0, %v2449
    %v2451 = vrot.slane %v2446, %v2450
    %2452 = vrot.lane.b32.xlu0 %v2451, 112
    %v2453 = vpop.permute.xlu0 %2452
    %2455 = vst.msk [vmem:[#allocation5 + $0xb] sm:$0x1] %vm2089, %v2453
    %v2456 = vld [vmem:[#allocation3 + $0xf] sm:$0x1]
    %v2458 = vlaneseq
    %v2459 = vshrl.u32 %v2458, 7
    %v2460 = vsub.s32 0, %v2459
    %v2461 = vrot.slane %v2456, %v2460
    %2462 = vrot.lane.b32.xlu0 %v2461, 112
    %v2463 = vpop.permute.xlu0 %2462
    %2465 = vst.msk [vmem:[#allocation6 + $0xb] sm:$0x1] %vm2089, %v2463
    %v2466 = vld [vmem:[#allocation3 + $0x3] sm:$0x1]
    %v2468 = vlaneseq
    %v2469 = vshrl.u32 %v2468, 7
    %v2470 = vsub.s32 0, %v2469
    %v2471 = vrot.slane %v2466, %v2470
    %2472 = vrot.lane.b32.xlu0 %v2471, 64
    %v2473 = vpop.permute.xlu0 %2472
    %2475 = vst.msk [vmem:[#allocation4 + $0xc] sm:$0x1] %vm2089, %v2473
    %v2476 = vld [vmem:[#allocation3 + $0x9] sm:$0x1]
    %v2478 = vlaneseq
    %v2479 = vshrl.u32 %v2478, 7
    %v2480 = vsub.s32 0, %v2479
    %v2481 = vrot.slane %v2476, %v2480
    %2482 = vrot.lane.b32.xlu0 %v2481, 64
    %v2483 = vpop.permute.xlu0 %2482
    %2485 = vst.msk [vmem:[#allocation5 + $0xc] sm:$0x1] %vm2089, %v2483
    %v2486 = vld [vmem:[#allocation3 + $0xf] sm:$0x1]
    %v2488 = vlaneseq
    %v2489 = vshrl.u32 %v2488, 7
    %v2490 = vsub.s32 0, %v2489
    %v2491 = vrot.slane %v2486, %v2490
    %2492 = vrot.lane.b32.xlu0 %v2491, 64
    %v2493 = vpop.permute.xlu0 %2492
    %2495 = vst.msk [vmem:[#allocation6 + $0xc] sm:$0x1] %vm2089, %v2493
    %v2496 = vld [vmem:[#allocation3 + $0x3] sm:$0x5]
    %v2498 = vlaneseq
    %v2499 = vshrl.u32 %v2498, 7
    %v2500 = vsub.s32 0, %v2499
    %v2501 = vrot.slane %v2496, %v2500
    %v2502 = vlaneseq
    %v2503 = vshrl.u32 %v2502, 7
    %v2504 = vsub.s32 2, %v2503
    %v2505 = vrot.slane %v2496, %v2504
    %2506 = vrot.lane.b32.xlu0 %v2501, 16
    %v2507 = vpop.permute.xlu0 %2506
    %2508 = vrot.lane.b32.xlu0 %v2505, 16
    %v2509 = vpop.permute.xlu0 %2508
    %v2510 = vsel %vm2251, %v2507, %v2509
    %2512 = vst.msk [vmem:[#allocation4 + $0xd] sm:$0x1] %vm2089, %v2510
    %v2513 = vld [vmem:[#allocation3 + $0x9] sm:$0x5]
    %v2515 = vlaneseq
    %v2516 = vshrl.u32 %v2515, 7
    %v2517 = vsub.s32 0, %v2516
    %v2518 = vrot.slane %v2513, %v2517
    %v2519 = vlaneseq
    %v2520 = vshrl.u32 %v2519, 7
    %v2521 = vsub.s32 2, %v2520
    %v2522 = vrot.slane %v2513, %v2521
    %2523 = vrot.lane.b32.xlu0 %v2518, 16
    %v2524 = vpop.permute.xlu0 %2523
    %2525 = vrot.lane.b32.xlu0 %v2522, 16
    %v2526 = vpop.permute.xlu0 %2525
    %v2527 = vsel %vm2251, %v2524, %v2526
    %2529 = vst.msk [vmem:[#allocation5 + $0xd] sm:$0x1] %vm2089, %v2527
    %v2530 = vld [vmem:[#allocation3 + $0xf] sm:$0x5]
    %v2532 = vlaneseq
    %v2533 = vshrl.u32 %v2532, 7
    %v2534 = vsub.s32 0, %v2533
    %v2535 = vrot.slane %v2530, %v2534
    %v2536 = vlaneseq
    %v2537 = vshrl.u32 %v2536, 7
    %v2538 = vsub.s32 2, %v2537
    %v2539 = vrot.slane %v2530, %v2538
    %2540 = vrot.lane.b32.xlu0 %v2535, 16
    %v2541 = vpop.permute.xlu0 %2540
    %2542 = vrot.lane.b32.xlu0 %v2539, 16
    %v2543 = vpop.permute.xlu0 %2542
    %v2544 = vsel %vm2251, %v2541, %v2543
    %2546 = vst.msk [vmem:[#allocation6 + $0xd] sm:$0x1] %vm2089, %v2544
    %v2547 = vld [vmem:[#allocation3 + $0x5] sm:$0x1]
    %v2549 = vlaneseq
    %v2550 = vshrl.u32 %v2549, 7
    %v2551 = vsub.s32 0, %v2550
    %v2552 = vrot.slane %v2547, %v2551
    %2553 = vrot.lane.b32.xlu0 %v2552, 96
    %v2554 = vpop.permute.xlu0 %2553
    %2556 = vst.msk [vmem:[#allocation4 + $0xe] sm:$0x1] %vm2089, %v2554
    %v2557 = vld [vmem:[#allocation3 + $0xb] sm:$0x1]
    %v2559 = vlaneseq
    %v2560 = vshrl.u32 %v2559, 7
    %v2561 = vsub.s32 0, %v2560
    %v2562 = vrot.slane %v2557, %v2561
    %2563 = vrot.lane.b32.xlu0 %v2562, 96
    %v2564 = vpop.permute.xlu0 %2563
    %2566 = vst.msk [vmem:[#allocation5 + $0xe] sm:$0x1] %vm2089, %v2564
    %v2567 = vld [vmem:[#allocation3 + $0x11] sm:$0x1]
    %v2569 = vlaneseq
    %v2570 = vshrl.u32 %v2569, 7
    %v2571 = vsub.s32 0, %v2570
    %v2572 = vrot.slane %v2567, %v2571
    %2573 = vrot.lane.b32.xlu0 %v2572, 96
    %v2574 = vpop.permute.xlu0 %2573
    %2576 = vst.msk [vmem:[#allocation6 + $0xe] sm:$0x1] %vm2089, %v2574
    %v2577 = vld [vmem:[#allocation3 + $0x5] sm:$0x1]
    %v2579 = vlaneseq
    %v2580 = vshrl.u32 %v2579, 7
    %v2581 = vsub.s32 0, %v2580
    %v2582 = vrot.slane %v2577, %v2581
    %2583 = vrot.lane.b32.xlu0 %v2582, 48
    %v2584 = vpop.permute.xlu0 %2583
    %2586 = vst.msk [vmem:[#allocation4 + $0xf] sm:$0x1] %vm2089, %v2584
    %v2587 = vld [vmem:[#allocation3 + $0xb] sm:$0x1]
    %v2589 = vlaneseq
    %v2590 = vshrl.u32 %v2589, 7
    %v2591 = vsub.s32 0, %v2590
    %v2592 = vrot.slane %v2587, %v2591
    %2593 = vrot.lane.b32.xlu0 %v2592, 48
    %v2594 = vpop.permute.xlu0 %2593
    %2596 = vst.msk [vmem:[#allocation5 + $0xf] sm:$0x1] %vm2089, %v2594
    %v2597 = vld [vmem:[#allocation3 + $0x11] sm:$0x1]
    %v2599 = vlaneseq
    %v2600 = vshrl.u32 %v2599, 7
    %v2601 = vsub.s32 0, %v2600
    %v2602 = vrot.slane %v2597, %v2601
    %2603 = vrot.lane.b32.xlu0 %v2602, 48
    %v2604 = vpop.permute.xlu0 %2603
    %2606 = vst.msk [vmem:[#allocation6 + $0xf] sm:$0x1] %vm2089, %v2604
    %v2607 = vld [vmem:[#allocation4] sm:$0xff]
    %v2608 = vld [vmem:[#allocation4 + $0x8] sm:$0xff]
    %v2609 = vpack.c.bf16 %v2608, %v2607
    %v2610 = vld [vmem:[#allocation5] sm:$0xff]
    %v2611 = vld [vmem:[#allocation5 + $0x8] sm:$0xff]
    %v2612 = vpack.c.bf16 %v2611, %v2610
    %v2613 = vld [vmem:[#allocation6] sm:$0xff]
    %v2614 = vld [vmem:[#allocation6 + $0x8] sm:$0xff]
    %v2615 = vpack.c.bf16 %v2614, %v2613
    %vm2616 = vcmask 392192
    %v2618 = vsel %vm2616, %v2609, 0
    %v2621 = vsel %vm2616, %v2612, 0
    %2623 = vmatprep.subr.bf16.mxu0 0
    %2624 = vmatpush1.bf16.xpose.msra.mxu0 %v2621
    %2625 = vmatprep.subr.bf16.mxu0 0
    %2626 = vmatpush1.bf16.xpose.msra.mxu0 0
    %2627 = vmatprep.subr.bf16.mxu0 0
    %2628 = vmatpush1.bf16.xpose.msra.mxu0 0
    %2629 = vmatprep.subr.bf16.mxu0 0
    %2630 = vmatpush1.bf16.xpose.msra.mxu0 0
    %2631 = vmatprep.subr.bf16.mxu0 0
    %2632 = vmatpush1.bf16.xpose.msra.mxu0 0
    %2633 = vmatprep.subr.bf16.mxu0 0
    %2634 = vmatpush1.bf16.xpose.msra.mxu0 0
    %2635 = vmatprep.subr.bf16.mxu0 0
    %2636 = vmatpush1.bf16.xpose.msra.mxu0 0
    %2637 = vmatprep.subr.bf16.mxu0 0
    %2638 = vmatpush1.bf16.xpose.msra.mxu0 0
    %2639 = vmatprep.subr.bf16.mxu0 0
    %2640 = vmatpush1.bf16.xpose.msra.mxu0 0
    %2641 = vmatprep.subr.bf16.mxu0 0
    %2642 = vmatpush1.bf16.xpose.msra.mxu0 0
    %2643 = vmatprep.subr.bf16.mxu0 0
    %2644 = vmatpush1.bf16.xpose.msra.mxu0 0
    %2645 = vmatprep.subr.bf16.mxu0 0
    %2646 = vmatpush1.bf16.xpose.msra.mxu0 0
    %2647 = vmatprep.subr.bf16.mxu0 0
    %2648 = vmatpush1.bf16.xpose.msra.mxu0 0
    %2649 = vmatprep.subr.bf16.mxu0 0
    %2650 = vmatpush1.bf16.xpose.msra.mxu0 0
    %2651 = vmatprep.subr.bf16.mxu0 0
    %2652 = vmatpush1.bf16.xpose.msra.mxu0 0
    %2653 = vmatprep.subr.bf16.mxu0 0
    %2654 = vmatpush1.bf16.xpose.msra.mxu0 0
    %2655 = vmatprep.mubr.bf16.mxu0 0
    %2656 = vmatmul.mubr.bf16.gmra.mrb[0].mxu0 %v2618
    %v2657 = vpop.f32.mrb[0].mxu0
    %v2658 = vadd.f32 0.0, %v2657
    %v2659 = vpop.f32.mrb[0].mxu0
    %v2660 = vpop.f32.mrb[0].mxu0
    %v2661 = vadd.f32 0.0, %v2660
    %v2662 = vpop.f32.mrb[0].mxu0
    %2663 = vdwg.mxu0
    %v2664 = vmul.f32 %v2658, 0.05103104
    %v2665 = vmul.f32 %v2661, 0.05103104
    %v2666 = vsel %vm2251, %v2664, -inf
    %2667 = vmax.xlane.f32.xlu0 %v2666
    %v2668 = vpop.xlane.xlu0 %2667
    %v2669 = vsel %vm2251, %v2665, -inf
    %2670 = vmax.xlane.f32.xlu0 %v2669
    %v2671 = vpop.xlane.xlu0 %2670
    %v2672 = vsub.f32 %v2664, %v2668
    %v2673 = vsub.f32 %v2665, %v2671
    %v2674 = vmul.f32 %v2672, 1.442695
    %v2675 = vpow.pop %v2674
    %v2676 = vmul.f32 %v2673, 1.442695
    %v2677 = vpow.pop %v2676
    %v2678 = vsel %vm2251, %v2675, 0.0
    %2679 = vadd.xlane.f32.xlu0 %v2678
    %v2680 = vpop.xlane.xlu0 %2679
    %v2681 = vsel %vm2251, %v2677, 0.0
    %2682 = vadd.xlane.f32.xlu0 %v2681
    %v2683 = vpop.xlane.xlu0 %2682
    %v2684 = vrcp.pop %v2680
    %v2685 = vrcp.pop %v2683
    %v2686 = vmul.f32 %v2675, %v2684
    %v2687 = vmul.f32 %v2677, %v2685
    %v2688 = vpack.c.bf16 %v2687, %v2686
    %v2690 = vsel %vm2251, %v2688, 0
    %2692 = vmatprep.subr.bf16.mxu0 0
    %2693 = vmatpush1.bf16.msra.mxu0 %v2615
    %2694 = vmatprep.subr.bf16.mxu0 0
    %2695 = vmatpush1.bf16.msra.mxu0 0
    %2696 = vmatprep.subr.bf16.mxu0 0
    %2697 = vmatpush1.bf16.msra.mxu0 0
    %2698 = vmatprep.subr.bf16.mxu0 0
    %2699 = vmatpush1.bf16.msra.mxu0 0
    %2700 = vmatprep.subr.bf16.mxu0 0
    %2701 = vmatpush1.bf16.msra.mxu0 0
    %2702 = vmatprep.subr.bf16.mxu0 0
    %2703 = vmatpush1.bf16.msra.mxu0 0
    %2704 = vmatprep.subr.bf16.mxu0 0
    %2705 = vmatpush1.bf16.msra.mxu0 0
    %2706 = vmatprep.subr.bf16.mxu0 0
    %2707 = vmatpush1.bf16.msra.mxu0 0
    %2708 = vmatprep.subr.bf16.mxu0 0
    %2709 = vmatpush1.bf16.msra.mxu0 0
    %2710 = vmatprep.subr.bf16.mxu0 0
    %2711 = vmatpush1.bf16.msra.mxu0 0
    %2712 = vmatprep.subr.bf16.mxu0 0
    %2713 = vmatpush1.bf16.msra.mxu0 0
    %2714 = vmatprep.subr.bf16.mxu0 0
    %2715 = vmatpush1.bf16.msra.mxu0 0
    %2716 = vmatprep.subr.bf16.mxu0 0
    %2717 = vmatpush1.bf16.msra.mxu0 0
    %2718 = vmatprep.subr.bf16.mxu0 0
    %2719 = vmatpush1.bf16.msra.mxu0 0
    %2720 = vmatprep.subr.bf16.mxu0 0
    %2721 = vmatpush1.bf16.msra.mxu0 0
    %2722 = vmatprep.subr.bf16.mxu0 0
    %2723 = vmatpush1.bf16.msra.mxu0 0
    %2724 = vmatprep.mubr.bf16.mxu0 0
    %2725 = vmatmul.mubr.bf16.gmra.mrb[0].mxu0 %v2690
    %v2726 = vpop.f32.mrb[0].mxu0
    %v2727 = vadd.f32 0.0, %v2726
    %v2728 = vpop.f32.mrb[0].mxu0
    %v2729 = vpop.f32.mrb[0].mxu0
    %v2730 = vadd.f32 0.0, %v2729
    %v2731 = vpop.f32.mrb[0].mxu0
    %2732 = vdwg.mxu0
    %2733 = vst.msk [vmem:[#allocation4] sm:$0xff] %vm2616, %v2727
    %2734 = vst.msk [vmem:[#allocation4 + $0x8] sm:$0xff] %vm2616, %v2730
    %v2735 = vld [vmem:[#allocation4] sm:$0x1]
    %2736 = vst.msk [vmem:[#allocation7] sm:$0x1] %vm2089, %v2735
    %v2737 = vld [vmem:[#allocation4 + $0x1] sm:$0x1]
    %v2740 = vunpack.c.l.s4 1983009808
    %v2741 = vunpack.c.0.s8 %v2740
    %v2742 = vlaneseq
    %v2743 = vshrl.u32 %v2742, 7
    %v2744 = vsub.s32 %v2741, %v2743
    %v2745 = vrot.slane %v2737, %v2744
    %2746 = vrot.lane.b32.xlu0 %v2745, 48
    %v2747 = vpop.permute.xlu0 %2746
    %vm2749 = vcmask 778624
    %2750 = vst.msk [vmem:[#allocation7] sm:$0x1] %vm2749, %v2747
    %v2751 = vld [vmem:[#allocation4 + $0x2] sm:$0x1]
    %v2754 = vunpack.c.l.s4 1983009808
    %v2755 = vunpack.c.0.s8 %v2754
    %v2756 = vlaneseq
    %v2757 = vshrl.u32 %v2756, 7
    %v2758 = vsub.s32 %v2755, %v2757
    %v2759 = vrot.slane %v2751, %v2758
    %2760 = vrot.lane.b32.xlu0 %v2759, 96
    %v2761 = vpop.permute.xlu0 %2760
    %v2762 = vrot.slane %v2761, 6
    %vm2763 = vcmask 785408
    %v2764 = vsel %vm2763, %v2762, %v2761
    %vm2766 = vcmask 1041152
    %vm2767 = vcmask 124930
    %vm2768 = vmor %vm2767, %vm2766
    %2769 = vst.msk [vmem:[#allocation7] sm:$0x5] %vm2768, %v2764
    %v2770 = vld [vmem:[#allocation4 + $0x3] sm:$0x1]
    %v2773 = vunpack.c.l.s4 1983009808
    %v2774 = vunpack.c.0.s8 %v2773
    %v2775 = vlaneseq
    %v2776 = vshrl.u32 %v2775, 7
    %v2777 = vsub.s32 %v2774, %v2776
    %v2778 = vrot.slane %v2770, %v2777
    %2779 = vrot.lane.b32.xlu0 %v2778, 16
    %v2780 = vpop.permute.xlu0 %2779
    %vm2782 = vcmask 516224
    %2783 = vst.msk [vmem:[#allocation7 + $0x2] sm:$0x1] %vm2782, %v2780
    %v2784 = vld [vmem:[#allocation4 + $0x4] sm:$0x1]
    %v2787 = vunpack.c.l.s4 1983009808
    %v2788 = vunpack.c.0.s8 %v2787
    %v2789 = vlaneseq
    %v2790 = vshrl.u32 %v2789, 7
    %v2791 = vsub.s32 %v2788, %v2790
    %v2792 = vrot.slane %v2784, %v2791
    %2793 = vrot.lane.b32.xlu0 %v2792, 64
    %v2794 = vpop.permute.xlu0 %2793
    %vm2796 = vcmask 909824
    %2797 = vst.msk [vmem:[#allocation7 + $0x2] sm:$0x1] %vm2796, %v2794
    %v2798 = vld [vmem:[#allocation4 + $0x5] sm:$0x1]
    %v2801 = vunpack.c.l.s4 1983009808
    %v2802 = vunpack.c.0.s8 %v2801
    %v2803 = vlaneseq
    %v2804 = vshrl.u32 %v2803, 7
    %v2805 = vsub.s32 %v2802, %v2804
    %v2806 = vrot.slane %v2798, %v2805
    %2807 = vrot.lane.b32.xlu0 %v2806, 112
    %v2808 = vpop.permute.xlu0 %2807
    %v2809 = vrot.slane %v2808, 6
    %vm2810 = vcmask 916480
    %v2811 = vsel %vm2810, %v2809, %v2808
    %vm2813 = vcmask 1041280
    %vm2814 = vcmask 256002
    %vm2815 = vmor %vm2814, %vm2813
    %2816 = vst.msk [vmem:[#allocation7 + $0x2] sm:$0x5] %vm2815, %v2811
    %v2817 = vld [vmem:[#allocation4 + $0x6] sm:$0x1]
    %v2820 = vunpack.c.l.s4 1983009808
    %v2821 = vunpack.c.0.s8 %v2820
    %v2822 = vlaneseq
    %v2823 = vshrl.u32 %v2822, 7
    %v2824 = vsub.s32 %v2821, %v2823
    %v2825 = vrot.slane %v2817, %v2824
    %2826 = vrot.lane.b32.xlu0 %v2825, 32
    %v2827 = vpop.permute.xlu0 %2826
    %vm2829 = vcmask 647424
    %2830 = vst.msk [vmem:[#allocation7 + $0x4] sm:$0x1] %vm2829, %v2827
    %v2831 = vld [vmem:[#allocation4 + $0x7] sm:$0x1]
    %v2834 = vunpack.c.l.s4 1983009808
    %v2835 = vunpack.c.0.s8 %v2834
    %v2836 = vlaneseq
    %v2837 = vshrl.u32 %v2836, 7
    %v2838 = vsub.s32 %v2835, %v2837
    %v2839 = vrot.slane %v2831, %v2838
    %2840 = vrot.lane.b32.xlu0 %v2839, 80
    %v2841 = vpop.permute.xlu0 %2840
    %vm2843 = vcmask 1041024
    %2844 = vst.msk [vmem:[#allocation7 + $0x4] sm:$0x1] %vm2843, %v2841
    %v2845 = vld [vmem:[#allocation4 + $0x8] sm:$0x1]
    %2846 = vst.msk [vmem:[#allocation7 + $0x1] sm:$0x1] %vm2089, %v2845
    %v2847 = vld [vmem:[#allocation4 + $0x9] sm:$0x1]
    %v2850 = vunpack.c.l.s4 1983009808
    %v2851 = vunpack.c.0.s8 %v2850
    %v2852 = vlaneseq
    %v2853 = vshrl.u32 %v2852, 7
    %v2854 = vsub.s32 %v2851, %v2853
    %v2855 = vrot.slane %v2847, %v2854
    %2856 = vrot.lane.b32.xlu0 %v2855, 48
    %v2857 = vpop.permute.xlu0 %2856
    %2859 = vst.msk [vmem:[#allocation7 + $0x1] sm:$0x1] %vm2749, %v2857
    %v2860 = vld [vmem:[#allocation4 + $0xa] sm:$0x1]
    %v2863 = vunpack.c.l.s4 1983009808
    %v2864 = vunpack.c.0.s8 %v2863
    %v2865 = vlaneseq
    %v2866 = vshrl.u32 %v2865, 7
    %v2867 = vsub.s32 %v2864, %v2866
    %v2868 = vrot.slane %v2860, %v2867
    %2869 = vrot.lane.b32.xlu0 %v2868, 96
    %v2870 = vpop.permute.xlu0 %2869
    %v2871 = vrot.slane %v2870, 6
    %v2872 = vsel %vm2763, %v2871, %v2870
    %2874 = vst.msk [vmem:[#allocation7 + $0x1] sm:$0x5] %vm2768, %v2872
    %v2875 = vld [vmem:[#allocation4 + $0xb] sm:$0x1]
    %v2878 = vunpack.c.l.s4 1983009808
    %v2879 = vunpack.c.0.s8 %v2878
    %v2880 = vlaneseq
    %v2881 = vshrl.u32 %v2880, 7
    %v2882 = vsub.s32 %v2879, %v2881
    %v2883 = vrot.slane %v2875, %v2882
    %2884 = vrot.lane.b32.xlu0 %v2883, 16
    %v2885 = vpop.permute.xlu0 %2884
    %2887 = vst.msk [vmem:[#allocation7 + $0x3] sm:$0x1] %vm2782, %v2885
    %v2888 = vld [vmem:[#allocation4 + $0xc] sm:$0x1]
    %v2891 = vunpack.c.l.s4 1983009808
    %v2892 = vunpack.c.0.s8 %v2891
    %v2893 = vlaneseq
    %v2894 = vshrl.u32 %v2893, 7
    %v2895 = vsub.s32 %v2892, %v2894
    %v2896 = vrot.slane %v2888, %v2895
    %2897 = vrot.lane.b32.xlu0 %v2896, 64
    %v2898 = vpop.permute.xlu0 %2897
    %2900 = vst.msk [vmem:[#allocation7 + $0x3] sm:$0x1] %vm2796, %v2898
    %v2901 = vld [vmem:[#allocation4 + $0xd] sm:$0x1]
    %v2904 = vunpack.c.l.s4 1983009808
    %v2905 = vunpack.c.0.s8 %v2904
    %v2906 = vlaneseq
    %v2907 = vshrl.u32 %v2906, 7
    %v2908 = vsub.s32 %v2905, %v2907
    %v2909 = vrot.slane %v2901, %v2908
    %2910 = vrot.lane.b32.xlu0 %v2909, 112
    %v2911 = vpop.permute.xlu0 %2910
    %v2912 = vrot.slane %v2911, 6
    %v2913 = vsel %vm2810, %v2912, %v2911
    %2915 = vst.msk [vmem:[#allocation7 + $0x3] sm:$0x5] %vm2815, %v2913
    %v2916 = vld [vmem:[#allocation4 + $0xe] sm:$0x1]
    %v2919 = vunpack.c.l.s4 1983009808
    %v2920 = vunpack.c.0.s8 %v2919
    %v2921 = vlaneseq
    %v2922 = vshrl.u32 %v2921, 7
    %v2923 = vsub.s32 %v2920, %v2922
    %v2924 = vrot.slane %v2916, %v2923
    %2925 = vrot.lane.b32.xlu0 %v2924, 32
    %v2926 = vpop.permute.xlu0 %2925
    %2928 = vst.msk [vmem:[#allocation7 + $0x5] sm:$0x1] %vm2829, %v2926
    %v2929 = vld [vmem:[#allocation4 + $0xf] sm:$0x1]
    %v2932 = vunpack.c.l.s4 1983009808
    %v2933 = vunpack.c.0.s8 %v2932
    %v2934 = vlaneseq
    %v2935 = vshrl.u32 %v2934, 7
    %v2936 = vsub.s32 %v2933, %v2935
    %v2937 = vrot.slane %v2929, %v2936
    %2938 = vrot.lane.b32.xlu0 %v2937, 80
    %v2939 = vpop.permute.xlu0 %2938
    %2941 = vst.msk [vmem:[#allocation7 + $0x5] sm:$0x1] %vm2843, %v2939
    %v2942 = vld [vmem:[#allocation7] sm:$0x3f]
    %v2943 = vld [vmem:[#allocation11] sm:$0xff]
    %v2944 = vld [vmem:[#allocation11 + $0x8] sm:$0xff]
    %v2945 = vld [vmem:[#allocation11 + $0x10] sm:$0xff]
    %v2946 = vld [vmem:[#allocation11 + $0x18] sm:$0xff]
    %v2947 = vld [vmem:[#allocation11 + $0x20] sm:$0xff]
    %v2948 = vld [vmem:[#allocation11 + $0x28] sm:$0xff]
    %v2949 = vld [vmem:[#allocation11 + $0x30] sm:$0xff]
    %v2950 = vld [vmem:[#allocation11 + $0x38] sm:$0xff]
    %v2951 = vld [vmem:[#allocation11 + $0x40] sm:$0xff]
    %v2952 = vld [vmem:[#allocation11 + $0x48] sm:$0xff]
    %v2953 = vld [vmem:[#allocation11 + $0x50] sm:$0xff]
    %v2954 = vld [vmem:[#allocation11 + $0x58] sm:$0xff]
    %v2955 = vld [vmem:[#allocation11 + $0x60] sm:$0xff]
    %v2956 = vld [vmem:[#allocation11 + $0x68] sm:$0xff]
    %v2957 = vld [vmem:[#allocation11 + $0x70] sm:$0xff]
    %v2958 = vld [vmem:[#allocation11 + $0x78] sm:$0xff]
    %v2959 = vld [vmem:[#allocation11 + $0x80] sm:$0xff]
    %v2960 = vld [vmem:[#allocation11 + $0x88] sm:$0xff]
    %v2961 = vld [vmem:[#allocation11 + $0x90] sm:$0xff]
    %v2962 = vld [vmem:[#allocation11 + $0x98] sm:$0xff]
    %v2963 = vld [vmem:[#allocation11 + $0xa0] sm:$0xff]
    %v2964 = vld [vmem:[#allocation11 + $0xa8] sm:$0xff]
    %v2965 = vld [vmem:[#allocation11 + $0xb0] sm:$0xff]
    %v2966 = vld [vmem:[#allocation11 + $0xb8] sm:$0xff]
    %v2967 = vld [vmem:[#allocation11 + $0xc0] sm:$0xff]
    %v2968 = vld [vmem:[#allocation11 + $0xc8] sm:$0xff]
    %v2969 = vld [vmem:[#allocation11 + $0xd0] sm:$0xff]
    %v2970 = vld [vmem:[#allocation11 + $0xd8] sm:$0xff]
    %v2971 = vld [vmem:[#allocation11 + $0xe0] sm:$0xff]
    %v2972 = vld [vmem:[#allocation11 + $0xe8] sm:$0xff]
    %v2973 = vld [vmem:[#allocation11 + $0xf0] sm:$0xff]
    %v2974 = vld [vmem:[#allocation11 + $0xf8] sm:$0xff]
    %v2975 = vld [vmem:[#allocation11 + $0x100] sm:$0xff]
    %v2976 = vld [vmem:[#allocation11 + $0x108] sm:$0xff]
    %v2977 = vld [vmem:[#allocation11 + $0x110] sm:$0xff]
    %v2978 = vld [vmem:[#allocation11 + $0x118] sm:$0xff]
    %v2979 = vld [vmem:[#allocation11 + $0x120] sm:$0xff]
    %v2980 = vld [vmem:[#allocation11 + $0x128] sm:$0xff]
    %v2981 = vld [vmem:[#allocation11 + $0x130] sm:$0xff]
    %v2982 = vld [vmem:[#allocation11 + $0x138] sm:$0xff]
    %v2983 = vld [vmem:[#allocation11 + $0x140] sm:$0xff]
    %v2984 = vld [vmem:[#allocation11 + $0x148] sm:$0xff]
    %v2985 = vld [vmem:[#allocation11 + $0x150] sm:$0xff]
    %v2986 = vld [vmem:[#allocation11 + $0x158] sm:$0xff]
    %v2987 = vld [vmem:[#allocation11 + $0x160] sm:$0xff]
    %v2988 = vld [vmem:[#allocation11 + $0x168] sm:$0xff]
    %v2989 = vld [vmem:[#allocation11 + $0x170] sm:$0xff]
    %v2990 = vld [vmem:[#allocation11 + $0x178] sm:$0xff]
    %v2991 = vld [vmem:[#allocation11 + $0x180] sm:$0xff]
    %v2992 = vld [vmem:[#allocation11 + $0x188] sm:$0xff]
    %v2993 = vld [vmem:[#allocation11 + $0x190] sm:$0xff]
    %v2994 = vld [vmem:[#allocation11 + $0x198] sm:$0xff]
    %v2995 = vld [vmem:[#allocation11 + $0x1a0] sm:$0xff]
    %v2996 = vld [vmem:[#allocation11 + $0x1a8] sm:$0xff]
    %v2997 = vld [vmem:[#allocation11 + $0x1b0] sm:$0xff]
    %v2998 = vld [vmem:[#allocation11 + $0x1b8] sm:$0xff]
    %v2999 = vld [vmem:[#allocation11 + $0x1c0] sm:$0xff]
    %v3000 = vld [vmem:[#allocation11 + $0x1c8] sm:$0xff]
    %v3001 = vld [vmem:[#allocation11 + $0x1d0] sm:$0xff]
    %v3002 = vld [vmem:[#allocation11 + $0x1d8] sm:$0xff]
    %v3003 = vld [vmem:[#allocation11 + $0x1e0] sm:$0xff]
    %v3004 = vld [vmem:[#allocation11 + $0x1e8] sm:$0xff]
    %v3005 = vld [vmem:[#allocation11 + $0x1f0] sm:$0xff]
    %v3006 = vld [vmem:[#allocation11 + $0x1f8] sm:$0xff]
    %v3007 = vld [vmem:[#allocation11 + $0x200] sm:$0xff]
    %v3008 = vld [vmem:[#allocation11 + $0x208] sm:$0xff]
    %v3009 = vld [vmem:[#allocation11 + $0x210] sm:$0xff]
    %v3010 = vld [vmem:[#allocation11 + $0x218] sm:$0xff]
    %v3011 = vld [vmem:[#allocation11 + $0x220] sm:$0xff]
    %v3012 = vld [vmem:[#allocation11 + $0x228] sm:$0xff]
    %v3013 = vld [vmem:[#allocation11 + $0x230] sm:$0xff]
    %v3014 = vld [vmem:[#allocation11 + $0x238] sm:$0xff]
    %v3015 = vld [vmem:[#allocation11 + $0x240] sm:$0xff]
    %v3016 = vld [vmem:[#allocation11 + $0x248] sm:$0xff]
    %v3017 = vld [vmem:[#allocation11 + $0x250] sm:$0xff]
    %v3018 = vld [vmem:[#allocation11 + $0x258] sm:$0xff]
    %v3019 = vld [vmem:[#allocation11 + $0x260] sm:$0xff]
    %v3020 = vld [vmem:[#allocation11 + $0x268] sm:$0xff]
    %v3021 = vld [vmem:[#allocation11 + $0x270] sm:$0xff]
    %v3022 = vld [vmem:[#allocation11 + $0x278] sm:$0xff]
    %v3023 = vld [vmem:[#allocation11 + $0x280] sm:$0xff]
    %v3024 = vld [vmem:[#allocation11 + $0x288] sm:$0xff]
    %v3025 = vld [vmem:[#allocation11 + $0x290] sm:$0xff]
    %v3026 = vld [vmem:[#allocation11 + $0x298] sm:$0xff]
    %v3027 = vld [vmem:[#allocation11 + $0x2a0] sm:$0xff]
    %v3028 = vld [vmem:[#allocation11 + $0x2a8] sm:$0xff]
    %v3029 = vld [vmem:[#allocation11 + $0x2b0] sm:$0xff]
    %v3030 = vld [vmem:[#allocation11 + $0x2b8] sm:$0xff]
    %v3031 = vld [vmem:[#allocation11 + $0x2c0] sm:$0xff]
    %v3032 = vld [vmem:[#allocation11 + $0x2c8] sm:$0xff]
    %v3033 = vld [vmem:[#allocation11 + $0x2d0] sm:$0xff]
    %v3034 = vld [vmem:[#allocation11 + $0x2d8] sm:$0xff]
    %v3035 = vld [vmem:[#allocation11 + $0x2e0] sm:$0xff]
    %v3036 = vld [vmem:[#allocation11 + $0x2e8] sm:$0xff]
    %v3037 = vld [vmem:[#allocation11 + $0x2f0] sm:$0xff]
    %v3038 = vld [vmem:[#allocation11 + $0x2f8] sm:$0xff]
    %v3039 = vld [vmem:[#allocation11 + $0x300] sm:$0xff]
    %v3040 = vld [vmem:[#allocation11 + $0x308] sm:$0xff]
    %v3041 = vld [vmem:[#allocation11 + $0x310] sm:$0xff]
    %v3042 = vld [vmem:[#allocation11 + $0x318] sm:$0xff]
    %v3043 = vld [vmem:[#allocation11 + $0x320] sm:$0xff]
    %v3044 = vld [vmem:[#allocation11 + $0x328] sm:$0xff]
    %v3045 = vld [vmem:[#allocation11 + $0x330] sm:$0xff]
    %v3046 = vld [vmem:[#allocation11 + $0x338] sm:$0xff]
    %v3047 = vld [vmem:[#allocation11 + $0x340] sm:$0xff]
    %v3048 = vld [vmem:[#allocation11 + $0x348] sm:$0xff]
    %v3049 = vld [vmem:[#allocation11 + $0x350] sm:$0xff]
    %v3050 = vld [vmem:[#allocation11 + $0x358] sm:$0xff]
    %v3051 = vld [vmem:[#allocation11 + $0x360] sm:$0xff]
    %v3052 = vld [vmem:[#allocation11 + $0x368] sm:$0xff]
    %v3053 = vld [vmem:[#allocation11 + $0x370] sm:$0xff]
    %v3054 = vld [vmem:[#allocation11 + $0x378] sm:$0xff]
    %v3055 = vld [vmem:[#allocation11 + $0x380] sm:$0xff]
    %v3056 = vld [vmem:[#allocation11 + $0x388] sm:$0xff]
    %v3057 = vld [vmem:[#allocation11 + $0x390] sm:$0xff]
    %v3058 = vld [vmem:[#allocation11 + $0x398] sm:$0xff]
    %v3059 = vld [vmem:[#allocation11 + $0x3a0] sm:$0xff]
    %v3060 = vld [vmem:[#allocation11 + $0x3a8] sm:$0xff]
    %v3061 = vld [vmem:[#allocation11 + $0x3b0] sm:$0xff]
    %v3062 = vld [vmem:[#allocation11 + $0x3b8] sm:$0xff]
    %v3063 = vld [vmem:[#allocation11 + $0x3c0] sm:$0xff]
    %v3064 = vld [vmem:[#allocation11 + $0x3c8] sm:$0xff]
    %v3065 = vld [vmem:[#allocation11 + $0x3d0] sm:$0xff]
    %v3066 = vld [vmem:[#allocation11 + $0x3d8] sm:$0xff]
    %v3067 = vld [vmem:[#allocation11 + $0x3e0] sm:$0xff]
    %v3068 = vld [vmem:[#allocation11 + $0x3e8] sm:$0xff]
    %v3069 = vld [vmem:[#allocation11 + $0x3f0] sm:$0xff]
    %v3070 = vld [vmem:[#allocation11 + $0x3f8] sm:$0xff]
    %v3071 = vld [vmem:[#allocation11 + $0x400] sm:$0xff]
    %v3072 = vld [vmem:[#allocation11 + $0x408] sm:$0xff]
    %v3073 = vld [vmem:[#allocation11 + $0x410] sm:$0xff]
    %v3074 = vld [vmem:[#allocation11 + $0x418] sm:$0xff]
    %v3075 = vld [vmem:[#allocation11 + $0x420] sm:$0xff]
    %v3076 = vld [vmem:[#allocation11 + $0x428] sm:$0xff]
    %v3077 = vld [vmem:[#allocation11 + $0x430] sm:$0xff]
    %v3078 = vld [vmem:[#allocation11 + $0x438] sm:$0xff]
    %v3079 = vld [vmem:[#allocation11 + $0x440] sm:$0xff]
    %v3080 = vld [vmem:[#allocation11 + $0x448] sm:$0xff]
    %v3081 = vld [vmem:[#allocation11 + $0x450] sm:$0xff]
    %v3082 = vld [vmem:[#allocation11 + $0x458] sm:$0xff]
    %v3083 = vld [vmem:[#allocation11 + $0x460] sm:$0xff]
    %v3084 = vld [vmem:[#allocation11 + $0x468] sm:$0xff]
    %v3085 = vld [vmem:[#allocation11 + $0x470] sm:$0xff]
    %v3086 = vld [vmem:[#allocation11 + $0x478] sm:$0xff]
    %v3088 = vcombine.high %v2942, %v2942
    %v3090 = vunpack.c.l.s4 1983009808
    %v3091 = vunpack.c.0.s8 %v3090
    %v3092 = vlaneseq
    %v3093 = vshrl.u32 %v3092, 7
    %v3094 = vsub.s32 %v3091, %v3093
    %v3095 = vrot.slane %v2942, %v3094
    %v3097 = vunpack.c.l.s4 1983009808
    %v3098 = vunpack.c.0.s8 %v3097
    %v3099 = vlaneseq
    %v3100 = vshrl.u32 %v3099, 7
    %v3101 = vsub.s32 %v3098, %v3100
    %v3102 = vrot.slane %v3088, %v3101
    %v3103 = vcombine.high %v3095, %v3095
    %3107 = vmatprep.subr.mxu0 %v2944
    %3108 = vmatpush1.msra.mxu0 %v2943
    %3109 = vmatprep.subr.mxu0 %v2947
    %3110 = vmatpush1.msra.mxu0 %v2946
    %3111 = vmatprep.subr.mxu0 %v2950
    %3112 = vmatpush1.msra.mxu0 %v2949
    %3113 = vmatprep.subr.mxu0 %v2953
    %3114 = vmatpush1.msra.mxu0 %v2952
    %3115 = vmatprep.subr.mxu0 %v2956
    %3116 = vmatpush1.msra.mxu0 %v2955
    %3117 = vmatprep.subr.mxu0 %v2959
    %3118 = vmatpush1.msra.mxu0 %v2958
    %3119 = vmatprep.subr.mxu0 %v2962
    %3120 = vmatpush1.msra.mxu0 %v2961
    %3121 = vmatprep.subr.mxu0 %v2965
    %3122 = vmatpush1.msra.mxu0 %v2964
    %3123 = vmatprep.subr.mxu0 %v2968
    %3124 = vmatpush1.msra.mxu0 %v2967
    %3125 = vmatprep.subr.mxu0 %v2971
    %3126 = vmatpush1.msra.mxu0 %v2970
    %3127 = vmatprep.subr.mxu0 %v2974
    %3128 = vmatpush1.msra.mxu0 %v2973
    %3129 = vmatprep.subr.mxu0 %v2977
    %3130 = vmatpush1.msra.mxu0 %v2976
    %3131 = vmatprep.subr.mxu0 %v2980
    %3132 = vmatpush1.msra.mxu0 %v2979
    %3133 = vmatprep.subr.mxu0 %v2983
    %3134 = vmatpush1.msra.mxu0 %v2982
    %3135 = vmatprep.subr.mxu0 %v2986
    %3136 = vmatpush1.msra.mxu0 %v2985
    %3137 = vmatprep.subr.mxu0 %v2989
    %3138 = vmatpush1.msra.mxu0 %v2988
    %3139 = vmatprep.subr.mxu0 %v2992
    %3140 = vmatpush1.msra.mxu0 %v2991
    %3141 = vmatprep.subr.mxu0 %v2995
    %3142 = vmatpush1.msra.mxu0 %v2994
    %3143 = vmatprep.subr.mxu0 %v2998
    %3144 = vmatpush1.msra.mxu0 %v2997
    %3145 = vmatprep.subr.mxu0 %v3001
    %3146 = vmatpush1.msra.mxu0 %v3000
    %3147 = vmatprep.subr.mxu0 %v3004
    %3148 = vmatpush1.msra.mxu0 %v3003
    %3149 = vmatprep.subr.mxu0 %v3007
    %3150 = vmatpush1.msra.mxu0 %v3006
    %3151 = vmatprep.subr.mxu0 %v3010
    %3152 = vmatpush1.msra.mxu0 %v3009
    %3153 = vmatprep.subr.mxu0 %v3013
    %3154 = vmatpush1.msra.mxu0 %v3012
    %3155 = vmatprep.subr.mxu0 %v3016
    %3156 = vmatpush1.msra.mxu0 %v3015
    %3157 = vmatprep.subr.mxu0 %v3019
    %3158 = vmatpush1.msra.mxu0 %v3018
    %3159 = vmatprep.subr.mxu0 %v3022
    %3160 = vmatpush1.msra.mxu0 %v3021
    %3161 = vmatprep.subr.mxu0 %v3025
    %3162 = vmatpush1.msra.mxu0 %v3024
    %3163 = vmatprep.subr.mxu0 %v3028
    %3164 = vmatpush1.msra.mxu0 %v3027
    %3165 = vmatprep.subr.mxu0 %v3031
    %3166 = vmatpush1.msra.mxu0 %v3030
    %3167 = vmatprep.subr.mxu0 %v3034
    %3168 = vmatpush1.msra.mxu0 %v3033
    %3169 = vmatprep.subr.mxu0 %v3037
    %3170 = vmatpush1.msra.mxu0 %v3036
    %3171 = vmatprep.mubr.f32.mxu0 %v3103
    %3172 = vmatmul.mubr.f32.gmra.mrb[0].mxu0 %v3095
    %v3173 = vpop.f32.mrb[0].mxu0
    %v3174 = vadd.f32 0.0, %v3173
    %v3175 = vpop.f32.mrb[0].mxu0
    %v3176 = vadd.f32 0.0, %v3175
    %3177 = vdwg.mxu0
    %3178 = vmatprep.subr.mxu0 %v3040
    %3179 = vmatpush1.msra.mxu0 %v3039
    %3180 = vmatprep.subr.mxu0 %v3043
    %3181 = vmatpush1.msra.mxu0 %v3042
    %3182 = vmatprep.subr.mxu0 %v3046
    %3183 = vmatpush1.msra.mxu0 %v3045
    %3184 = vmatprep.subr.mxu0 %v3049
    %3185 = vmatpush1.msra.mxu0 %v3048
    %3186 = vmatprep.subr.mxu0 %v3052
    %3187 = vmatpush1.msra.mxu0 %v3051
    %3188 = vmatprep.subr.mxu0 %v3055
    %3189 = vmatpush1.msra.mxu0 %v3054
    %3190 = vmatprep.subr.mxu0 %v3058
    %3191 = vmatpush1.msra.mxu0 %v3057
    %3192 = vmatprep.subr.mxu0 %v3061
    %3193 = vmatpush1.msra.mxu0 %v3060
    %3194 = vmatprep.subr.mxu0 %v3064
    %3195 = vmatpush1.msra.mxu0 %v3063
    %3196 = vmatprep.subr.mxu0 %v3067
    %3197 = vmatpush1.msra.mxu0 %v3066
    %3198 = vmatprep.subr.mxu0 %v3070
    %3199 = vmatpush1.msra.mxu0 %v3069
    %3200 = vmatprep.subr.mxu0 %v3073
    %3201 = vmatpush1.msra.mxu0 %v3072
    %3202 = vmatprep.subr.mxu0 %v3076
    %3203 = vmatpush1.msra.mxu0 %v3075
    %3204 = vmatprep.subr.mxu0 %v3079
    %3205 = vmatpush1.msra.mxu0 %v3078
    %3206 = vmatprep.subr.mxu0 %v3082
    %3207 = vmatpush1.msra.mxu0 %v3081
    %3208 = vmatprep.subr.mxu0 %v3085
    %3209 = vmatpush1.msra.mxu0 %v3084
    %3210 = vmatprep.subr.mxu0 0.0
    %3211 = vmatpush1.msra.mxu0 0.0
    %3212 = vmatprep.subr.mxu0 0.0
    %3213 = vmatpush1.msra.mxu0 0.0
    %3214 = vmatprep.subr.mxu0 0.0
    %3215 = vmatpush1.msra.mxu0 0.0
    %3216 = vmatprep.subr.mxu0 0.0
    %3217 = vmatpush1.msra.mxu0 0.0
    %3218 = vmatprep.subr.mxu0 0.0
    %3219 = vmatpush1.msra.mxu0 0.0
    %3220 = vmatprep.subr.mxu0 0.0
    %3221 = vmatpush1.msra.mxu0 0.0
    %3222 = vmatprep.subr.mxu0 0.0
    %3223 = vmatpush1.msra.mxu0 0.0
    %3224 = vmatprep.subr.mxu0 0.0
    %3225 = vmatpush1.msra.mxu0 0.0
    %3226 = vmatprep.subr.mxu0 0.0
    %3227 = vmatpush1.msra.mxu0 0.0
    %3228 = vmatprep.subr.mxu0 0.0
    %3229 = vmatpush1.msra.mxu0 0.0
    %3230 = vmatprep.subr.mxu0 0.0
    %3231 = vmatpush1.msra.mxu0 0.0
    %3232 = vmatprep.subr.mxu0 0.0
    %3233 = vmatpush1.msra.mxu0 0.0
    %3234 = vmatprep.subr.mxu0 0.0
    %3235 = vmatpush1.msra.mxu0 0.0
    %3236 = vmatprep.subr.mxu0 0.0
    %3237 = vmatpush1.msra.mxu0 0.0
    %3238 = vmatprep.subr.mxu0 0.0
    %3239 = vmatpush1.msra.mxu0 0.0
    %3240 = vmatprep.subr.mxu0 0.0
    %3241 = vmatpush1.msra.mxu0 0.0
    %3242 = vmatprep.mubr.f32.mxu0 0.0
    %3243 = vmatmul.mubr.f32.gmra.mrb[0].mxu0 %v3102
    %v3244 = vpop.f32.mrb[0].mxu0
    %v3245 = vadd.f32 %v3174, %v3244
    %v3246 = vpop.f32.mrb[0].mxu0
    %v3247 = vadd.f32 %v3176, %v3246
    %3248 = vdwg.mxu0
    %3249 = vmatprep.subr.mxu0 0.0
    %3250 = vmatpush1.msra.mxu0 %v2945
    %3251 = vmatprep.subr.mxu0 0.0
    %3252 = vmatpush1.msra.mxu0 %v2948
    %3253 = vmatprep.subr.mxu0 0.0
    %3254 = vmatpush1.msra.mxu0 %v2951
    %3255 = vmatprep.subr.mxu0 0.0
    %3256 = vmatpush1.msra.mxu0 %v2954
    %3257 = vmatprep.subr.mxu0 0.0
    %3258 = vmatpush1.msra.mxu0 %v2957
    %3259 = vmatprep.subr.mxu0 0.0
    %3260 = vmatpush1.msra.mxu0 %v2960
    %3261 = vmatprep.subr.mxu0 0.0
    %3262 = vmatpush1.msra.mxu0 %v2963
    %3263 = vmatprep.subr.mxu0 0.0
    %3264 = vmatpush1.msra.mxu0 %v2966
    %3265 = vmatprep.subr.mxu0 0.0
    %3266 = vmatpush1.msra.mxu0 %v2969
    %3267 = vmatprep.subr.mxu0 0.0
    %3268 = vmatpush1.msra.mxu0 %v2972
    %3269 = vmatprep.subr.mxu0 0.0
    %3270 = vmatpush1.msra.mxu0 %v2975
    %3271 = vmatprep.subr.mxu0 0.0
    %3272 = vmatpush1.msra.mxu0 %v2978
    %3273 = vmatprep.subr.mxu0 0.0
    %3274 = vmatpush1.msra.mxu0 %v2981
    %3275 = vmatprep.subr.mxu0 0.0
    %3276 = vmatpush1.msra.mxu0 %v2984
    %3277 = vmatprep.subr.mxu0 0.0
    %3278 = vmatpush1.msra.mxu0 %v2987
    %3279 = vmatprep.subr.mxu0 0.0
    %3280 = vmatpush1.msra.mxu0 %v2990
    %3281 = vmatprep.subr.mxu0 0.0
    %3282 = vmatpush1.msra.mxu0 %v2993
    %3283 = vmatprep.subr.mxu0 0.0
    %3284 = vmatpush1.msra.mxu0 %v2996
    %3285 = vmatprep.subr.mxu0 0.0
    %3286 = vmatpush1.msra.mxu0 %v2999
    %3287 = vmatprep.subr.mxu0 0.0
    %3288 = vmatpush1.msra.mxu0 %v3002
    %3289 = vmatprep.subr.mxu0 0.0
    %3290 = vmatpush1.msra.mxu0 %v3005
    %3291 = vmatprep.subr.mxu0 0.0
    %3292 = vmatpush1.msra.mxu0 %v3008
    %3293 = vmatprep.subr.mxu0 0.0
    %3294 = vmatpush1.msra.mxu0 %v3011
    %3295 = vmatprep.subr.mxu0 0.0
    %3296 = vmatpush1.msra.mxu0 %v3014
    %3297 = vmatprep.subr.mxu0 0.0
    %3298 = vmatpush1.msra.mxu0 %v3017
    %3299 = vmatprep.subr.mxu0 0.0
    %3300 = vmatpush1.msra.mxu0 %v3020
    %3301 = vmatprep.subr.mxu0 0.0
    %3302 = vmatpush1.msra.mxu0 %v3023
    %3303 = vmatprep.subr.mxu0 0.0
    %3304 = vmatpush1.msra.mxu0 %v3026
    %3305 = vmatprep.subr.mxu0 0.0
    %3306 = vmatpush1.msra.mxu0 %v3029
    %3307 = vmatprep.subr.mxu0 0.0
    %3308 = vmatpush1.msra.mxu0 %v3032
    %3309 = vmatprep.subr.mxu0 0.0
    %3310 = vmatpush1.msra.mxu0 %v3035
    %3311 = vmatprep.subr.mxu0 0.0
    %3312 = vmatpush1.msra.mxu0 %v3038
    %3313 = vmatprep.mubr.f32.mxu0 %v3103
    %3314 = vmatmul.mubr.f32.gmra.mrb[0].mxu0 %v3095
    %v3315 = vpop.f32.mrb[0].mxu0
    %v3316 = vadd.f32 0.0, %v3315
    %v3317 = vpop.f32.mrb[0].mxu0
    %3318 = vdwg.mxu0
    %3319 = vmatprep.subr.mxu0 0.0
    %3320 = vmatpush1.msra.mxu0 %v3041
    %3321 = vmatprep.subr.mxu0 0.0
    %3322 = vmatpush1.msra.mxu0 %v3044
    %3323 = vmatprep.subr.mxu0 0.0
    %3324 = vmatpush1.msra.mxu0 %v3047
    %3325 = vmatprep.subr.mxu0 0.0
    %3326 = vmatpush1.msra.mxu0 %v3050
    %3327 = vmatprep.subr.mxu0 0.0
    %3328 = vmatpush1.msra.mxu0 %v3053
    %3329 = vmatprep.subr.mxu0 0.0
    %3330 = vmatpush1.msra.mxu0 %v3056
    %3331 = vmatprep.subr.mxu0 0.0
    %3332 = vmatpush1.msra.mxu0 %v3059
    %3333 = vmatprep.subr.mxu0 0.0
    %3334 = vmatpush1.msra.mxu0 %v3062
    %3335 = vmatprep.subr.mxu0 0.0
    %3336 = vmatpush1.msra.mxu0 %v3065
    %3337 = vmatprep.subr.mxu0 0.0
    %3338 = vmatpush1.msra.mxu0 %v3068
    %3339 = vmatprep.subr.mxu0 0.0
    %3340 = vmatpush1.msra.mxu0 %v3071
    %3341 = vmatprep.subr.mxu0 0.0
    %3342 = vmatpush1.msra.mxu0 %v3074
    %3343 = vmatprep.subr.mxu0 0.0
    %3344 = vmatpush1.msra.mxu0 %v3077
    %3345 = vmatprep.subr.mxu0 0.0
    %3346 = vmatpush1.msra.mxu0 %v3080
    %3347 = vmatprep.subr.mxu0 0.0
    %3348 = vmatpush1.msra.mxu0 %v3083
    %3349 = vmatprep.subr.mxu0 0.0
    %3350 = vmatpush1.msra.mxu0 %v3086
    %3351 = vmatprep.subr.mxu0 0.0
    %3352 = vmatpush1.msra.mxu0 0.0
    %3353 = vmatprep.subr.mxu0 0.0
    %3354 = vmatpush1.msra.mxu0 0.0
    %3355 = vmatprep.subr.mxu0 0.0
    %3356 = vmatpush1.msra.mxu0 0.0
    %3357 = vmatprep.subr.mxu0 0.0
    %3358 = vmatpush1.msra.mxu0 0.0
    %3359 = vmatprep.subr.mxu0 0.0
    %3360 = vmatpush1.msra.mxu0 0.0
    %3361 = vmatprep.subr.mxu0 0.0
    %3362 = vmatpush1.msra.mxu0 0.0
    %3363 = vmatprep.subr.mxu0 0.0
    %3364 = vmatpush1.msra.mxu0 0.0
    %3365 = vmatprep.subr.mxu0 0.0
    %3366 = vmatpush1.msra.mxu0 0.0
    %3367 = vmatprep.subr.mxu0 0.0
    %3368 = vmatpush1.msra.mxu0 0.0
    %3369 = vmatprep.subr.mxu0 0.0
    %3370 = vmatpush1.msra.mxu0 0.0
    %3371 = vmatprep.subr.mxu0 0.0
    %3372 = vmatpush1.msra.mxu0 0.0
    %3373 = vmatprep.subr.mxu0 0.0
    %3374 = vmatpush1.msra.mxu0 0.0
    %3375 = vmatprep.subr.mxu0 0.0
    %3376 = vmatpush1.msra.mxu0 0.0
    %3377 = vmatprep.subr.mxu0 0.0
    %3378 = vmatpush1.msra.mxu0 0.0
    %3379 = vmatprep.subr.mxu0 0.0
    %3380 = vmatpush1.msra.mxu0 0.0
    %3381 = vmatprep.subr.mxu0 0.0
    %3382 = vmatpush1.msra.mxu0 0.0
    %3383 = vmatprep.mubr.f32.mxu0 0.0
    %3384 = vmatmul.mubr.f32.gmra.mrb[0].mxu0 %v3102
    %v3385 = vpop.f32.mrb[0].mxu0
    %v3386 = vadd.f32 %v3316, %v3385
    %v3387 = vpop.f32.mrb[0].mxu0
    %3388 = vdwg.mxu0
    %v3392 = vcombine.low %v3245, %v3247
    %v3394 = vunpack.c.l.s4 1983009808
    %v3395 = vunpack.c.0.s8 %v3394
    %v3396 = vlaneseq
    %v3397 = vshrl.u32 %v3396, 7
    %v3398 = vsub.s32 %v3395, %v3397
    %v3399 = vrot.slane %v3392, %v3398
    %v3401 = vunpack.c.l.s4 1983009808
    %v3402 = vunpack.c.0.s8 %v3401
    %v3403 = vlaneseq
    %v3404 = vshrl.u32 %v3403, 7
    %v3405 = vsub.s32 %v3402, %v3404
    %v3406 = vrot.slane %v3386, %v3405
    %v3407 = vcombine.low %v3399, %v3406
    %3409 = vst [vmem:[#allocation15] sm:$0x3f] %v3407
    %v3410 = vpack.c.bf16 %v3095, %v3095
    %v3411 = vpack.c.bf16 %v3103, %v3103
    %v3412 = vpack.c.bf16 %v3102, %v3102
    %v3413 = vld [vmem:[#allocation13] sm:$0xf]
    %v3414 = vld [vmem:[#allocation13 + $0x4] sm:$0xf]
    %v3415 = vld [vmem:[#allocation13 + $0x8] sm:$0xf]
    %v3416 = vld [vmem:[#allocation13 + $0xc] sm:$0xf]
    %v3417 = vld [vmem:[#allocation13 + $0x10] sm:$0xf]
    %v3418 = vld [vmem:[#allocation13 + $0x14] sm:$0xf]
    %v3419 = vld [vmem:[#allocation13 + $0x18] sm:$0xf]
    %v3420 = vld [vmem:[#allocation13 + $0x1c] sm:$0xf]
    %v3421 = vld [vmem:[#allocation13 + $0x20] sm:$0xf]
    %v3422 = vld [vmem:[#allocation13 + $0x24] sm:$0xf]
    %v3423 = vld [vmem:[#allocation13 + $0x28] sm:$0xf]
    %v3424 = vld [vmem:[#allocation13 + $0x2c] sm:$0xf]
    %v3425 = vld [vmem:[#allocation13 + $0x30] sm:$0xf]
    %v3426 = vld [vmem:[#allocation13 + $0x34] sm:$0xf]
    %v3427 = vld [vmem:[#allocation13 + $0x38] sm:$0xf]
    %v3428 = vld [vmem:[#allocation13 + $0x3c] sm:$0xf]
    %v3429 = vld [vmem:[#allocation13 + $0x40] sm:$0xf]
    %v3430 = vld [vmem:[#allocation13 + $0x44] sm:$0xf]
    %v3431 = vld [vmem:[#allocation13 + $0x48] sm:$0xf]
    %v3432 = vld [vmem:[#allocation13 + $0x4c] sm:$0xf]
    %v3433 = vld [vmem:[#allocation13 + $0x50] sm:$0xf]
    %v3434 = vld [vmem:[#allocation13 + $0x54] sm:$0xf]
    %v3435 = vld [vmem:[#allocation13 + $0x58] sm:$0xf]
    %v3436 = vld [vmem:[#allocation13 + $0x5c] sm:$0xf]
    %v3437 = vld [vmem:[#allocation13 + $0x60] sm:$0xf]
    %v3438 = vld [vmem:[#allocation13 + $0x64] sm:$0xf]
    %v3439 = vld [vmem:[#allocation13 + $0x68] sm:$0xf]
    %v3440 = vld [vmem:[#allocation13 + $0x6c] sm:$0xf]
    %v3441 = vld [vmem:[#allocation13 + $0x70] sm:$0xf]
    %v3442 = vld [vmem:[#allocation13 + $0x74] sm:$0xf]
    %v3443 = vld [vmem:[#allocation13 + $0x78] sm:$0xf]
    %v3444 = vld [vmem:[#allocation13 + $0x7c] sm:$0xf]
    %v3445 = vld [vmem:[#allocation13 + $0x80] sm:$0xf]
    %v3446 = vld [vmem:[#allocation13 + $0x84] sm:$0xf]
    %v3447 = vld [vmem:[#allocation13 + $0x88] sm:$0xf]
    %v3448 = vld [vmem:[#allocation13 + $0x8c] sm:$0xf]
    %v3449 = vld [vmem:[#allocation13 + $0x90] sm:$0xf]
    %v3450 = vld [vmem:[#allocation13 + $0x94] sm:$0xf]
    %v3451 = vld [vmem:[#allocation13 + $0x98] sm:$0xf]
    %v3452 = vld [vmem:[#allocation13 + $0x9c] sm:$0xf]
    %v3453 = vld [vmem:[#allocation13 + $0xa0] sm:$0xf]
    %v3454 = vld [vmem:[#allocation13 + $0xa4] sm:$0xf]
    %v3455 = vld [vmem:[#allocation13 + $0xa8] sm:$0xf]
    %v3456 = vld [vmem:[#allocation13 + $0xac] sm:$0xf]
    %v3457 = vld [vmem:[#allocation13 + $0xb0] sm:$0xf]
    %v3458 = vld [vmem:[#allocation13 + $0xb4] sm:$0xf]
    %v3459 = vld [vmem:[#allocation13 + $0xb8] sm:$0xf]
    %v3460 = vld [vmem:[#allocation13 + $0xbc] sm:$0xf]
    %v3461 = vld [vmem:[%s5] sm:$0x1]
    %v3463 = vlaneseq
    %v3464 = vshrl.u32 %v3463, 7
    %v3465 = vsub.s32 0, %v3464
    %v3466 = vrot.slane %v3461, %v3465
    %v3516 = vunpack.c.l.b16 %v3413
    %v3517 = vunpack.c.l.b16 %v3414
    %v3518 = vunpack.c.l.b16 %v3415
    %v3519 = vunpack.c.l.b16 %v3416
    %v3520 = vunpack.c.l.b16 %v3417
    %v3521 = vunpack.c.l.b16 %v3418
    %v3522 = vunpack.c.l.b16 %v3419
    %v3523 = vunpack.c.l.b16 %v3420
    %v3524 = vunpack.c.l.b16 %v3421
    %v3525 = vunpack.c.l.b16 %v3422
    %v3526 = vunpack.c.l.b16 %v3423
    %v3527 = vunpack.c.l.b16 %v3424
    %v3528 = vunpack.c.l.b16 %v3425
    %v3529 = vunpack.c.l.b16 %v3426
    %v3530 = vunpack.c.l.b16 %v3427
    %v3531 = vunpack.c.l.b16 %v3428
    %v3532 = vunpack.c.l.b16 %v3429
    %v3533 = vunpack.c.l.b16 %v3430
    %v3534 = vunpack.c.l.b16 %v3431
    %v3535 = vunpack.c.l.b16 %v3432
    %v3536 = vunpack.c.l.b16 %v3433
    %v3537 = vunpack.c.l.b16 %v3434
    %v3538 = vunpack.c.l.b16 %v3435
    %v3539 = vunpack.c.l.b16 %v3436
    %v3540 = vunpack.c.l.b16 %v3437
    %v3541 = vunpack.c.l.b16 %v3438
    %v3542 = vunpack.c.l.b16 %v3439
    %v3543 = vunpack.c.l.b16 %v3440
    %v3544 = vunpack.c.l.b16 %v3441
    %v3545 = vunpack.c.l.b16 %v3442
    %v3546 = vunpack.c.l.b16 %v3443
    %v3547 = vunpack.c.l.b16 %v3444
    %v3548 = vunpack.c.l.b16 %v3445
    %v3549 = vunpack.c.l.b16 %v3446
    %v3550 = vunpack.c.l.b16 %v3447
    %v3551 = vunpack.c.l.b16 %v3448
    %v3552 = vunpack.c.l.b16 %v3449
    %v3553 = vunpack.c.l.b16 %v3450
    %v3554 = vunpack.c.l.b16 %v3451
    %v3555 = vunpack.c.l.b16 %v3452
    %v3556 = vunpack.c.l.b16 %v3453
    %v3557 = vunpack.c.l.b16 %v3454
    %v3558 = vunpack.c.l.b16 %v3455
    %v3559 = vunpack.c.l.b16 %v3456
    %v3560 = vunpack.c.l.b16 %v3457
    %v3561 = vunpack.c.l.b16 %v3458
    %v3562 = vunpack.c.l.b16 %v3459
    %v3563 = vunpack.c.l.b16 %v3460
    %v3564 = vpack.c.b16 %v3517, %v3516
    %v3565 = vpack.c.b16 %v3519, %v3518
    %v3566 = vpack.c.b16 %v3521, %v3520
    %v3567 = vpack.c.b16 %v3523, %v3522
    %v3568 = vpack.c.b16 %v3525, %v3524
    %v3569 = vpack.c.b16 %v3527, %v3526
    %v3570 = vpack.c.b16 %v3529, %v3528
    %v3571 = vpack.c.b16 %v3531, %v3530
    %v3572 = vpack.c.b16 %v3533, %v3532
    %v3573 = vpack.c.b16 %v3535, %v3534
    %v3574 = vpack.c.b16 %v3537, %v3536
    %v3575 = vpack.c.b16 %v3539, %v3538
    %v3576 = vpack.c.b16 %v3541, %v3540
    %v3577 = vpack.c.b16 %v3543, %v3542
    %v3578 = vpack.c.b16 %v3545, %v3544
    %v3579 = vpack.c.b16 %v3547, %v3546
    %v3580 = vpack.c.b16 %v3549, %v3548
    %v3581 = vpack.c.b16 %v3551, %v3550
    %v3582 = vpack.c.b16 %v3553, %v3552
    %v3583 = vpack.c.b16 %v3555, %v3554
    %v3584 = vpack.c.b16 %v3557, %v3556
    %v3585 = vpack.c.b16 %v3559, %v3558
    %v3586 = vpack.c.b16 %v3561, %v3560
    %v3587 = vpack.c.b16 %v3563, %v3562
    %3612 = vmatprep.subr.bf16.mxu0 0
    %3613 = vmatpush1.bf16.msra.mxu0 %v3564
    %3614 = vmatprep.subr.bf16.mxu0 0
    %3615 = vmatpush1.bf16.msra.mxu0 %v3565
    %3616 = vmatprep.subr.bf16.mxu0 0
    %3617 = vmatpush1.bf16.msra.mxu0 %v3566
    %3618 = vmatprep.subr.bf16.mxu0 0
    %3619 = vmatpush1.bf16.msra.mxu0 %v3567
    %3620 = vmatprep.subr.bf16.mxu0 0
    %3621 = vmatpush1.bf16.msra.mxu0 %v3568
    %3622 = vmatprep.subr.bf16.mxu0 0
    %3623 = vmatpush1.bf16.msra.mxu0 %v3569
    %3624 = vmatprep.subr.bf16.mxu0 0
    %3625 = vmatpush1.bf16.msra.mxu0 %v3570
    %3626 = vmatprep.subr.bf16.mxu0 0
    %3627 = vmatpush1.bf16.msra.mxu0 %v3571
    %3628 = vmatprep.subr.bf16.mxu0 0
    %3629 = vmatpush1.bf16.msra.mxu0 %v3572
    %3630 = vmatprep.subr.bf16.mxu0 0
    %3631 = vmatpush1.bf16.msra.mxu0 %v3573
    %3632 = vmatprep.subr.bf16.mxu0 0
    %3633 = vmatpush1.bf16.msra.mxu0 %v3574
    %3634 = vmatprep.subr.bf16.mxu0 0
    %3635 = vmatpush1.bf16.msra.mxu0 %v3575
    %3636 = vmatprep.subr.bf16.mxu0 0
    %3637 = vmatpush1.bf16.msra.mxu0 %v3576
    %3638 = vmatprep.subr.bf16.mxu0 0
    %3639 = vmatpush1.bf16.msra.mxu0 %v3577
    %3640 = vmatprep.subr.bf16.mxu0 0
    %3641 = vmatpush1.bf16.msra.mxu0 %v3578
    %3642 = vmatprep.subr.bf16.mxu0 0
    %3643 = vmatpush1.bf16.msra.mxu0 %v3579
    %3644 = vmatprep.mubr.bf16.mxu0 %v3411
    %3645 = vmatmul.mubr.bf16.gmra.mrb[0].mxu0 %v3410
    %v3646 = vpop.f32.mrb[0].mxu0
    %v3647 = vadd.f32 %v3466, %v3646
    %v3648 = vpop.f32.mrb[0].mxu0
    %v3649 = vpop.f32.mrb[0].mxu0
    %v3650 = vpop.f32.mrb[0].mxu0
    %3651 = vdwg.mxu0
    %3652 = vmatprep.subr.bf16.mxu0 0
    %3653 = vmatpush1.bf16.msra.mxu0 %v3580
    %3654 = vmatprep.subr.bf16.mxu0 0
    %3655 = vmatpush1.bf16.msra.mxu0 %v3581
    %3656 = vmatprep.subr.bf16.mxu0 0
    %3657 = vmatpush1.bf16.msra.mxu0 %v3582
    %3658 = vmatprep.subr.bf16.mxu0 0
    %3659 = vmatpush1.bf16.msra.mxu0 %v3583
    %3660 = vmatprep.subr.bf16.mxu0 0
    %3661 = vmatpush1.bf16.msra.mxu0 %v3584
    %3662 = vmatprep.subr.bf16.mxu0 0
    %3663 = vmatpush1.bf16.msra.mxu0 %v3585
    %3664 = vmatprep.subr.bf16.mxu0 0
    %3665 = vmatpush1.bf16.msra.mxu0 %v3586
    %3666 = vmatprep.subr.bf16.mxu0 0
    %3667 = vmatpush1.bf16.msra.mxu0 %v3587
    %3668 = vmatprep.subr.bf16.mxu0 0
    %3669 = vmatpush1.bf16.msra.mxu0 0
    %3670 = vmatprep.subr.bf16.mxu0 0
    %3671 = vmatpush1.bf16.msra.mxu0 0
    %3672 = vmatprep.subr.bf16.mxu0 0
    %3673 = vmatpush1.bf16.msra.mxu0 0
    %3674 = vmatprep.subr.bf16.mxu0 0
    %3675 = vmatpush1.bf16.msra.mxu0 0
    %3676 = vmatprep.subr.bf16.mxu0 0
    %3677 = vmatpush1.bf16.msra.mxu0 0
    %3678 = vmatprep.subr.bf16.mxu0 0
    %3679 = vmatpush1.bf16.msra.mxu0 0
    %3680 = vmatprep.subr.bf16.mxu0 0
    %3681 = vmatpush1.bf16.msra.mxu0 0
    %3682 = vmatprep.subr.bf16.mxu0 0
    %3683 = vmatpush1.bf16.msra.mxu0 0
    %3684 = vmatprep.mubr.bf16.mxu0 0
    %3685 = vmatmul.mubr.bf16.gmra.mrb[0].mxu0 %v3412
    %v3686 = vpop.f32.mrb[0].mxu0
    %v3687 = vadd.f32 %v3647, %v3686
    %v3688 = vpop.f32.mrb[0].mxu0
    %v3689 = vpop.f32.mrb[0].mxu0
    %v3690 = vpop.f32.mrb[0].mxu0
    %3691 = vdwg.mxu0
    %3692 = vst [vmem:[#allocation14] sm:$0x3] %v3687
    // Predicated region
    $region38: #{bert_layer_aggregation_forward.1} parent=1 // pred_check
      _
    $region39: #{bert_layer_aggregation_forward.1} parent=1 // pred_check_branch
      %3694 = sbr.rel (0) target = $region41
    $region40: #{bert_layer_aggregation_forward.1} parent=1 // pred_region
      %s3696 = ssub.s32 32, 32
      %3697 = vsyncadd [#allocation10], %s3696
      %s3699 = sshll.u32 [#allocation14], 4
      %s3700 = int_to_ptr.vmem [resolvable:$true] %s3699
      %3702 = dma.vmem_to_hbm [thread:$0]  %s3700, 32, %s6, [#allocation10]
    $region41: #{bert_layer_aggregation_forward.1} parent=1 // pred_fallthru
      _
    // Predicated region
    $region42: #{bert_layer_aggregation_forward.1} parent=1 // pred_check
      _
    $region43: #{bert_layer_aggregation_forward.1} parent=1 // pred_check_branch
      %3704 = sbr.rel (0) target = $region45
    $region44: #{bert_layer_aggregation_forward.1} parent=1 // pred_region
      %s3706 = ssub.s32 96, 96
      %3707 = vsyncadd [#allocation16], %s3706
      %s3709 = sshll.u32 [#allocation15], 4
      %s3710 = int_to_ptr.vmem [resolvable:$true] %s3709
      %3712 = dma.vmem_to_hbm [thread:$0]  %s3710, 96, %s7, [#allocation16]
    $region45: #{bert_layer_aggregation_forward.1} parent=1 // pred_fallthru
      _
    // Predicated region
    $region46: #{bert_layer_aggregation_forward.1} parent=1 // pred_check
      _
    $region47: #{bert_layer_aggregation_forward.1} parent=1 // pred_check_branch
      %3714 = sbr.rel (0) target = $region49
    $region48: #{bert_layer_aggregation_forward.1} parent=1 // pred_region
      %3715 = dma.done [#allocation10], 32
    $region49: #{bert_layer_aggregation_forward.1} parent=1 // pred_fallthru
      _
    // Predicated region
    $region50: #{bert_layer_aggregation_forward.1} parent=1 // pred_check
      _
    $region51: #{bert_layer_aggregation_forward.1} parent=1 // pred_check_branch
      %3717 = sbr.rel (0) target = $region53
    $region52: #{bert_layer_aggregation_forward.1} parent=1 // pred_region
      %3718 = dma.done [#allocation16], 96
    $region53: #{bert_layer_aggregation_forward.1} parent=1 // pred_fallthru
      _
    %3719 = vsyncpa [#allocation9], 1
    %3720 = vsyncpa [#allocation12], 1
    %3721 = vsyncpa [#allocation10], 1
    %3722 = vsyncpa [#allocation16], 1

</llo_original>
